<compile_context>
chip_gen: v7x
topology: tpu7x:2x2x1
jax: 0.10.0
libtpu: 0.0.40
codegen_flags: <defaults>
</compile_context>

<pallas_src>
import jax
import jax.numpy as jnp
import numpy as np
from jax.experimental import pallas as pl
from jax.experimental.pallas import tpu as pltpu


def bigru_kernel(x_ref, wih0_ref, b0_ref, whh0_ref, bhh0n_ref,
                 wih1_ref, b1_ref, whh1f_ref, bhh1n_ref,
                 wc_ref, bc_ref, out_ref,
                 gi0_ref, seq0_ref, gi1_ref):
    T, NB, C = x_ref.shape
    H = whh0_ref.shape[1]
    H2, H3 = 2 * H, 3 * H

    def sigmoid(v):
        # exact identity 0.5*(tanh(v/2)+1): keeps the nonlinearity on the EUP, no divide.
        return 0.5 * (jnp.tanh(0.5 * v) + 1.0)

    def gru_update(gi, gh, bhh_n, h):
        # gi already contains W_ih x + b_ih + [b_hh_r, b_hh_z, 0]; gh = h @ W_hh (no bias).
        rz = sigmoid(gi[:, 0:H2] + gh[:, 0:H2])
        r, z = rz[:, 0:H], rz[:, H:H2]
        n = jnp.tanh(gi[:, H2:H3] + r * (gh[:, H2:H3] + bhh_n))
        return (1.0 - z) * n + z * h

    # -------- layer 0: ONE input-gate matmul for both directions and all T steps --------
    x2d = x_ref[...].reshape(T * NB, C)                                     # (T*NB, C)
    gi0_ref[...] = (jnp.dot(x2d, wih0_ref[...], preferred_element_type=jnp.float32)
                    + b0_ref[...])                                          # (T*NB, 6H)

    whh0_f, whh0_b = whh0_ref[0], whh0_ref[1]
    bhh0n_f, bhh0n_b = bhh0n_ref[0], bhh0n_ref[1]

    def l0_step(i, carry):
        # forward step t=i and backward step t=T-1-i interleaved: two independent chains.
        h_f, h_b = carry
        off_f = pl.multiple_of(i * NB, NB)
        off_b = pl.multiple_of((T - 1 - i) * NB, NB)
        gi_f = gi0_ref[pl.ds(off_f, NB), 0:H3]
        gi_b = gi0_ref[pl.ds(off_b, NB), H3:2 * H3]
        gh_f = jnp.dot(h_f, whh0_f, preferred_element_type=jnp.float32)
        gh_b = jnp.dot(h_b, whh0_b, preferred_element_type=jnp.float32)
        h_f = gru_update(gi_f, gh_f, bhh0n_f, h_f)
        h_b = gru_update(gi_b, gh_b, bhh0n_b, h_b)
        seq0_ref[pl.ds(off_f, NB), 0:H] = h_f
        seq0_ref[pl.ds(off_b, NB), H:H2] = h_b
        return h_f, h_b

    h0 = jnp.zeros((NB, H), jnp.float32)
    _ = jax.lax.fori_loop(0, T, l0_step, (h0, h0))

    # -------- layer 1 forward: input gates precomputed with one big matmul --------
    gi1_ref[...] = (jnp.dot(seq0_ref[...], wih1_ref[0], preferred_element_type=jnp.float32)
                    + b1_ref[0])                                            # (T*NB, 3H)
    whh1_f = whh1f_ref[...]
    bhh1n_f = bhh1n_ref[0]

    def l1_step(i, h):
        off = pl.multiple_of(i * NB, NB)
        gi = gi1_ref[pl.ds(off, NB), :]
        gh = jnp.dot(h, whh1_f, preferred_element_type=jnp.float32)
        return gru_update(gi, gh, bhh1n_f, h)

    h_fwd = jax.lax.fori_loop(0, T, l1_step, jnp.zeros((NB, H), jnp.float32))

    # -------- layer 1 backward at t = T-1 only (h0 = 0  =>  h @ W_hh = 0), exact --------
    last = pl.multiple_of((T - 1) * NB, NB)
    gi_b = (jnp.dot(seq0_ref[pl.ds(last, NB), :], wih1_ref[1],
                    preferred_element_type=jnp.float32) + b1_ref[1])
    rz_b = sigmoid(gi_b[:, 0:H2])                    # b_hh_r / b_hh_z already folded in b1
    r_b, z_b = rz_b[:, 0:H], rz_b[:, H:H2]
    n_b = jnp.tanh(gi_b[:, H2:H3] + r_b * bhh1n_ref[1])
    h_bwd = (1.0 - z_b) * n_b

    # -------- classifier head (dropout = identity in eval; split Wc -> no lane concat) ----
    logits = (jnp.dot(h_fwd, wc_ref[0:H, :], preferred_element_type=jnp.float32)
              + jnp.dot(h_bwd, wc_ref[H:H2, :], preferred_element_type=jnp.float32)
              + bc_ref[...])
    out_ref[...] = logits.astype(out_ref.dtype)


def bigru_classifier_pallas(x, p, *, block_n=None):
    """x: (N, C, T) float32, p: PyTorch-layout parameter dict. Returns (N, num_classes)."""
    N, C, T = x.shape
    H = p["whh_l0"].shape[1]
    H2, H3 = 2 * H, 3 * H
    NCLS = p["w_cls"].shape[0]

    if block_n is None:
        # Fill the MXU's M dimension (target 128 rows) but keep grid >= 2 when the batch
        # allows it, so v7x megacore can shard batch blocks across both TensorCores.
        cands = [b for b in (128, 64, 32, 16, 8) if N % b == 0 and b <= max(N // 2, 8)]
        block_n = cands[0] if cands else N
    assert N % block_n == 0, "pad the batch to a multiple of block_n"

    x_tnc = jnp.transpose(x, (2, 0, 1))                                   # (T, N, C)

    def fold_bias(bih, bhh):
        # fold b_hh of the r/z gates into the input-gate bias; n-gate b_hh stays separate
        # (it is multiplied by r inside the recurrence).
        return bih + jnp.concatenate([bhh[:H2], jnp.zeros((H,), bhh.dtype)])

    # Layer 0: both directions' input weights stacked column-wise -> one (C, 6H) matmul.
    wih0 = jnp.concatenate([p["wih_l0"].T, p["wih_l0_r"].T], axis=1)      # (C, 6H)
    b0 = jnp.concatenate([fold_bias(p["bih_l0"], p["bhh_l0"]),
                          fold_bias(p["bih_l0_r"], p["bhh_l0_r"])])[None, :]   # (1, 6H)
    whh0 = jnp.stack([p["whh_l0"].T, p["whh_l0_r"].T])                    # (2, H, 3H)
    bhh0n = jnp.stack([p["bhh_l0"][H2:], p["bhh_l0_r"][H2:]])[:, None, :]  # (2, 1, H)

    # Layer 1.
    wih1 = jnp.stack([p["wih_l1"].T, p["wih_l1_r"].T])                    # (2, 2H, 3H)
    b1 = jnp.stack([fold_bias(p["bih_l1"], p["bhh_l1"]),
                    fold_bias(p["bih_l1_r"], p["bhh_l1_r"])])[:, None, :]  # (2, 1, 3H)
    whh1f = p["whh_l1"].T                                                 # (H, 3H); bwd dir unused (h0 = 0)
    bhh1n = jnp.stack([p["bhh_l1"][H2:], p["bhh_l1_r"][H2:]])[:, None, :]  # (2, 1, H)

    wc = p["w_cls"].T                                                     # (2H, NCLS)
    bc = p["b_cls"][None, :]                                              # (1, NCLS)

    const2 = lambda b: (0, 0)
    const3 = lambda b: (0, 0, 0)

    # VMEM budget estimate: scratch + double-buffered input/output blocks + weights.
    scratch_bytes = 4 * T * block_n * (6 * H + 2 * H + 3 * H)
    weight_bytes = 4 * (C * 6 * H + 6 * H + 2 * H * H3 + 2 * H
                        + 2 * H2 * H3 + 2 * H3 + H * H3 + 2 * H
                        + H2 * NCLS + NCLS)
    io_bytes = 4 * (T * block_n * C + block_n * NCLS)
    vmem_est = scratch_bytes + 2 * (weight_bytes + io_bytes)
    vmem_limit = None
    if vmem_est > (30 << 20):
        # TODO(synk): physical VMEM is 64 MiB on v7x (128 MiB on v5e/v6e); shrink block_n
        # rather than raising the limit past those ceilings.
        vmem_limit = int(min(vmem_est + (4 << 20), 96 << 20))

    return pl.pallas_call(
        bigru_kernel,
        out_shape=jax.ShapeDtypeStruct((N, NCLS), x.dtype),
        grid_spec=pltpu.PrefetchScalarGridSpec(
            num_scalar_prefetch=0,
            grid=(N // block_n,),
            in_specs=[
                pl.BlockSpec((T, block_n, C), lambda b: (0, b, 0)),       # x (T, N, C)
                pl.BlockSpec((C, 6 * H), const2),                         # wih0 (fwd|bwd)
                pl.BlockSpec((1, 6 * H), const2),                         # folded layer-0 bias
                pl.BlockSpec((2, H, H3), const3),                         # whh0
                pl.BlockSpec((2, 1, H), const3),                          # bhh0 n-gate
                pl.BlockSpec((2, H2, H3), const3),                        # wih1
                pl.BlockSpec((2, 1, H3), const3),                         # folded layer-1 bias
                pl.BlockSpec((H, H3), const2),                            # whh1 forward
                pl.BlockSpec((2, 1, H), const3),                          # bhh1 n-gate
                pl.BlockSpec((H2, NCLS), const2),                         # classifier W^T
                pl.BlockSpec((1, NCLS), const2),                          # classifier b
            ],
            out_specs=pl.BlockSpec((block_n, NCLS), lambda b: (b, 0)),
            scratch_shapes=[
                pltpu.VMEM((T * block_n, 6 * H), jnp.float32),            # layer-0 input gates (fwd|bwd)
                pltpu.VMEM((T * block_n, 2 * H), jnp.float32),            # layer-0 output sequence
                pltpu.VMEM((T * block_n, H3), jnp.float32),               # layer-1 fwd input gates
            ],
        ),
        compiler_params=pltpu.CompilerParams(
            dimension_semantics=("parallel",),
            vmem_limit_bytes=vmem_limit,
        ),
    )(x_tnc, wih0, b0, whh0, bhh0n, wih1, b1, whh1f, bhh1n, wc, bc)


# ----------------------------- pure-JAX reference -----------------------------
def _sigmoid(v):
    return 1.0 / (1.0 + jnp.exp(-v))


def _gru_direction_ref(x, wih, whh, bih, bhh, reverse):
    # x: (N, T, Cin); PyTorch weight layout wih: (3H, Cin), whh: (3H, H); gates r,z,n.
    N, T, _ = x.shape
    H = whh.shape[1]
    h = jnp.zeros((N, H), jnp.float32)
    outs = [None] * T
    for t in (range(T - 1, -1, -1) if reverse else range(T)):
        gi = x[:, t, :] @ wih.T + bih
        gh = h @ whh.T + bhh
        r = _sigmoid(gi[:, :H] + gh[:, :H])
        z = _sigmoid(gi[:, H:2 * H] + gh[:, H:2 * H])
        n = jnp.tanh(gi[:, 2 * H:] + r * gh[:, 2 * H:])
        h = (1.0 - z) * n + z * h
        outs[t] = h
    return jnp.stack(outs, axis=1)                                        # (N, T, H)


def bigru_classifier_ref(x, p):
    xt = jnp.transpose(x, (0, 2, 1))                                      # (N, T, C)
    f0 = _gru_direction_ref(xt, p["wih_l0"], p["whh_l0"], p["bih_l0"], p["bhh_l0"], False)
    b0 = _gru_direction_ref(xt, p["wih_l0_r"], p["whh_l0_r"], p["bih_l0_r"], p["bhh_l0_r"], True)
    h0 = jnp.concatenate([f0, b0], axis=-1)
    # inter-layer dropout (0.3) and pre-classifier dropout (0.5) are identity in eval mode
    f1 = _gru_direction_ref(h0, p["wih_l1"], p["whh_l1"], p["bih_l1"], p["bhh_l1"], False)
    b1 = _gru_direction_ref(h0, p["wih_l1_r"], p["whh_l1_r"], p["bih_l1_r"], p["bhh_l1_r"], True)
    feat = jnp.concatenate([f1, b1], axis=-1)[:, -1, :]
    return feat @ p["w_cls"].T + p["b_cls"]


def init_params(key, C, H, NCLS):
    H3 = 3 * H
    k = 1.0 / np.sqrt(H)
    specs = [
        ("wih_l0", (H3, C)), ("whh_l0", (H3, H)), ("bih_l0", (H3,)), ("bhh_l0", (H3,)),
        ("wih_l0_r", (H3, C)), ("whh_l0_r", (H3, H)), ("bih_l0_r", (H3,)), ("bhh_l0_r", (H3,)),
        ("wih_l1", (H3, 2 * H)), ("whh_l1", (H3, H)), ("bih_l1", (H3,)), ("bhh_l1", (H3,)),
        ("wih_l1_r", (H3, 2 * H)), ("whh_l1_r", (H3, H)), ("bih_l1_r", (H3,)), ("bhh_l1_r", (H3,)),
        ("w_cls", (NCLS, 2 * H)), ("b_cls", (NCLS,)),
    ]
    keys = jax.random.split(key, len(specs))
    return {name: jax.random.uniform(kk, shape, jnp.float32, -k, k)
            for (name, shape), kk in zip(specs, keys)}


if __name__ == "__main__":
    # small shapes: batch=16, input_channels=3 (module default), seq=16,
    # hidden=128 (module default, one TPU lane width), num_classes=5.
    N, C, T = 16, 3, 16
    H, NCLS = 128, 5

    key = jax.random.PRNGKey(0)
    kx, kp = jax.random.split(key)
    x = jax.random.normal(kx, (N, C, T), dtype=jnp.float32)
    params = init_params(kp, C, H, NCLS)

    out = bigru_classifier_pallas(x, params)          # default block_n -> 8 here (grid = 2)
    out = jax.block_until_ready(out)

    ref = bigru_classifier_ref(x, params)
    np.testing.assert_allclose(np.asarray(out), np.asarray(ref), rtol=2e-3, atol=2e-3)

    print("KERNEL_OK")
</pallas_src>

<mosaic_0001>
module attributes {stable_mosaic.version = 11 : i64} {
  func.func @bigru_kernel(%arg0: i32, %arg1: memref<16x8x3xf32, #tpu.memory_space<vmem>>, %arg2: memref<3x768xf32, #tpu.memory_space<vmem>>, %arg3: memref<1x768xf32, #tpu.memory_space<vmem>>, %arg4: memref<2x128x384xf32, #tpu.memory_space<vmem>>, %arg5: memref<2x1x128xf32, #tpu.memory_space<vmem>>, %arg6: memref<2x256x384xf32, #tpu.memory_space<vmem>>, %arg7: memref<2x1x384xf32, #tpu.memory_space<vmem>>, %arg8: memref<128x384xf32, #tpu.memory_space<vmem>>, %arg9: memref<2x1x128xf32, #tpu.memory_space<vmem>>, %arg10: memref<256x5xf32, #tpu.memory_space<vmem>>, %arg11: memref<1x5xf32, #tpu.memory_space<vmem>>, %arg12: memref<8x5xf32, #tpu.memory_space<vmem>>, %arg13: memref<128x768xf32, #tpu.memory_space<vmem>>, %arg14: memref<128x256xf32, #tpu.memory_space<vmem>>, %arg15: memref<128x384xf32, #tpu.memory_space<vmem>>) attributes {dimension_semantics = [#tpu.dimension_semantics<parallel>], iteration_bounds = array<i64: 2>, scalar_prefetch = 0 : i64, scratch_operands = 3 : i64, tpu.core_type = #tpu.core_type<tc>, window_params = [{transform_indices = @transform_0, window_bounds = array<i64: 16, 8, 3>}, {pipeline_mode = #tpu.pipeline_mode<synchronous>, transform_indices = @transform_1, window_bounds = array<i64: 3, 768>}, {pipeline_mode = #tpu.pipeline_mode<synchronous>, transform_indices = @transform_2, window_bounds = array<i64: 1, 768>}, {pipeline_mode = #tpu.pipeline_mode<synchronous>, transform_indices = @transform_3, window_bounds = array<i64: 2, 128, 384>}, {pipeline_mode = #tpu.pipeline_mode<synchronous>, transform_indices = @transform_4, window_bounds = array<i64: 2, 1, 128>}, {pipeline_mode = #tpu.pipeline_mode<synchronous>, transform_indices = @transform_5, window_bounds = array<i64: 2, 256, 384>}, {pipeline_mode = #tpu.pipeline_mode<synchronous>, transform_indices = @transform_6, window_bounds = array<i64: 2, 1, 384>}, {pipeline_mode = #tpu.pipeline_mode<synchronous>, transform_indices = @transform_7, window_bounds = array<i64: 128, 384>}, {pipeline_mode = #tpu.pipeline_mode<synchronous>, transform_indices = @transform_8, window_bounds = array<i64: 2, 1, 128>}, {pipeline_mode = #tpu.pipeline_mode<synchronous>, transform_indices = @transform_9, window_bounds = array<i64: 256, 5>}, {pipeline_mode = #tpu.pipeline_mode<synchronous>, transform_indices = @transform_10, window_bounds = array<i64: 1, 5>}, {transform_indices = @transform_11, window_bounds = array<i64: 8, 5>}]} {
    %c0 = arith.constant 0 : index
    %c0_0 = arith.constant 0 : index
    %c0_1 = arith.constant 0 : index
    %0 = vector.load %arg1[%c0, %c0_0, %c0_1] : memref<16x8x3xf32, #tpu.memory_space<vmem>>, vector<16x8x3xf32>
    %1 = vector.shape_cast %0 : vector<16x8x3xf32> to vector<128x3xf32>
    %c0_2 = arith.constant 0 : index
    %c0_3 = arith.constant 0 : index
    %2 = vector.load %arg2[%c0_2, %c0_3] : memref<3x768xf32, #tpu.memory_space<vmem>>, vector<3x768xf32>
    %cst = arith.constant dense<0.000000e+00> : vector<128x768xf32>
    %3 = tpu.matmul %1, %2, %cst {dimension_numbers = #tpu.dot_dimension_numbers<[1], [0], [0], [1], [0, 0, 1, 1], [], []>} : vector<128x3xf32>, vector<3x768xf32>, vector<128x768xf32> -> vector<128x768xf32>
    %c0_4 = arith.constant 0 : index
    %c0_5 = arith.constant 0 : index
    %4 = vector.load %arg3[%c0_4, %c0_5] : memref<1x768xf32, #tpu.memory_space<vmem>>, vector<1x768xf32>
    %5 = vector.broadcast %4 : vector<1x768xf32> to vector<128x768xf32>
    %6 = arith.addf %3, %5 : vector<128x768xf32>
    %c0_6 = arith.constant 0 : index
    %c0_7 = arith.constant 0 : index
    %7 = vector.load %arg13[%c0_6, %c0_7] : memref<128x768xf32, #tpu.memory_space<vmem>>, vector<128x768xf32>
    tpu.vector_store %arg13[%c0_6, %c0_7], %6 {strides = array<i32>} : memref<128x768xf32, #tpu.memory_space<vmem>>, vector<128x768xf32>,
    %c0_8 = arith.constant 0 : index
    %c0_9 = arith.constant 0 : index
    %c0_10 = arith.constant 0 : index
    %8 = vector.load %arg4[%c0_8, %c0_9, %c0_10] : memref<2x128x384xf32, #tpu.memory_space<vmem>>, vector<1x128x384xf32>
    %9 = vector.shape_cast %8 : vector<1x128x384xf32> to vector<128x384xf32>
    %c1 = arith.constant 1 : index
    %c0_11 = arith.constant 0 : index
    %c0_12 = arith.constant 0 : index
    %10 = vector.load %arg4[%c1, %c0_11, %c0_12] : memref<2x128x384xf32, #tpu.memory_space<vmem>>, vector<1x128x384xf32>
    %11 = vector.shape_cast %10 : vector<1x128x384xf32> to vector<128x384xf32>
    %c0_13 = arith.constant 0 : index
    %c0_14 = arith.constant 0 : index
    %c0_15 = arith.constant 0 : index
    %12 = vector.load %arg5[%c0_13, %c0_14, %c0_15] : memref<2x1x128xf32, #tpu.memory_space<vmem>>, vector<1x1x128xf32>
    %13 = vector.shape_cast %12 : vector<1x1x128xf32> to vector<1x128xf32>
    %c1_16 = arith.constant 1 : index
    %c0_17 = arith.constant 0 : index
    %c0_18 = arith.constant 0 : index
    %14 = vector.load %arg5[%c1_16, %c0_17, %c0_18] : memref<2x1x128xf32, #tpu.memory_space<vmem>>, vector<1x1x128xf32>
    %15 = vector.shape_cast %14 : vector<1x1x128xf32> to vector<1x128xf32>
    %cst_19 = arith.constant 0.000000e+00 : f32
    %16 = vector.broadcast %cst_19 : f32 to vector<8x128xf32>
    %c0_i32 = arith.constant 0 : i32
    %c16_i32 = arith.constant 16 : i32
    %17 = arith.addi %c0_i32, %c16_i32 : i32
    %c1_i32 = arith.constant 1 : i32
    %18:2 = scf.for %arg16 = %c0_i32 to %17 step %c1_i32 iter_args(%arg17 = %16, %arg18 = %16) -> (vector<8x128xf32>, vector<8x128xf32>)  : i32 {
      %c8_i32 = arith.constant 8 : i32
      %73 = arith.muli %arg16, %c8_i32 : i32
      %74 = tpu.assume_multiple %73, 8 : i32
      %c15_i32 = arith.constant 15 : i32
      %75 = arith.subi %c15_i32, %arg16 : i32
      %c8_i32_66 = arith.constant 8 : i32
      %76 = arith.muli %75, %c8_i32_66 : i32
      %77 = tpu.assume_multiple %76, 8 : i32
      %78 = arith.index_cast %74 : i32 to index
      %c0_67 = arith.constant 0 : index
      %79 = vector.load %arg13[%78, %c0_67] : memref<128x768xf32, #tpu.memory_space<vmem>>, vector<8x384xf32>
      %80 = arith.index_cast %77 : i32 to index
      %c384 = arith.constant 384 : index
      %81 = vector.load %arg13[%80, %c384] : memref<128x768xf32, #tpu.memory_space<vmem>>, vector<8x384xf32>
      %cst_68 = arith.constant dense<0.000000e+00> : vector<8x384xf32>
      %82 = tpu.matmul %arg17, %9, %cst_68 {dimension_numbers = #tpu.dot_dimension_numbers<[1], [0], [0], [1], [0, 0, 1, 1], [], []>} : vector<8x128xf32>, vector<128x384xf32>, vector<8x384xf32> -> vector<8x384xf32>
      %cst_69 = arith.constant dense<0.000000e+00> : vector<8x384xf32>
      %83 = tpu.matmul %arg18, %11, %cst_69 {dimension_numbers = #tpu.dot_dimension_numbers<[1], [0], [0], [1], [0, 0, 1, 1], [], []>} : vector<8x128xf32>, vector<128x384xf32>, vector<8x384xf32> -> vector<8x384xf32>
      %84 = vector.extract_strided_slice %79 {offsets = [0, 0], sizes = [8, 256], strides = [1, 1]} : vector<8x384xf32> to vector<8x256xf32>
      %85 = vector.extract_strided_slice %82 {offsets = [0, 0], sizes = [8, 256], strides = [1, 1]} : vector<8x384xf32> to vector<8x256xf32>
      %86 = arith.addf %84, %85 : vector<8x256xf32>
      %cst_70 = arith.constant 5.000000e-01 : f32
      %87 = vector.broadcast %cst_70 : f32 to vector<8x256xf32>
      %88 = arith.mulf %87, %86 : vector<8x256xf32>
      %89 = math.tanh %88 : vector<8x256xf32>
      %cst_71 = arith.constant 1.000000e+00 : f32
      %90 = vector.broadcast %cst_71 : f32 to vector<8x256xf32>
      %91 = arith.addf %89, %90 : vector<8x256xf32>
      %cst_72 = arith.constant 5.000000e-01 : f32
      %92 = vector.broadcast %cst_72 : f32 to vector<8x256xf32>
      %93 = arith.mulf %92, %91 : vector<8x256xf32>
      %94 = vector.extract_strided_slice %93 {offsets = [0, 0], sizes = [8, 128], strides = [1, 1]} : vector<8x256xf32> to vector<8x128xf32>
      %95 = vector.extract_strided_slice %93 {offsets = [0, 128], sizes = [8, 128], strides = [1, 1]} : vector<8x256xf32> to vector<8x128xf32>
      %96 = vector.extract_strided_slice %79 {offsets = [0, 256], sizes = [8, 128], strides = [1, 1]} : vector<8x384xf32> to vector<8x128xf32>
      %97 = vector.extract_strided_slice %82 {offsets = [0, 256], sizes = [8, 128], strides = [1, 1]} : vector<8x384xf32> to vector<8x128xf32>
      %98 = vector.broadcast %13 : vector<1x128xf32> to vector<8x128xf32>
      %99 = arith.addf %97, %98 : vector<8x128xf32>
      %100 = arith.mulf %94, %99 : vector<8x128xf32>
      %101 = arith.addf %96, %100 : vector<8x128xf32>
      %102 = math.tanh %101 : vector<8x128xf32>
      %cst_73 = arith.constant 1.000000e+00 : f32
      %103 = vector.broadcast %cst_73 : f32 to vector<8x128xf32>
      %104 = arith.subf %103, %95 : vector<8x128xf32>
      %105 = arith.mulf %104, %102 : vector<8x128xf32>
      %106 = arith.mulf %95, %arg17 : vector<8x128xf32>
      %107 = arith.addf %105, %106 : vector<8x128xf32>
      %108 = vector.extract_strided_slice %81 {offsets = [0, 0], sizes = [8, 256], strides = [1, 1]} : vector<8x384xf32> to vector<8x256xf32>
      %109 = vector.extract_strided_slice %83 {offsets = [0, 0], sizes = [8, 256], strides = [1, 1]} : vector<8x384xf32> to vector<8x256xf32>
      %110 = arith.addf %108, %109 : vector<8x256xf32>
      %cst_74 = arith.constant 5.000000e-01 : f32
      %111 = vector.broadcast %cst_74 : f32 to vector<8x256xf32>
      %112 = arith.mulf %111, %110 : vector<8x256xf32>
      %113 = math.tanh %112 : vector<8x256xf32>
      %cst_75 = arith.constant 1.000000e+00 : f32
      %114 = vector.broadcast %cst_75 : f32 to vector<8x256xf32>
      %115 = arith.addf %113, %114 : vector<8x256xf32>
      %cst_76 = arith.constant 5.000000e-01 : f32
      %116 = vector.broadcast %cst_76 : f32 to vector<8x256xf32>
      %117 = arith.mulf %116, %115 : vector<8x256xf32>
      %118 = vector.extract_strided_slice %117 {offsets = [0, 0], sizes = [8, 128], strides = [1, 1]} : vector<8x256xf32> to vector<8x128xf32>
      %119 = vector.extract_strided_slice %117 {offsets = [0, 128], sizes = [8, 128], strides = [1, 1]} : vector<8x256xf32> to vector<8x128xf32>
      %120 = vector.extract_strided_slice %81 {offsets = [0, 256], sizes = [8, 128], strides = [1, 1]} : vector<8x384xf32> to vector<8x128xf32>
      %121 = vector.extract_strided_slice %83 {offsets = [0, 256], sizes = [8, 128], strides = [1, 1]} : vector<8x384xf32> to vector<8x128xf32>
      %122 = vector.broadcast %15 : vector<1x128xf32> to vector<8x128xf32>
      %123 = arith.addf %121, %122 : vector<8x128xf32>
      %124 = arith.mulf %118, %123 : vector<8x128xf32>
      %125 = arith.addf %120, %124 : vector<8x128xf32>
      %126 = math.tanh %125 : vector<8x128xf32>
      %cst_77 = arith.constant 1.000000e+00 : f32
      %127 = vector.broadcast %cst_77 : f32 to vector<8x128xf32>
      %128 = arith.subf %127, %119 : vector<8x128xf32>
      %129 = arith.mulf %128, %126 : vector<8x128xf32>
      %130 = arith.mulf %119, %arg18 : vector<8x128xf32>
      %131 = arith.addf %129, %130 : vector<8x128xf32>
      %132 = arith.index_cast %74 : i32 to index
      %c0_78 = arith.constant 0 : index
      %133 = vector.load %arg14[%132, %c0_78] : memref<128x256xf32, #tpu.memory_space<vmem>>, vector<8x128xf32>
      tpu.vector_store %arg14[%132, %c0_78], %107 {strides = array<i32>} : memref<128x256xf32, #tpu.memory_space<vmem>>, vector<8x128xf32>,
      %134 = arith.index_cast %77 : i32 to index
      %c128_79 = arith.constant 128 : index
      %135 = vector.load %arg14[%134, %c128_79] : memref<128x256xf32, #tpu.memory_space<vmem>>, vector<8x128xf32>
      tpu.vector_store %arg14[%134, %c128_79], %131 {strides = array<i32>} : memref<128x256xf32, #tpu.memory_space<vmem>>, vector<8x128xf32>,
      scf.yield %107, %131 : vector<8x128xf32>, vector<8x128xf32>
    }
    %c16_i32_20 = arith.constant 16 : i32
    %c0_21 = arith.constant 0 : index
    %c0_22 = arith.constant 0 : index
    %19 = vector.load %arg14[%c0_21, %c0_22] : memref<128x256xf32, #tpu.memory_space<vmem>>, vector<128x256xf32>
    %c0_23 = arith.constant 0 : index
    %c0_24 = arith.constant 0 : index
    %c0_25 = arith.constant 0 : index
    %20 = vector.load %arg6[%c0_23, %c0_24, %c0_25] : memref<2x256x384xf32, #tpu.memory_space<vmem>>, vector<1x256x384xf32>
    %21 = vector.shape_cast %20 : vector<1x256x384xf32> to vector<256x384xf32>
    %cst_26 = arith.constant dense<0.000000e+00> : vector<128x384xf32>
    %22 = tpu.matmul %19, %21, %cst_26 {dimension_numbers = #tpu.dot_dimension_numbers<[1], [0], [0], [1], [0, 0, 1, 1], [], []>} : vector<128x256xf32>, vector<256x384xf32>, vector<128x384xf32> -> vector<128x384xf32>
    %c0_27 = arith.constant 0 : index
    %c0_28 = arith.constant 0 : index
    %c0_29 = arith.constant 0 : index
    %23 = vector.load %arg7[%c0_27, %c0_28, %c0_29] : memref<2x1x384xf32, #tpu.memory_space<vmem>>, vector<1x1x384xf32>
    %24 = vector.shape_cast %23 : vector<1x1x384xf32> to vector<1x384xf32>
    %25 = vector.broadcast %24 : vector<1x384xf32> to vector<128x384xf32>
    %26 = arith.addf %22, %25 : vector<128x384xf32>
    %c0_30 = arith.constant 0 : index
    %c0_31 = arith.constant 0 : index
    %27 = vector.load %arg15[%c0_30, %c0_31] : memref<128x384xf32, #tpu.memory_space<vmem>>, vector<128x384xf32>
    tpu.vector_store %arg15[%c0_30, %c0_31], %26 {strides = array<i32>} : memref<128x384xf32, #tpu.memory_space<vmem>>, vector<128x384xf32>,
    %c0_32 = arith.constant 0 : index
    %c0_33 = arith.constant 0 : index
    %28 = vector.load %arg8[%c0_32, %c0_33] : memref<128x384xf32, #tpu.memory_space<vmem>>, vector<128x384xf32>
    %c0_34 = arith.constant 0 : index
    %c0_35 = arith.constant 0 : index
    %c0_36 = arith.constant 0 : index
    %29 = vector.load %arg9[%c0_34, %c0_35, %c0_36] : memref<2x1x128xf32, #tpu.memory_space<vmem>>, vector<1x1x128xf32>
    %30 = vector.shape_cast %29 : vector<1x1x128xf32> to vector<1x128xf32>
    %cst_37 = arith.constant 0.000000e+00 : f32
    %31 = vector.broadcast %cst_37 : f32 to vector<8x128xf32>
    %c0_i32_38 = arith.constant 0 : i32
    %c16_i32_39 = arith.constant 16 : i32
    %32 = arith.addi %c0_i32_38, %c16_i32_39 : i32
    %c1_i32_40 = arith.constant 1 : i32
    %33 = scf.for %arg16 = %c0_i32_38 to %32 step %c1_i32_40 iter_args(%arg17 = %31) -> (vector<8x128xf32>)  : i32 {
      %c8_i32 = arith.constant 8 : i32
      %73 = arith.muli %arg16, %c8_i32 : i32
      %74 = tpu.assume_multiple %73, 8 : i32
      %75 = arith.index_cast %74 : i32 to index
      %c0_66 = arith.constant 0 : index
      %76 = vector.load %arg15[%75, %c0_66] : memref<128x384xf32, #tpu.memory_space<vmem>>, vector<8x384xf32>
      %cst_67 = arith.constant dense<0.000000e+00> : vector<8x384xf32>
      %77 = tpu.matmul %arg17, %28, %cst_67 {dimension_numbers = #tpu.dot_dimension_numbers<[1], [0], [0], [1], [0, 0, 1, 1], [], []>} : vector<8x128xf32>, vector<128x384xf32>, vector<8x384xf32> -> vector<8x384xf32>
      %78 = vector.extract_strided_slice %76 {offsets = [0, 0], sizes = [8, 256], strides = [1, 1]} : vector<8x384xf32> to vector<8x256xf32>
      %79 = vector.extract_strided_slice %77 {offsets = [0, 0], sizes = [8, 256], strides = [1, 1]} : vector<8x384xf32> to vector<8x256xf32>
      %80 = arith.addf %78, %79 : vector<8x256xf32>
      %cst_68 = arith.constant 5.000000e-01 : f32
      %81 = vector.broadcast %cst_68 : f32 to vector<8x256xf32>
      %82 = arith.mulf %81, %80 : vector<8x256xf32>
      %83 = math.tanh %82 : vector<8x256xf32>
      %cst_69 = arith.constant 1.000000e+00 : f32
      %84 = vector.broadcast %cst_69 : f32 to vector<8x256xf32>
      %85 = arith.addf %83, %84 : vector<8x256xf32>
      %cst_70 = arith.constant 5.000000e-01 : f32
      %86 = vector.broadcast %cst_70 : f32 to vector<8x256xf32>
      %87 = arith.mulf %86, %85 : vector<8x256xf32>
      %88 = vector.extract_strided_slice %87 {offsets = [0, 0], sizes = [8, 128], strides = [1, 1]} : vector<8x256xf32> to vector<8x128xf32>
      %89 = vector.extract_strided_slice %87 {offsets = [0, 128], sizes = [8, 128], strides = [1, 1]} : vector<8x256xf32> to vector<8x128xf32>
      %90 = vector.extract_strided_slice %76 {offsets = [0, 256], sizes = [8, 128], strides = [1, 1]} : vector<8x384xf32> to vector<8x128xf32>
      %91 = vector.extract_strided_slice %77 {offsets = [0, 256], sizes = [8, 128], strides = [1, 1]} : vector<8x384xf32> to vector<8x128xf32>
      %92 = vector.broadcast %30 : vector<1x128xf32> to vector<8x128xf32>
      %93 = arith.addf %91, %92 : vector<8x128xf32>
      %94 = arith.mulf %88, %93 : vector<8x128xf32>
      %95 = arith.addf %90, %94 : vector<8x128xf32>
      %96 = math.tanh %95 : vector<8x128xf32>
      %cst_71 = arith.constant 1.000000e+00 : f32
      %97 = vector.broadcast %cst_71 : f32 to vector<8x128xf32>
      %98 = arith.subf %97, %89 : vector<8x128xf32>
      %99 = arith.mulf %98, %96 : vector<8x128xf32>
      %100 = arith.mulf %89, %arg17 : vector<8x128xf32>
      %101 = arith.addf %99, %100 : vector<8x128xf32>
      scf.yield %101 : vector<8x128xf32>
    }
    %c16_i32_41 = arith.constant 16 : i32
    %c120_i32 = arith.constant 120 : i32
    %34 = tpu.assume_multiple %c120_i32, 8 : i32
    %35 = arith.index_cast %34 : i32 to index
    %c0_42 = arith.constant 0 : index
    %36 = vector.load %arg14[%35, %c0_42] : memref<128x256xf32, #tpu.memory_space<vmem>>, vector<8x256xf32>
    %c1_43 = arith.constant 1 : index
    %c0_44 = arith.constant 0 : index
    %c0_45 = arith.constant 0 : index
    %37 = vector.load %arg6[%c1_43, %c0_44, %c0_45] : memref<2x256x384xf32, #tpu.memory_space<vmem>>, vector<1x256x384xf32>
    %38 = vector.shape_cast %37 : vector<1x256x384xf32> to vector<256x384xf32>
    %cst_46 = arith.constant dense<0.000000e+00> : vector<8x384xf32>
    %39 = tpu.matmul %36, %38, %cst_46 {dimension_numbers = #tpu.dot_dimension_numbers<[1], [0], [0], [1], [0, 0, 1, 1], [], []>} : vector<8x256xf32>, vector<256x384xf32>, vector<8x384xf32> -> vector<8x384xf32>
    %c1_47 = arith.constant 1 : index
    %c0_48 = arith.constant 0 : index
    %c0_49 = arith.constant 0 : index
    %40 = vector.load %arg7[%c1_47, %c0_48, %c0_49] : memref<2x1x384xf32, #tpu.memory_space<vmem>>, vector<1x1x384xf32>
    %41 = vector.shape_cast %40 : vector<1x1x384xf32> to vector<1x384xf32>
    %42 = vector.broadcast %41 : vector<1x384xf32> to vector<8x384xf32>
    %43 = arith.addf %39, %42 : vector<8x384xf32>
    %44 = vector.extract_strided_slice %43 {offsets = [0, 0], sizes = [8, 256], strides = [1, 1]} : vector<8x384xf32> to vector<8x256xf32>
    %cst_50 = arith.constant 5.000000e-01 : f32
    %45 = vector.broadcast %cst_50 : f32 to vector<8x256xf32>
    %46 = arith.mulf %45, %44 : vector<8x256xf32>
    %47 = math.tanh %46 : vector<8x256xf32>
    %cst_51 = arith.constant 1.000000e+00 : f32
    %48 = vector.broadcast %cst_51 : f32 to vector<8x256xf32>
    %49 = arith.addf %47, %48 : vector<8x256xf32>
    %cst_52 = arith.constant 5.000000e-01 : f32
    %50 = vector.broadcast %cst_52 : f32 to vector<8x256xf32>
    %51 = arith.mulf %50, %49 : vector<8x256xf32>
    %52 = vector.extract_strided_slice %51 {offsets = [0, 0], sizes = [8, 128], strides = [1, 1]} : vector<8x256xf32> to vector<8x128xf32>
    %53 = vector.extract_strided_slice %51 {offsets = [0, 128], sizes = [8, 128], strides = [1, 1]} : vector<8x256xf32> to vector<8x128xf32>
    %54 = vector.extract_strided_slice %43 {offsets = [0, 256], sizes = [8, 128], strides = [1, 1]} : vector<8x384xf32> to vector<8x128xf32>
    %c1_53 = arith.constant 1 : index
    %c0_54 = arith.constant 0 : index
    %c0_55 = arith.constant 0 : index
    %55 = vector.load %arg9[%c1_53, %c0_54, %c0_55] : memref<2x1x128xf32, #tpu.memory_space<vmem>>, vector<1x1x128xf32>
    %56 = vector.shape_cast %55 : vector<1x1x128xf32> to vector<1x128xf32>
    %57 = vector.broadcast %56 : vector<1x128xf32> to vector<8x128xf32>
    %58 = arith.mulf %52, %57 : vector<8x128xf32>
    %59 = arith.addf %54, %58 : vector<8x128xf32>
    %60 = math.tanh %59 : vector<8x128xf32>
    %cst_56 = arith.constant 1.000000e+00 : f32
    %61 = vector.broadcast %cst_56 : f32 to vector<8x128xf32>
    %62 = arith.subf %61, %53 : vector<8x128xf32>
    %63 = arith.mulf %62, %60 : vector<8x128xf32>
    %c0_57 = arith.constant 0 : index
    %c0_58 = arith.constant 0 : index
    %64 = vector.load %arg10[%c0_57, %c0_58] : memref<256x5xf32, #tpu.memory_space<vmem>>, vector<128x5xf32>
    %cst_59 = arith.constant dense<0.000000e+00> : vector<8x5xf32>
    %65 = tpu.matmul %33, %64, %cst_59 {dimension_numbers = #tpu.dot_dimension_numbers<[1], [0], [0], [1], [0, 0, 1, 1], [], []>} : vector<8x128xf32>, vector<128x5xf32>, vector<8x5xf32> -> vector<8x5xf32>
    %c128 = arith.constant 128 : index
    %c0_60 = arith.constant 0 : index
    %66 = vector.load %arg10[%c128, %c0_60] : memref<256x5xf32, #tpu.memory_space<vmem>>, vector<128x5xf32>
    %cst_61 = arith.constant dense<0.000000e+00> : vector<8x5xf32>
    %67 = tpu.matmul %63, %66, %cst_61 {dimension_numbers = #tpu.dot_dimension_numbers<[1], [0], [0], [1], [0, 0, 1, 1], [], []>} : vector<8x128xf32>, vector<128x5xf32>, vector<8x5xf32> -> vector<8x5xf32>
    %68 = arith.addf %65, %67 : vector<8x5xf32>
    %c0_62 = arith.constant 0 : index
    %c0_63 = arith.constant 0 : index
    %69 = vector.load %arg11[%c0_62, %c0_63] : memref<1x5xf32, #tpu.memory_space<vmem>>, vector<1x5xf32>
    %70 = vector.broadcast %69 : vector<1x5xf32> to vector<8x5xf32>
    %71 = arith.addf %68, %70 : vector<8x5xf32>
    %c0_64 = arith.constant 0 : index
    %c0_65 = arith.constant 0 : index
    %72 = vector.load %arg12[%c0_64, %c0_65] : memref<8x5xf32, #tpu.memory_space<vmem>>, vector<8x5xf32>
    tpu.vector_store %arg12[%c0_64, %c0_65], %71 {strides = array<i32>} : memref<8x5xf32, #tpu.memory_space<vmem>>, vector<8x5xf32>,
    return
  }
  func.func @transform_0(%arg0: i32) -> (i32, i32, i32) {
    %c0_i32 = arith.constant 0 : i32
    %c0_i32_0 = arith.constant 0 : i32
    %c0_i32_1 = arith.constant 0 : i32
    return %c0_i32, %arg0, %c0_i32_0 : i32, i32, i32
  }
  func.func @transform_1(%arg0: i32) -> (i32, i32) {
    %c0_i32 = arith.constant 0 : i32
    %c0_i32_0 = arith.constant 0 : i32
    %c0_i32_1 = arith.constant 0 : i32
    return %c0_i32, %c0_i32_0 : i32, i32
  }
  func.func @transform_2(%arg0: i32) -> (i32, i32) {
    %c0_i32 = arith.constant 0 : i32
    %c0_i32_0 = arith.constant 0 : i32
    %c0_i32_1 = arith.constant 0 : i32
    return %c0_i32, %c0_i32_0 : i32, i32
  }
  func.func @transform_3(%arg0: i32) -> (i32, i32, i32) {
    %c0_i32 = arith.constant 0 : i32
    %c0_i32_0 = arith.constant 0 : i32
    %c0_i32_1 = arith.constant 0 : i32
    %c0_i32_2 = arith.constant 0 : i32
    return %c0_i32, %c0_i32_0, %c0_i32_1 : i32, i32, i32
  }
  func.func @transform_4(%arg0: i32) -> (i32, i32, i32) {
    %c0_i32 = arith.constant 0 : i32
    %c0_i32_0 = arith.constant 0 : i32
    %c0_i32_1 = arith.constant 0 : i32
    %c0_i32_2 = arith.constant 0 : i32
    return %c0_i32, %c0_i32_0, %c0_i32_1 : i32, i32, i32
  }
  func.func @transform_5(%arg0: i32) -> (i32, i32, i32) {
    %c0_i32 = arith.constant 0 : i32
    %c0_i32_0 = arith.constant 0 : i32
    %c0_i32_1 = arith.constant 0 : i32
    %c0_i32_2 = arith.constant 0 : i32
    return %c0_i32, %c0_i32_0, %c0_i32_1 : i32, i32, i32
  }
  func.func @transform_6(%arg0: i32) -> (i32, i32, i32) {
    %c0_i32 = arith.constant 0 : i32
    %c0_i32_0 = arith.constant 0 : i32
    %c0_i32_1 = arith.constant 0 : i32
    %c0_i32_2 = arith.constant 0 : i32
    return %c0_i32, %c0_i32_0, %c0_i32_1 : i32, i32, i32
  }
  func.func @transform_7(%arg0: i32) -> (i32, i32) {
    %c0_i32 = arith.constant 0 : i32
    %c0_i32_0 = arith.constant 0 : i32
    %c0_i32_1 = arith.constant 0 : i32
    return %c0_i32, %c0_i32_0 : i32, i32
  }
  func.func @transform_8(%arg0: i32) -> (i32, i32, i32) {
    %c0_i32 = arith.constant 0 : i32
    %c0_i32_0 = arith.constant 0 : i32
    %c0_i32_1 = arith.constant 0 : i32
    %c0_i32_2 = arith.constant 0 : i32
    return %c0_i32, %c0_i32_0, %c0_i32_1 : i32, i32, i32
  }
  func.func @transform_9(%arg0: i32) -> (i32, i32) {
    %c0_i32 = arith.constant 0 : i32
    %c0_i32_0 = arith.constant 0 : i32
    %c0_i32_1 = arith.constant 0 : i32
    return %c0_i32, %c0_i32_0 : i32, i32
  }
  func.func @transform_10(%arg0: i32) -> (i32, i32) {
    %c0_i32 = arith.constant 0 : i32
    %c0_i32_0 = arith.constant 0 : i32
    %c0_i32_1 = arith.constant 0 : i32
    return %c0_i32, %c0_i32_0 : i32, i32
  }
  func.func @transform_11(%arg0: i32) -> (i32, i32) {
    %c0_i32 = arith.constant 0 : i32
    %c0_i32_0 = arith.constant 0 : i32
    return %arg0, %c0_i32 : i32, i32
  }
}

</mosaic_0001>

<llo_original>
// kernel: tpu_custom_call.1
$region0: #{tpu_custom_call.1}
  #allocation0 [shape = 'u32[]', space=smem, size = 0x4, offset = 0x4, fixed_abs, tag = 'smem constant byte address 0x4 - core index']
  #allocation1 [shape = 'u32[144,128]{1,0:T(1,128)}', space=vmem, size = 0x12000, scoped, tag = 'internal scratch']
  #allocation2 [shape = 'f32[128,768]{1,0:T(8,128)}', space=vmem, size = 0x60000, scoped, tag = 'scratch operand']
  #allocation3 [shape = 'f32[128,256]{1,0:T(8,128)}', space=vmem, size = 0x20000, scoped, tag = 'scratch operand']
  #allocation4 [shape = 'f32[128,384]{1,0:T(8,128)}', space=vmem, size = 0x30000, scoped, tag = 'scratch operand']
  %s0 = inlined_call_operand.vmem [shape: f32[16,16,3], index: 0, kind: input, shape index: {}]
  %s1 = inlined_call_operand.vmem [shape: f32[3,768], index: 1, kind: input, shape index: {}]
  %s2 = inlined_call_operand.vmem [shape: f32[1,768], index: 2, kind: input, shape index: {}]
  %s3 = inlined_call_operand.hbm [shape: f32[2,128,384], index: 3, kind: input, shape index: {}]
  %s4 = inlined_call_operand.vmem [shape: f32[2,1,128], index: 4, kind: input, shape index: {}]
  %s5 = inlined_call_operand.hbm [shape: f32[2,256,384], index: 5, kind: input, shape index: {}]
  %s6 = inlined_call_operand.vmem [shape: f32[2,1,384], index: 6, kind: input, shape index: {}]
  %s7 = inlined_call_operand.vmem [shape: f32[128,384], index: 7, kind: input, shape index: {}]
  %s8 = inlined_call_operand.vmem [shape: f32[2,1,128], index: 8, kind: input, shape index: {}]
  %s9 = inlined_call_operand.vmem [shape: f32[256,5], index: 9, kind: input, shape index: {}]
  %s10 = inlined_call_operand.vmem [shape: f32[1,5], index: 10, kind: input, shape index: {}]
  %s11 = inlined_call_operand.vmem [shape: f32[16,5], index: 11, kind: output, shape index: {}]
  %s12 = sld [smem:[#allocation0]]
  $region137: #{tpu_custom_call.1} parent=0
    _
  %s14 = ssub.s32 1, %s12
  %s15 = scalar_select 0, %s14, %s12
  $region1: #{tpu_custom_call.1} parent=0
    #allocation5 [shape = 'u8[131072]{0}', space=vmem, size = 0x20000, scoped, tag = 'input window, operand 0']
    #allocation6 [shape = 'u8[393216]{0}', space=vmem, size = 0x60000, scoped, tag = 'input window, operand 3, single buffered']
    #allocation7 [shape = 's32[2]{0}', space=sflag, size = 0x8, scoped, tag = 'scoped memory for tpu_custom_call.1']
    #allocation8 [shape = 'u8[786432]{0}', space=vmem, size = 0xc0000, scoped, tag = 'input window, operand 5, single buffered']
    #allocation9 [shape = 's32[1]{0}', space=sflag, size = 0x4, scoped, tag = 'scoped memory for tpu_custom_call.1']
    %16 = vsyncpa [#allocation7], 0
    %17 = vsyncpa [#allocation9], 0
    loop: start=0, step=1, limit=4
    $region2: #{tpu_custom_call.1} parent=1 // loop_pre_header
      _
    $region3: #{tpu_custom_call.1} parent=1 // loop_header
      %s19 = sphi 0, %s23
      %p20 = scmp.ge.s32.totalorder %s19, 4
      %s29 = sphi 0, %s31
      %s32 = sphi 0, %s29
      %s33 = sphi 0, %s32
      %s49 = sphi 0, %s33
      %s53 = sphi 0, %s53
      %s55 = sphi 0, %s53
      %s56 = sphi 0, %s55
      %s70 = sphi 0, %s56
      %s74 = sphi 0, %s74
      %s76 = sphi 0, %s74
      %s77 = sphi 0, %s76
      %s91 = sphi 0, %s77
      %s95 = sphi 0, %s95
      %s97 = sphi 0, %s95
      %s98 = sphi 0, %s97
      %s112 = sphi 0, %s98
      %s116 = sphi 0, %s116
      %s118 = sphi 0, %s116
      %s119 = sphi 0, %s118
      %s133 = sphi 0, %s119
      %s137 = sphi 0, %s137
      %s139 = sphi 0, %s137
      %s140 = sphi 0, %s139
      %s154 = sphi 0, %s140
      %s158 = sphi 0, %s158
      %s160 = sphi 0, %s158
      %s161 = sphi 0, %s160
      %s175 = sphi 0, %s161
      %s179 = sphi 0, %s179
      %s181 = sphi 0, %s179
      %s182 = sphi 0, %s181
      %s196 = sphi 0, %s182
      %s200 = sphi 0, %s200
      %s202 = sphi 0, %s200
      %s203 = sphi 0, %s202
      %s217 = sphi 0, %s203
      %s221 = sphi 0, %s221
      %s223 = sphi 0, %s221
      %s224 = sphi 0, %s223
      %s238 = sphi 0, %s224
      %s242 = sphi 0, %s242
      %s244 = sphi 0, %s242
      %s245 = sphi 0, %s244
      %s259 = sphi 0, %s245
      %s265 = sphi 0, %s267
      %s268 = sphi 0, %s265
      %s269 = sphi 0, %s268
      %s285 = sphi 0, %s269
    $region4: #{tpu_custom_call.1} parent=1 // loop_header_branch
      %22 = sbr.rel (%p20) target = $region8
    $region5: #{tpu_custom_call.1} parent=1 // loop_body
      %s24 = ssub.s32 %s19, 1
      %s25 = ssub.s32 %s19, 2
      %s26 = sadd.s32 %s19, 1
      %s27 = ssub.s32 %s19, %s26
      %p28 = scmp.eq.s32.totalorder %s27, 0
      %s30 = sadd.s32 %s29, 1
      %s31 = scalar_select %p28, %s29, %s30
      %p34 = pneg %p28
      %p35 = scmp.eq.s32.totalorder %s19, 1
      %p36 = por %p34, %p35
      %p37 = scmp.ne.s32.totalorder %s29, %s32
      %p38 = scmp.eq.s32.totalorder %s19, 0
      %p39 = por %p37, %p38
      %p40 = scmp.ne.s32.totalorder %s29, %s32
      %p41 = scmp.eq.s32.totalorder %s24, 1
      %p42 = por %p40, %p41
      %p43 = scmp.ne.s32.totalorder %s32, %s33
      %p44 = scmp.eq.s32.totalorder %s24, 0
      %p45 = por %p43, %p44
      %p46 = scmp.ne.s32.totalorder %s32, %s33
      %p47 = scmp.eq.s32.totalorder %s25, 1
      %p48 = por %p46, %p47
      %p50 = scmp.ne.s32.totalorder %s33, %s49
      %p51 = scmp.eq.s32.totalorder %s25, 0
      %p52 = por %p50, %p51
      %s54 = sadd.s32 %s53, 1
      %p57 = scmp.eq.s32.totalorder %s19, 1
      %p58 = scmp.ne.s32.totalorder %s53, %s55
      %p59 = scmp.eq.s32.totalorder %s19, 0
      %p60 = por %p58, %p59
      %p61 = scmp.ne.s32.totalorder %s53, %s55
      %p62 = scmp.eq.s32.totalorder %s24, 1
      %p63 = por %p61, %p62
      %p64 = scmp.ne.s32.totalorder %s55, %s56
      %p65 = scmp.eq.s32.totalorder %s24, 0
      %p66 = por %p64, %p65
      %p67 = scmp.ne.s32.totalorder %s55, %s56
      %p68 = scmp.eq.s32.totalorder %s25, 1
      %p69 = por %p67, %p68
      %p71 = scmp.ne.s32.totalorder %s56, %s70
      %p72 = scmp.eq.s32.totalorder %s25, 0
      %p73 = por %p71, %p72
      %s75 = sadd.s32 %s74, 1
      %p78 = scmp.eq.s32.totalorder %s19, 1
      %p79 = scmp.ne.s32.totalorder %s74, %s76
      %p80 = scmp.eq.s32.totalorder %s19, 0
      %p81 = por %p79, %p80
      %p82 = scmp.ne.s32.totalorder %s74, %s76
      %p83 = scmp.eq.s32.totalorder %s24, 1
      %p84 = por %p82, %p83
      %p85 = scmp.ne.s32.totalorder %s76, %s77
      %p86 = scmp.eq.s32.totalorder %s24, 0
      %p87 = por %p85, %p86
      %p88 = scmp.ne.s32.totalorder %s76, %s77
      %p89 = scmp.eq.s32.totalorder %s25, 1
      %p90 = por %p88, %p89
      %p92 = scmp.ne.s32.totalorder %s77, %s91
      %p93 = scmp.eq.s32.totalorder %s25, 0
      %p94 = por %p92, %p93
      %s96 = sadd.s32 %s95, 1
      %p99 = scmp.eq.s32.totalorder %s19, 1
      %p100 = scmp.ne.s32.totalorder %s95, %s97
      %p101 = scmp.eq.s32.totalorder %s19, 0
      %p102 = por %p100, %p101
      %p103 = scmp.ne.s32.totalorder %s95, %s97
      %p104 = scmp.eq.s32.totalorder %s24, 1
      %p105 = por %p103, %p104
      %p106 = scmp.ne.s32.totalorder %s97, %s98
      %p107 = scmp.eq.s32.totalorder %s24, 0
      %p108 = por %p106, %p107
      %p109 = scmp.ne.s32.totalorder %s97, %s98
      %p110 = scmp.eq.s32.totalorder %s25, 1
      %p111 = por %p109, %p110
      %p113 = scmp.ne.s32.totalorder %s98, %s112
      %p114 = scmp.eq.s32.totalorder %s25, 0
      %p115 = por %p113, %p114
      %s117 = sadd.s32 %s116, 1
      %p120 = scmp.eq.s32.totalorder %s19, 1
      %p121 = scmp.ne.s32.totalorder %s116, %s118
      %p122 = scmp.eq.s32.totalorder %s19, 0
      %p123 = por %p121, %p122
      %p124 = scmp.ne.s32.totalorder %s116, %s118
      %p125 = scmp.eq.s32.totalorder %s24, 1
      %p126 = por %p124, %p125
      %p127 = scmp.ne.s32.totalorder %s118, %s119
      %p128 = scmp.eq.s32.totalorder %s24, 0
      %p129 = por %p127, %p128
      %p130 = scmp.ne.s32.totalorder %s118, %s119
      %p131 = scmp.eq.s32.totalorder %s25, 1
      %p132 = por %p130, %p131
      %p134 = scmp.ne.s32.totalorder %s119, %s133
      %p135 = scmp.eq.s32.totalorder %s25, 0
      %p136 = por %p134, %p135
      %s138 = sadd.s32 %s137, 1
      %p141 = scmp.eq.s32.totalorder %s19, 1
      %p142 = scmp.ne.s32.totalorder %s137, %s139
      %p143 = scmp.eq.s32.totalorder %s19, 0
      %p144 = por %p142, %p143
      %p145 = scmp.ne.s32.totalorder %s137, %s139
      %p146 = scmp.eq.s32.totalorder %s24, 1
      %p147 = por %p145, %p146
      %p148 = scmp.ne.s32.totalorder %s139, %s140
      %p149 = scmp.eq.s32.totalorder %s24, 0
      %p150 = por %p148, %p149
      %p151 = scmp.ne.s32.totalorder %s139, %s140
      %p152 = scmp.eq.s32.totalorder %s25, 1
      %p153 = por %p151, %p152
      %p155 = scmp.ne.s32.totalorder %s140, %s154
      %p156 = scmp.eq.s32.totalorder %s25, 0
      %p157 = por %p155, %p156
      %s159 = sadd.s32 %s158, 1
      %p162 = scmp.eq.s32.totalorder %s19, 1
      %p163 = scmp.ne.s32.totalorder %s158, %s160
      %p164 = scmp.eq.s32.totalorder %s19, 0
      %p165 = por %p163, %p164
      %p166 = scmp.ne.s32.totalorder %s158, %s160
      %p167 = scmp.eq.s32.totalorder %s24, 1
      %p168 = por %p166, %p167
      %p169 = scmp.ne.s32.totalorder %s160, %s161
      %p170 = scmp.eq.s32.totalorder %s24, 0
      %p171 = por %p169, %p170
      %p172 = scmp.ne.s32.totalorder %s160, %s161
      %p173 = scmp.eq.s32.totalorder %s25, 1
      %p174 = por %p172, %p173
      %p176 = scmp.ne.s32.totalorder %s161, %s175
      %p177 = scmp.eq.s32.totalorder %s25, 0
      %p178 = por %p176, %p177
      %s180 = sadd.s32 %s179, 1
      %p183 = scmp.eq.s32.totalorder %s19, 1
      %p184 = scmp.ne.s32.totalorder %s179, %s181
      %p185 = scmp.eq.s32.totalorder %s19, 0
      %p186 = por %p184, %p185
      %p187 = scmp.ne.s32.totalorder %s179, %s181
      %p188 = scmp.eq.s32.totalorder %s24, 1
      %p189 = por %p187, %p188
      %p190 = scmp.ne.s32.totalorder %s181, %s182
      %p191 = scmp.eq.s32.totalorder %s24, 0
      %p192 = por %p190, %p191
      %p193 = scmp.ne.s32.totalorder %s181, %s182
      %p194 = scmp.eq.s32.totalorder %s25, 1
      %p195 = por %p193, %p194
      %p197 = scmp.ne.s32.totalorder %s182, %s196
      %p198 = scmp.eq.s32.totalorder %s25, 0
      %p199 = por %p197, %p198
      %s201 = sadd.s32 %s200, 1
      %p204 = scmp.eq.s32.totalorder %s19, 1
      %p205 = scmp.ne.s32.totalorder %s200, %s202
      %p206 = scmp.eq.s32.totalorder %s19, 0
      %p207 = por %p205, %p206
      %p208 = scmp.ne.s32.totalorder %s200, %s202
      %p209 = scmp.eq.s32.totalorder %s24, 1
      %p210 = por %p208, %p209
      %p211 = scmp.ne.s32.totalorder %s202, %s203
      %p212 = scmp.eq.s32.totalorder %s24, 0
      %p213 = por %p211, %p212
      %p214 = scmp.ne.s32.totalorder %s202, %s203
      %p215 = scmp.eq.s32.totalorder %s25, 1
      %p216 = por %p214, %p215
      %p218 = scmp.ne.s32.totalorder %s203, %s217
      %p219 = scmp.eq.s32.totalorder %s25, 0
      %p220 = por %p218, %p219
      %s222 = sadd.s32 %s221, 1
      %p225 = scmp.eq.s32.totalorder %s19, 1
      %p226 = scmp.ne.s32.totalorder %s221, %s223
      %p227 = scmp.eq.s32.totalorder %s19, 0
      %p228 = por %p226, %p227
      %p229 = scmp.ne.s32.totalorder %s221, %s223
      %p230 = scmp.eq.s32.totalorder %s24, 1
      %p231 = por %p229, %p230
      %p232 = scmp.ne.s32.totalorder %s223, %s224
      %p233 = scmp.eq.s32.totalorder %s24, 0
      %p234 = por %p232, %p233
      %p235 = scmp.ne.s32.totalorder %s223, %s224
      %p236 = scmp.eq.s32.totalorder %s25, 1
      %p237 = por %p235, %p236
      %p239 = scmp.ne.s32.totalorder %s224, %s238
      %p240 = scmp.eq.s32.totalorder %s25, 0
      %p241 = por %p239, %p240
      %s243 = sadd.s32 %s242, 1
      %p246 = scmp.eq.s32.totalorder %s19, 1
      %p247 = scmp.ne.s32.totalorder %s242, %s244
      %p248 = scmp.eq.s32.totalorder %s19, 0
      %p249 = por %p247, %p248
      %p250 = scmp.ne.s32.totalorder %s242, %s244
      %p251 = scmp.eq.s32.totalorder %s24, 1
      %p252 = por %p250, %p251
      %p253 = scmp.ne.s32.totalorder %s244, %s245
      %p254 = scmp.eq.s32.totalorder %s24, 0
      %p255 = por %p253, %p254
      %p256 = scmp.ne.s32.totalorder %s244, %s245
      %p257 = scmp.eq.s32.totalorder %s25, 1
      %p258 = por %p256, %p257
      %p260 = scmp.ne.s32.totalorder %s245, %s259
      %p261 = scmp.eq.s32.totalorder %s25, 0
      %p262 = por %p260, %p261
      %s263 = ssub.s32 %s19, %s26
      %p264 = scmp.eq.s32.totalorder %s263, 0
      %s266 = sadd.s32 %s265, 1
      %s267 = scalar_select %p264, %s265, %s266
      %p270 = pneg %p264
      %p271 = scmp.eq.s32.totalorder %s19, 1
      %p272 = por %p270, %p271
      %p273 = scmp.ne.s32.totalorder %s265, %s268
      %p274 = scmp.eq.s32.totalorder %s19, 0
      %p275 = por %p273, %p274
      %p276 = scmp.ne.s32.totalorder %s265, %s268
      %p277 = scmp.eq.s32.totalorder %s24, 1
      %p278 = por %p276, %p277
      %p279 = scmp.ne.s32.totalorder %s268, %s269
      %p280 = scmp.eq.s32.totalorder %s24, 0
      %p281 = por %p279, %p280
      %p282 = scmp.ne.s32.totalorder %s268, %s269
      %p283 = scmp.eq.s32.totalorder %s25, 1
      %p284 = por %p282, %p283
      %p286 = scmp.ne.s32.totalorder %s269, %s285
      %p287 = scmp.eq.s32.totalorder %s25, 0
      %p288 = por %p286, %p287
      %p289 = scmp.le.s32.totalorder 1, %s19
      %p290 = scmp.lt.s32.totalorder %s19, 3
      %p291 = pnand %p289, %p290
      %p292 = pneg %p291
      // Predicated region
      $region9: #{tpu_custom_call.1} parent=5 // pred_check
        _
      $region10: #{tpu_custom_call.1} parent=5 // pred_check_branch
        %294 = sbr.rel (%p291) target = $region12
      $region11: #{tpu_custom_call.1} parent=5 // pred_region
        %s295 = ssub.s32 %s19, 1
        // Predicated region
        $region13: #{tpu_custom_call.1} parent=11 // pred_check
          %p296 = pneg %p66
        $region14: #{tpu_custom_call.1} parent=11 // pred_check_branch
          %298 = sbr.rel (%p296) target = $region16
        $region15: #{tpu_custom_call.1} parent=11 // pred_region
          _
        $region16: #{tpu_custom_call.1} parent=11 // pred_fallthru
          _
        // Predicated region
        $region17: #{tpu_custom_call.1} parent=11 // pred_check
          %p299 = pneg %p87
        $region18: #{tpu_custom_call.1} parent=11 // pred_check_branch
          %301 = sbr.rel (%p299) target = $region20
        $region19: #{tpu_custom_call.1} parent=11 // pred_region
          _
        $region20: #{tpu_custom_call.1} parent=11 // pred_fallthru
          _
        // Predicated region
        $region21: #{tpu_custom_call.1} parent=11 // pred_check
          %p302 = pneg %p108
        $region22: #{tpu_custom_call.1} parent=11 // pred_check_branch
          %304 = sbr.rel (%p302) target = $region24
        $region23: #{tpu_custom_call.1} parent=11 // pred_region
          %s306 = ssub.s32 12288, 12288
          %307 = vsyncadd [#allocation7], %s306
          %s308 = sshll.u32 [#allocation6], 4
          %s309 = int_to_ptr.vmem [resolvable:$true] %s308
          %314 = dma.hbm_to_vmem [thread:$0]  %s3, 12288, %s309, [#allocation7], 384, 384, 24
        $region24: #{tpu_custom_call.1} parent=11 // pred_fallthru
          _
        // Predicated region
        $region25: #{tpu_custom_call.1} parent=11 // pred_check
          %p315 = pneg %p129
        $region26: #{tpu_custom_call.1} parent=11 // pred_check_branch
          %317 = sbr.rel (%p315) target = $region28
        $region27: #{tpu_custom_call.1} parent=11 // pred_region
          _
        $region28: #{tpu_custom_call.1} parent=11 // pred_fallthru
          _
        // Predicated region
        $region29: #{tpu_custom_call.1} parent=11 // pred_check
          %p318 = pneg %p150
        $region30: #{tpu_custom_call.1} parent=11 // pred_check_branch
          %320 = sbr.rel (%p318) target = $region32
        $region31: #{tpu_custom_call.1} parent=11 // pred_region
          %s322 = ssub.s32 24576, 24576
          %323 = vsyncadd [#allocation9], %s322
          %s324 = sshll.u32 [#allocation8], 4
          %s325 = int_to_ptr.vmem [resolvable:$true] %s324
          %330 = dma.hbm_to_vmem [thread:$0]  %s5, 24576, %s325, [#allocation9], 384, 384, 24
        $region32: #{tpu_custom_call.1} parent=11 // pred_fallthru
          _
        // Predicated region
        $region33: #{tpu_custom_call.1} parent=11 // pred_check
          %p331 = pneg %p171
        $region34: #{tpu_custom_call.1} parent=11 // pred_check_branch
          %333 = sbr.rel (%p331) target = $region36
        $region35: #{tpu_custom_call.1} parent=11 // pred_region
          _
        $region36: #{tpu_custom_call.1} parent=11 // pred_fallthru
          _
        // Predicated region
        $region37: #{tpu_custom_call.1} parent=11 // pred_check
          %p334 = pneg %p192
        $region38: #{tpu_custom_call.1} parent=11 // pred_check_branch
          %336 = sbr.rel (%p334) target = $region40
        $region39: #{tpu_custom_call.1} parent=11 // pred_region
          _
        $region40: #{tpu_custom_call.1} parent=11 // pred_fallthru
          _
        // Predicated region
        $region41: #{tpu_custom_call.1} parent=11 // pred_check
          %p337 = pneg %p213
        $region42: #{tpu_custom_call.1} parent=11 // pred_check_branch
          %339 = sbr.rel (%p337) target = $region44
        $region43: #{tpu_custom_call.1} parent=11 // pred_region
          _
        $region44: #{tpu_custom_call.1} parent=11 // pred_fallthru
          _
        // Predicated region
        $region45: #{tpu_custom_call.1} parent=11 // pred_check
          %p340 = pneg %p234
        $region46: #{tpu_custom_call.1} parent=11 // pred_check_branch
          %342 = sbr.rel (%p340) target = $region48
        $region47: #{tpu_custom_call.1} parent=11 // pred_region
          _
        $region48: #{tpu_custom_call.1} parent=11 // pred_fallthru
          _
        // Predicated region
        $region49: #{tpu_custom_call.1} parent=11 // pred_check
          %p343 = pneg %p255
        $region50: #{tpu_custom_call.1} parent=11 // pred_check_branch
          %345 = sbr.rel (%p343) target = $region52
        $region51: #{tpu_custom_call.1} parent=11 // pred_region
          _
        $region52: #{tpu_custom_call.1} parent=11 // pred_fallthru
          _
      $region12: #{tpu_custom_call.1} parent=5 // pred_fallthru
        _
      %p346 = scmp.lt.s32.totalorder %s19, 2
      // Predicated region
      $region53: #{tpu_custom_call.1} parent=5 // pred_check
        %p347 = pneg %p346
      $region54: #{tpu_custom_call.1} parent=5 // pred_check_branch
        %349 = sbr.rel (%p347) target = $region56
      $region55: #{tpu_custom_call.1} parent=5 // pred_region
        // Predicated region
        $region57: #{tpu_custom_call.1} parent=55 // pred_check
          %p350 = pneg %p39
        $region58: #{tpu_custom_call.1} parent=55 // pred_check_branch
          %352 = sbr.rel (%p350) target = $region60
        $region59: #{tpu_custom_call.1} parent=55 // pred_region
          %s353 = sand.u32 %s29, 1
          %s354 = sand.u32 %s29, 1
          %s355 = smul.addr %s354, 128
          %s356 = scalar_lea.vmem [#allocation5], %s355
          %s357 = smul.addr %s19, 8
          %s358 = scalar_lea.vmem %s0, %s357
          // Predicated region
          $region61: #{tpu_custom_call.1} parent=59 // pred_check
            _
          $region62: #{tpu_custom_call.1} parent=59 // pred_check_branch
            %360 = sbr.rel (0) target = $region64
          $region63: #{tpu_custom_call.1} parent=59 // pred_region
            // Predicated region
            $region65: #{tpu_custom_call.1} parent=63 // pred_check
              _
            $region66: #{tpu_custom_call.1} parent=63 // pred_check_branch
              %362 = sbr.rel (0) target = $region68
            $region67: #{tpu_custom_call.1} parent=63 // pred_region
              // Predicated region
              $region80: #{tpu_custom_call.1} parent=67 // pred_check
                _
              $region81: #{tpu_custom_call.1} parent=67 // pred_check_branch
                %407 = sbr.rel (0) target = $region83
              $region82: #{tpu_custom_call.1} parent=67 // pred_region
                loop: start=0, step=1, limit=1
                $region84: #{tpu_custom_call.1} parent=82 // loop_pre_header
                  _
                $region85: #{tpu_custom_call.1} parent=82 // loop_header
                  %s409 = sphi 0, %s413
                  %p410 = scmp.ge.s32.totalorder %s409, 1
                  %s414 = sphi %s358, %s358
                  %s415 = sphi %s356, %s356
                $region86: #{tpu_custom_call.1} parent=82 // loop_header_branch
                  %412 = sbr.rel (%p410) target = $region90
                $region87: #{tpu_custom_call.1} parent=82 // loop_body
                  %v416 = vld [vmem:[%s414] sm:$0xff]
                  %417 = vst [vmem:[%s415] sm:$0xff] %v416
                  %v418 = vld [vmem:[%s414 + $0x10] sm:$0xff]
                  %419 = vst [vmem:[%s415 + $0x8] sm:$0xff] %v418
                  %v420 = vld [vmem:[%s414 + $0x20] sm:$0xff]
                  %421 = vst [vmem:[%s415 + $0x10] sm:$0xff] %v420
                  %v422 = vld [vmem:[%s414 + $0x30] sm:$0xff]
                  %423 = vst [vmem:[%s415 + $0x18] sm:$0xff] %v422
                  %v424 = vld [vmem:[%s414 + $0x40] sm:$0xff]
                  %425 = vst [vmem:[%s415 + $0x20] sm:$0xff] %v424
                  %v426 = vld [vmem:[%s414 + $0x50] sm:$0xff]
                  %427 = vst [vmem:[%s415 + $0x28] sm:$0xff] %v426
                  %v428 = vld [vmem:[%s414 + $0x60] sm:$0xff]
                  %429 = vst [vmem:[%s415 + $0x30] sm:$0xff] %v428
                  %v430 = vld [vmem:[%s414 + $0x70] sm:$0xff]
                  %431 = vst [vmem:[%s415 + $0x38] sm:$0xff] %v430
                  %v432 = vld [vmem:[%s414 + $0x80] sm:$0xff]
                  %433 = vst [vmem:[%s415 + $0x40] sm:$0xff] %v432
                  %v434 = vld [vmem:[%s414 + $0x90] sm:$0xff]
                  %435 = vst [vmem:[%s415 + $0x48] sm:$0xff] %v434
                  %v436 = vld [vmem:[%s414 + $0xa0] sm:$0xff]
                  %437 = vst [vmem:[%s415 + $0x50] sm:$0xff] %v436
                  %v438 = vld [vmem:[%s414 + $0xb0] sm:$0xff]
                  %439 = vst [vmem:[%s415 + $0x58] sm:$0xff] %v438
                  %v440 = vld [vmem:[%s414 + $0xc0] sm:$0xff]
                  %441 = vst [vmem:[%s415 + $0x60] sm:$0xff] %v440
                  %v442 = vld [vmem:[%s414 + $0xd0] sm:$0xff]
                  %443 = vst [vmem:[%s415 + $0x68] sm:$0xff] %v442
                  %v444 = vld [vmem:[%s414 + $0xe0] sm:$0xff]
                  %445 = vst [vmem:[%s415 + $0x70] sm:$0xff] %v444
                  %v446 = vld [vmem:[%s414 + $0xf0] sm:$0xff]
                  %447 = vst [vmem:[%s415 + $0x78] sm:$0xff] %v446
                $region88: #{tpu_custom_call.1} parent=82 // loop_footer
                  %s413 = sadd.s32 1, %s409
                $region89: #{tpu_custom_call.1} parent=82 // loop_footer_branch
                  %408 = sbr.rel target = $region85
                $region90: #{tpu_custom_call.1} parent=82 // loop_exit
                  _
              $region83: #{tpu_custom_call.1} parent=67 // pred_fallthru
                _
              // Predicated region
              $region91: #{tpu_custom_call.1} parent=67 // pred_check
                _
              $region92: #{tpu_custom_call.1} parent=67 // pred_check_branch
                %449 = sbr.rel target = $region94
              $region93: #{tpu_custom_call.1} parent=67 // pred_region
                _
              $region94: #{tpu_custom_call.1} parent=67 // pred_fallthru
                _
            $region68: #{tpu_custom_call.1} parent=63 // pred_fallthru
              _
            // Predicated region
            $region69: #{tpu_custom_call.1} parent=63 // pred_check
              _
            $region70: #{tpu_custom_call.1} parent=63 // pred_check_branch
              %364 = sbr.rel target = $region72
            $region71: #{tpu_custom_call.1} parent=63 // pred_region
              loop: start=0, step=1, limit=1
              $region73: #{tpu_custom_call.1} parent=71 // loop_pre_header
                _
              $region74: #{tpu_custom_call.1} parent=71 // loop_header
                %s367 = sphi 0, %s371
                %p368 = scmp.ge.s32.totalorder %s367, 1
                %s372 = sphi %s358, %s358
                %s373 = sphi %s356, %s356
              $region75: #{tpu_custom_call.1} parent=71 // loop_header_branch
                %370 = sbr.rel (%p368) target = $region79
              $region76: #{tpu_custom_call.1} parent=71 // loop_body
                %v374 = vld [vmem:[%s372] sm:$0xff]
                %375 = vst [vmem:[%s373] sm:$0xff] %v374
                %v376 = vld [vmem:[%s372 + $0x10] sm:$0xff]
                %377 = vst [vmem:[%s373 + $0x8] sm:$0xff] %v376
                %v378 = vld [vmem:[%s372 + $0x20] sm:$0xff]
                %379 = vst [vmem:[%s373 + $0x10] sm:$0xff] %v378
                %v380 = vld [vmem:[%s372 + $0x30] sm:$0xff]
                %381 = vst [vmem:[%s373 + $0x18] sm:$0xff] %v380
                %v382 = vld [vmem:[%s372 + $0x40] sm:$0xff]
                %383 = vst [vmem:[%s373 + $0x20] sm:$0xff] %v382
                %v384 = vld [vmem:[%s372 + $0x50] sm:$0xff]
                %385 = vst [vmem:[%s373 + $0x28] sm:$0xff] %v384
                %v386 = vld [vmem:[%s372 + $0x60] sm:$0xff]
                %387 = vst [vmem:[%s373 + $0x30] sm:$0xff] %v386
                %v388 = vld [vmem:[%s372 + $0x70] sm:$0xff]
                %389 = vst [vmem:[%s373 + $0x38] sm:$0xff] %v388
                %v390 = vld [vmem:[%s372 + $0x80] sm:$0xff]
                %391 = vst [vmem:[%s373 + $0x40] sm:$0xff] %v390
                %v392 = vld [vmem:[%s372 + $0x90] sm:$0xff]
                %393 = vst [vmem:[%s373 + $0x48] sm:$0xff] %v392
                %v394 = vld [vmem:[%s372 + $0xa0] sm:$0xff]
                %395 = vst [vmem:[%s373 + $0x50] sm:$0xff] %v394
                %v396 = vld [vmem:[%s372 + $0xb0] sm:$0xff]
                %397 = vst [vmem:[%s373 + $0x58] sm:$0xff] %v396
                %v398 = vld [vmem:[%s372 + $0xc0] sm:$0xff]
                %399 = vst [vmem:[%s373 + $0x60] sm:$0xff] %v398
                %v400 = vld [vmem:[%s372 + $0xd0] sm:$0xff]
                %401 = vst [vmem:[%s373 + $0x68] sm:$0xff] %v400
                %v402 = vld [vmem:[%s372 + $0xe0] sm:$0xff]
                %403 = vst [vmem:[%s373 + $0x70] sm:$0xff] %v402
                %v404 = vld [vmem:[%s372 + $0xf0] sm:$0xff]
                %405 = vst [vmem:[%s373 + $0x78] sm:$0xff] %v404
              $region77: #{tpu_custom_call.1} parent=71 // loop_footer
                %s371 = sadd.s32 1, %s367
              $region78: #{tpu_custom_call.1} parent=71 // loop_footer_branch
                %366 = sbr.rel target = $region74
              $region79: #{tpu_custom_call.1} parent=71 // loop_exit
                _
            $region72: #{tpu_custom_call.1} parent=63 // pred_fallthru
              _
          $region64: #{tpu_custom_call.1} parent=59 // pred_fallthru
            _
          %450 = vnop
        $region60: #{tpu_custom_call.1} parent=55 // pred_fallthru
          _
      $region56: #{tpu_custom_call.1} parent=5 // pred_fallthru
        _
      %p451 = scmp.le.s32.totalorder 1, %s19
      %p452 = scmp.lt.s32.totalorder %s19, 3
      %p453 = pnand %p451, %p452
      %p454 = pneg %p453
      // Predicated region
      $region95: #{tpu_custom_call.1} parent=5 // pred_check
        _
      $region96: #{tpu_custom_call.1} parent=5 // pred_check_branch
        %456 = sbr.rel (%p453) target = $region98
      $region97: #{tpu_custom_call.1} parent=5 // pred_region
        %s457 = ssub.s32 %s19, 1
        %s458 = sand.u32 %s32, 1
        %s459 = sand.u32 %s32, 1
        %s460 = smul.addr %s459, 128
        %s461 = scalar_lea.vmem [#allocation5], %s460
        // Predicated region
        $region99: #{tpu_custom_call.1} parent=97 // pred_check
          %p462 = pneg %p45
        $region100: #{tpu_custom_call.1} parent=97 // pred_check_branch
          %464 = sbr.rel (%p462) target = $region102
        $region101: #{tpu_custom_call.1} parent=97 // pred_region
          _
        $region102: #{tpu_custom_call.1} parent=97 // pred_fallthru
          _
        // Predicated region
        $region103: #{tpu_custom_call.1} parent=97 // pred_check
          %p465 = pneg %p108
        $region104: #{tpu_custom_call.1} parent=97 // pred_check_branch
          %467 = sbr.rel (%p465) target = $region106
        $region105: #{tpu_custom_call.1} parent=97 // pred_region
          %468 = dma.done [#allocation7], 12288
        $region106: #{tpu_custom_call.1} parent=97 // pred_fallthru
          _
        // Predicated region
        $region107: #{tpu_custom_call.1} parent=97 // pred_check
          %p469 = pneg %p150
        $region108: #{tpu_custom_call.1} parent=97 // pred_check_branch
          %471 = sbr.rel (%p469) target = $region110
        $region109: #{tpu_custom_call.1} parent=97 // pred_region
          %472 = dma.done [#allocation9], 24576
        $region110: #{tpu_custom_call.1} parent=97 // pred_fallthru
          _
        %s473 = sand.u32 %s32, 1
        %s474 = sand.u32 %s32, 1
        %s475 = smul.addr %s474, 128
        %s476 = scalar_lea.vmem [#allocation5], %s475
        %p477 = pneg %p45
        %p478 = pneg %p42
        %p479 = pneg %p66
        %p480 = pneg %p63
        %p481 = pneg %p87
        %p482 = pneg %p84
        %p483 = pneg %p108
        %p484 = pneg %p105
        %p485 = pneg %p129
        %p486 = pneg %p126
        %p487 = pneg %p150
        %p488 = pneg %p147
        %p489 = pneg %p171
        %p490 = pneg %p168
        %p491 = pneg %p192
        %p492 = pneg %p189
        %p493 = pneg %p213
        %p494 = pneg %p210
        %p495 = pneg %p234
        %p496 = pneg %p231
        %p497 = pneg %p255
        %p498 = pneg %p252
        %p499 = pneg %p281
        %p500 = pneg %p278
        %p501 = scmp.lt.s32.totalorder %s24, 1
        %s502 = scalar_select %p501, %s24, 1
        %s503 = smul.addr %s502, 8
        %s504 = scalar_lea.vmem %s11, %s503
        %p505 = scmp.lt.s32.totalorder %s24, 1
        %s506 = scalar_select %p505, %s24, 1
        %s507 = smul.addr %s506, 8
        %s508 = scalar_lea.vmem %s11, %s507
        %v509 = vld [vmem:[%s461] sm:$0xff]
        %v510 = vld [vmem:[%s461 + $0x8] sm:$0xff]
        %v511 = vld [vmem:[%s461 + $0x10] sm:$0xff]
        %v512 = vld [vmem:[%s461 + $0x18] sm:$0xff]
        %v513 = vld [vmem:[%s461 + $0x20] sm:$0xff]
        %v514 = vld [vmem:[%s461 + $0x28] sm:$0xff]
        %v515 = vld [vmem:[%s461 + $0x30] sm:$0xff]
        %v516 = vld [vmem:[%s461 + $0x38] sm:$0xff]
        %v517 = vld [vmem:[%s461 + $0x40] sm:$0xff]
        %v518 = vld [vmem:[%s461 + $0x48] sm:$0xff]
        %v519 = vld [vmem:[%s461 + $0x50] sm:$0xff]
        %v520 = vld [vmem:[%s461 + $0x58] sm:$0xff]
        %v521 = vld [vmem:[%s461 + $0x60] sm:$0xff]
        %v522 = vld [vmem:[%s461 + $0x68] sm:$0xff]
        %v523 = vld [vmem:[%s461 + $0x70] sm:$0xff]
        %v524 = vld [vmem:[%s461 + $0x78] sm:$0xff]
        %v525 = vld [vmem:[%s1] sm:$0x77]
        %v526 = vld [vmem:[%s1 + $0x8] sm:$0x77]
        %v527 = vld [vmem:[%s1 + $0x10] sm:$0x77]
        %v528 = vld [vmem:[%s2] sm:$0x3f]
        %v530 = vlaneseq
        %v531 = vshrl.u32 %v530, 7
        %v532 = vsub.s32 0, %v531
        %v533 = vrot.slane %v528, %v532
        %v534 = vlaneseq
        %v535 = vshrl.u32 %v534, 7
        %v536 = vsub.s32 1, %v535
        %v537 = vrot.slane %v528, %v536
        %v538 = vlaneseq
        %v539 = vshrl.u32 %v538, 7
        %v540 = vsub.s32 2, %v539
        %v541 = vrot.slane %v528, %v540
        %v542 = vlaneseq
        %v543 = vshrl.u32 %v542, 7
        %v544 = vsub.s32 3, %v543
        %v545 = vrot.slane %v528, %v544
        %v546 = vlaneseq
        %v547 = vshrl.u32 %v546, 7
        %v548 = vsub.s32 4, %v547
        %v549 = vrot.slane %v528, %v548
        %v550 = vlaneseq
        %v551 = vshrl.u32 %v550, 7
        %v552 = vsub.s32 5, %v551
        %v553 = vrot.slane %v528, %v552
        %v563 = vcombine.high %v525, %v525
        %v564 = vcombine.high %v526, %v526
        %v565 = vcombine.high %v527, %v527
        %vm566 = vcmask 23552
        %v568 = vsel %vm566, %v509, 0
        %v571 = vsel %vm566, %v510, 0
        %v574 = vsel %vm566, %v511, 0
        %v577 = vsel %vm566, %v512, 0
        %v580 = vsel %vm566, %v513, 0
        %v583 = vsel %vm566, %v514, 0
        %v586 = vsel %vm566, %v515, 0
        %v589 = vsel %vm566, %v516, 0
        %v592 = vsel %vm566, %v517, 0
        %v595 = vsel %vm566, %v518, 0
        %v598 = vsel %vm566, %v519, 0
        %v601 = vsel %vm566, %v520, 0
        %v604 = vsel %vm566, %v521, 0
        %v607 = vsel %vm566, %v522, 0
        %v610 = vsel %vm566, %v523, 0
        %v613 = vsel %vm566, %v524, 0
        %vm615 = vcmask 1042432
        %v616 = vsel %vm615, %v525, 0
        %v618 = vsel %vm615, %v563, 0
        %v620 = vsel %vm615, %v526, 0
        %v622 = vsel %vm615, %v564, 0
        %v624 = vsel %vm615, %v527, 0
        %v626 = vsel %vm615, %v565, 0
        %628 = vmatprep.subr.mxu0 %v618
        %629 = vmatpush1.msra.mxu0 %v616
        %630 = vmatprep.subr.mxu0 0.0
        %631 = vmatpush1.msra.mxu0 0.0
        %632 = vmatprep.subr.mxu0 0.0
        %633 = vmatpush1.msra.mxu0 0.0
        %634 = vmatprep.subr.mxu0 0.0
        %635 = vmatpush1.msra.mxu0 0.0
        %636 = vmatprep.subr.mxu0 0.0
        %637 = vmatpush1.msra.mxu0 0.0
        %638 = vmatprep.subr.mxu0 0.0
        %639 = vmatpush1.msra.mxu0 0.0
        %640 = vmatprep.subr.mxu0 0.0
        %641 = vmatpush1.msra.mxu0 0.0
        %642 = vmatprep.subr.mxu0 0.0
        %643 = vmatpush1.msra.mxu0 0.0
        %644 = vmatprep.subr.mxu0 0.0
        %645 = vmatpush1.msra.mxu0 0.0
        %646 = vmatprep.subr.mxu0 0.0
        %647 = vmatpush1.msra.mxu0 0.0
        %648 = vmatprep.subr.mxu0 0.0
        %649 = vmatpush1.msra.mxu0 0.0
        %650 = vmatprep.subr.mxu0 0.0
        %651 = vmatpush1.msra.mxu0 0.0
        %652 = vmatprep.subr.mxu0 0.0
        %653 = vmatpush1.msra.mxu0 0.0
        %654 = vmatprep.subr.mxu0 0.0
        %655 = vmatpush1.msra.mxu0 0.0
        %656 = vmatprep.subr.mxu0 0.0
        %657 = vmatpush1.msra.mxu0 0.0
        %658 = vmatprep.subr.mxu0 0.0
        %659 = vmatpush1.msra.mxu0 0.0
        %660 = vmatprep.subr.mxu0 0.0
        %661 = vmatpush1.msra.mxu0 0.0
        %662 = vmatprep.subr.mxu0 0.0
        %663 = vmatpush1.msra.mxu0 0.0
        %664 = vmatprep.subr.mxu0 0.0
        %665 = vmatpush1.msra.mxu0 0.0
        %666 = vmatprep.subr.mxu0 0.0
        %667 = vmatpush1.msra.mxu0 0.0
        %668 = vmatprep.subr.mxu0 0.0
        %669 = vmatpush1.msra.mxu0 0.0
        %670 = vmatprep.subr.mxu0 0.0
        %671 = vmatpush1.msra.mxu0 0.0
        %672 = vmatprep.subr.mxu0 0.0
        %673 = vmatpush1.msra.mxu0 0.0
        %674 = vmatprep.subr.mxu0 0.0
        %675 = vmatpush1.msra.mxu0 0.0
        %676 = vmatprep.subr.mxu0 0.0
        %677 = vmatpush1.msra.mxu0 0.0
        %678 = vmatprep.subr.mxu0 0.0
        %679 = vmatpush1.msra.mxu0 0.0
        %680 = vmatprep.subr.mxu0 0.0
        %681 = vmatpush1.msra.mxu0 0.0
        %682 = vmatprep.subr.mxu0 0.0
        %683 = vmatpush1.msra.mxu0 0.0
        %684 = vmatprep.subr.mxu0 0.0
        %685 = vmatpush1.msra.mxu0 0.0
        %686 = vmatprep.subr.mxu0 0.0
        %687 = vmatpush1.msra.mxu0 0.0
        %688 = vmatprep.subr.mxu0 0.0
        %689 = vmatpush1.msra.mxu0 0.0
        %690 = vmatprep.subr.mxu0 0.0
        %691 = vmatpush1.msra.mxu0 0.0
        %692 = vmatprep.mubr.f32.mxu0 0.0
        %693 = vmatmul.mubr.f32.gmra.mrb[0].mxu0 %v568
        %v694 = vpop.f32.mrb[0].mxu0
        %v695 = vadd.f32 %v533, %v694
        %v696 = vpop.f32.mrb[0].mxu0
        %v697 = vadd.f32 %v537, %v696
        %698 = vmatprep.mubr.f32.mxu0 0.0
        %699 = vmatmul.mubr.f32.gmra.mrb[0].mxu0 %v571
        %v700 = vpop.f32.mrb[0].mxu0
        %v701 = vadd.f32 %v533, %v700
        %v702 = vpop.f32.mrb[0].mxu0
        %v703 = vadd.f32 %v537, %v702
        %704 = vmatprep.mubr.f32.mxu0 0.0
        %705 = vmatmul.mubr.f32.gmra.mrb[0].mxu0 %v574
        %v706 = vpop.f32.mrb[0].mxu0
        %v707 = vadd.f32 %v533, %v706
        %v708 = vpop.f32.mrb[0].mxu0
        %v709 = vadd.f32 %v537, %v708
        %710 = vmatprep.mubr.f32.mxu0 0.0
        %711 = vmatmul.mubr.f32.gmra.mrb[0].mxu0 %v577
        %v712 = vpop.f32.mrb[0].mxu0
        %v713 = vadd.f32 %v533, %v712
        %v714 = vpop.f32.mrb[0].mxu0
        %v715 = vadd.f32 %v537, %v714
        %716 = vmatprep.mubr.f32.mxu0 0.0
        %717 = vmatmul.mubr.f32.gmra.mrb[0].mxu0 %v580
        %v718 = vpop.f32.mrb[0].mxu0
        %v719 = vadd.f32 %v533, %v718
        %v720 = vpop.f32.mrb[0].mxu0
        %v721 = vadd.f32 %v537, %v720
        %722 = vmatprep.mubr.f32.mxu0 0.0
        %723 = vmatmul.mubr.f32.gmra.mrb[0].mxu0 %v583
        %v724 = vpop.f32.mrb[0].mxu0
        %v725 = vadd.f32 %v533, %v724
        %v726 = vpop.f32.mrb[0].mxu0
        %v727 = vadd.f32 %v537, %v726
        %728 = vmatprep.mubr.f32.mxu0 0.0
        %729 = vmatmul.mubr.f32.gmra.mrb[0].mxu0 %v586
        %v730 = vpop.f32.mrb[0].mxu0
        %v731 = vadd.f32 %v533, %v730
        %v732 = vpop.f32.mrb[0].mxu0
        %v733 = vadd.f32 %v537, %v732
        %734 = vmatprep.mubr.f32.mxu0 0.0
        %735 = vmatmul.mubr.f32.gmra.mrb[0].mxu0 %v589
        %v736 = vpop.f32.mrb[0].mxu0
        %v737 = vadd.f32 %v533, %v736
        %v738 = vpop.f32.mrb[0].mxu0
        %v739 = vadd.f32 %v537, %v738
        %740 = vmatprep.mubr.f32.mxu0 0.0
        %741 = vmatmul.mubr.f32.gmra.mrb[0].mxu0 %v592
        %v742 = vpop.f32.mrb[0].mxu0
        %v743 = vadd.f32 %v533, %v742
        %v744 = vpop.f32.mrb[0].mxu0
        %v745 = vadd.f32 %v537, %v744
        %746 = vmatprep.mubr.f32.mxu0 0.0
        %747 = vmatmul.mubr.f32.gmra.mrb[0].mxu0 %v595
        %v748 = vpop.f32.mrb[0].mxu0
        %v749 = vadd.f32 %v533, %v748
        %v750 = vpop.f32.mrb[0].mxu0
        %v751 = vadd.f32 %v537, %v750
        %752 = vmatprep.mubr.f32.mxu0 0.0
        %753 = vmatmul.mubr.f32.gmra.mrb[0].mxu0 %v598
        %v754 = vpop.f32.mrb[0].mxu0
        %v755 = vadd.f32 %v533, %v754
        %v756 = vpop.f32.mrb[0].mxu0
        %v757 = vadd.f32 %v537, %v756
        %758 = vmatprep.mubr.f32.mxu0 0.0
        %759 = vmatmul.mubr.f32.gmra.mrb[0].mxu0 %v601
        %v760 = vpop.f32.mrb[0].mxu0
        %v761 = vadd.f32 %v533, %v760
        %v762 = vpop.f32.mrb[0].mxu0
        %v763 = vadd.f32 %v537, %v762
        %764 = vmatprep.mubr.f32.mxu0 0.0
        %765 = vmatmul.mubr.f32.gmra.mrb[0].mxu0 %v604
        %v766 = vpop.f32.mrb[0].mxu0
        %v767 = vadd.f32 %v533, %v766
        %v768 = vpop.f32.mrb[0].mxu0
        %v769 = vadd.f32 %v537, %v768
        %770 = vmatprep.mubr.f32.mxu0 0.0
        %771 = vmatmul.mubr.f32.gmra.mrb[0].mxu0 %v607
        %v772 = vpop.f32.mrb[0].mxu0
        %v773 = vadd.f32 %v533, %v772
        %v774 = vpop.f32.mrb[0].mxu0
        %v775 = vadd.f32 %v537, %v774
        %776 = vmatprep.mubr.f32.mxu0 0.0
        %777 = vmatmul.mubr.f32.gmra.mrb[0].mxu0 %v610
        %v778 = vpop.f32.mrb[0].mxu0
        %v779 = vadd.f32 %v533, %v778
        %v780 = vpop.f32.mrb[0].mxu0
        %v781 = vadd.f32 %v537, %v780
        %782 = vmatprep.mubr.f32.mxu0 0.0
        %783 = vmatmul.mubr.f32.gmra.mrb[0].mxu0 %v613
        %v784 = vpop.f32.mrb[0].mxu0
        %v785 = vadd.f32 %v533, %v784
        %v786 = vpop.f32.mrb[0].mxu0
        %v787 = vadd.f32 %v537, %v786
        %788 = vdwg.mxu0
        %789 = vmatprep.subr.mxu0 %v622
        %790 = vmatpush1.msra.mxu0 %v620
        %791 = vmatprep.subr.mxu0 0.0
        %792 = vmatpush1.msra.mxu0 0.0
        %793 = vmatprep.subr.mxu0 0.0
        %794 = vmatpush1.msra.mxu0 0.0
        %795 = vmatprep.subr.mxu0 0.0
        %796 = vmatpush1.msra.mxu0 0.0
        %797 = vmatprep.subr.mxu0 0.0
        %798 = vmatpush1.msra.mxu0 0.0
        %799 = vmatprep.subr.mxu0 0.0
        %800 = vmatpush1.msra.mxu0 0.0
        %801 = vmatprep.subr.mxu0 0.0
        %802 = vmatpush1.msra.mxu0 0.0
        %803 = vmatprep.subr.mxu0 0.0
        %804 = vmatpush1.msra.mxu0 0.0
        %805 = vmatprep.subr.mxu0 0.0
        %806 = vmatpush1.msra.mxu0 0.0
        %807 = vmatprep.subr.mxu0 0.0
        %808 = vmatpush1.msra.mxu0 0.0
        %809 = vmatprep.subr.mxu0 0.0
        %810 = vmatpush1.msra.mxu0 0.0
        %811 = vmatprep.subr.mxu0 0.0
        %812 = vmatpush1.msra.mxu0 0.0
        %813 = vmatprep.subr.mxu0 0.0
        %814 = vmatpush1.msra.mxu0 0.0
        %815 = vmatprep.subr.mxu0 0.0
        %816 = vmatpush1.msra.mxu0 0.0
        %817 = vmatprep.subr.mxu0 0.0
        %818 = vmatpush1.msra.mxu0 0.0
        %819 = vmatprep.subr.mxu0 0.0
        %820 = vmatpush1.msra.mxu0 0.0
        %821 = vmatprep.subr.mxu0 0.0
        %822 = vmatpush1.msra.mxu0 0.0
        %823 = vmatprep.subr.mxu0 0.0
        %824 = vmatpush1.msra.mxu0 0.0
        %825 = vmatprep.subr.mxu0 0.0
        %826 = vmatpush1.msra.mxu0 0.0
        %827 = vmatprep.subr.mxu0 0.0
        %828 = vmatpush1.msra.mxu0 0.0
        %829 = vmatprep.subr.mxu0 0.0
        %830 = vmatpush1.msra.mxu0 0.0
        %831 = vmatprep.subr.mxu0 0.0
        %832 = vmatpush1.msra.mxu0 0.0
        %833 = vmatprep.subr.mxu0 0.0
        %834 = vmatpush1.msra.mxu0 0.0
        %835 = vmatprep.subr.mxu0 0.0
        %836 = vmatpush1.msra.mxu0 0.0
        %837 = vmatprep.subr.mxu0 0.0
        %838 = vmatpush1.msra.mxu0 0.0
        %839 = vmatprep.subr.mxu0 0.0
        %840 = vmatpush1.msra.mxu0 0.0
        %841 = vmatprep.subr.mxu0 0.0
        %842 = vmatpush1.msra.mxu0 0.0
        %843 = vmatprep.subr.mxu0 0.0
        %844 = vmatpush1.msra.mxu0 0.0
        %845 = vmatprep.subr.mxu0 0.0
        %846 = vmatpush1.msra.mxu0 0.0
        %847 = vmatprep.subr.mxu0 0.0
        %848 = vmatpush1.msra.mxu0 0.0
        %849 = vmatprep.subr.mxu0 0.0
        %850 = vmatpush1.msra.mxu0 0.0
        %851 = vmatprep.subr.mxu0 0.0
        %852 = vmatpush1.msra.mxu0 0.0
        %853 = vmatprep.mubr.f32.mxu0 0.0
        %854 = vmatmul.mubr.f32.gmra.mrb[0].mxu0 %v568
        %v855 = vpop.f32.mrb[0].mxu0
        %v856 = vadd.f32 %v541, %v855
        %v857 = vpop.f32.mrb[0].mxu0
        %v858 = vadd.f32 %v545, %v857
        %859 = vmatprep.mubr.f32.mxu0 0.0
        %860 = vmatmul.mubr.f32.gmra.mrb[0].mxu0 %v571
        %v861 = vpop.f32.mrb[0].mxu0
        %v862 = vadd.f32 %v541, %v861
        %v863 = vpop.f32.mrb[0].mxu0
        %v864 = vadd.f32 %v545, %v863
        %865 = vmatprep.mubr.f32.mxu0 0.0
        %866 = vmatmul.mubr.f32.gmra.mrb[0].mxu0 %v574
        %v867 = vpop.f32.mrb[0].mxu0
        %v868 = vadd.f32 %v541, %v867
        %v869 = vpop.f32.mrb[0].mxu0
        %v870 = vadd.f32 %v545, %v869
        %871 = vmatprep.mubr.f32.mxu0 0.0
        %872 = vmatmul.mubr.f32.gmra.mrb[0].mxu0 %v577
        %v873 = vpop.f32.mrb[0].mxu0
        %v874 = vadd.f32 %v541, %v873
        %v875 = vpop.f32.mrb[0].mxu0
        %v876 = vadd.f32 %v545, %v875
        %877 = vmatprep.mubr.f32.mxu0 0.0
        %878 = vmatmul.mubr.f32.gmra.mrb[0].mxu0 %v580
        %v879 = vpop.f32.mrb[0].mxu0
        %v880 = vadd.f32 %v541, %v879
        %v881 = vpop.f32.mrb[0].mxu0
        %v882 = vadd.f32 %v545, %v881
        %883 = vmatprep.mubr.f32.mxu0 0.0
        %884 = vmatmul.mubr.f32.gmra.mrb[0].mxu0 %v583
        %v885 = vpop.f32.mrb[0].mxu0
        %v886 = vadd.f32 %v541, %v885
        %v887 = vpop.f32.mrb[0].mxu0
        %v888 = vadd.f32 %v545, %v887
        %889 = vmatprep.mubr.f32.mxu0 0.0
        %890 = vmatmul.mubr.f32.gmra.mrb[0].mxu0 %v586
        %v891 = vpop.f32.mrb[0].mxu0
        %v892 = vadd.f32 %v541, %v891
        %v893 = vpop.f32.mrb[0].mxu0
        %v894 = vadd.f32 %v545, %v893
        %895 = vmatprep.mubr.f32.mxu0 0.0
        %896 = vmatmul.mubr.f32.gmra.mrb[0].mxu0 %v589
        %v897 = vpop.f32.mrb[0].mxu0
        %v898 = vadd.f32 %v541, %v897
        %v899 = vpop.f32.mrb[0].mxu0
        %v900 = vadd.f32 %v545, %v899
        %901 = vmatprep.mubr.f32.mxu0 0.0
        %902 = vmatmul.mubr.f32.gmra.mrb[0].mxu0 %v592
        %v903 = vpop.f32.mrb[0].mxu0
        %v904 = vadd.f32 %v541, %v903
        %v905 = vpop.f32.mrb[0].mxu0
        %v906 = vadd.f32 %v545, %v905
        %907 = vmatprep.mubr.f32.mxu0 0.0
        %908 = vmatmul.mubr.f32.gmra.mrb[0].mxu0 %v595
        %v909 = vpop.f32.mrb[0].mxu0
        %v910 = vadd.f32 %v541, %v909
        %v911 = vpop.f32.mrb[0].mxu0
        %v912 = vadd.f32 %v545, %v911
        %913 = vmatprep.mubr.f32.mxu0 0.0
        %914 = vmatmul.mubr.f32.gmra.mrb[0].mxu0 %v598
        %v915 = vpop.f32.mrb[0].mxu0
        %v916 = vadd.f32 %v541, %v915
        %v917 = vpop.f32.mrb[0].mxu0
        %v918 = vadd.f32 %v545, %v917
        %919 = vmatprep.mubr.f32.mxu0 0.0
        %920 = vmatmul.mubr.f32.gmra.mrb[0].mxu0 %v601
        %v921 = vpop.f32.mrb[0].mxu0
        %v922 = vadd.f32 %v541, %v921
        %v923 = vpop.f32.mrb[0].mxu0
        %v924 = vadd.f32 %v545, %v923
        %925 = vmatprep.mubr.f32.mxu0 0.0
        %926 = vmatmul.mubr.f32.gmra.mrb[0].mxu0 %v604
        %v927 = vpop.f32.mrb[0].mxu0
        %v928 = vadd.f32 %v541, %v927
        %v929 = vpop.f32.mrb[0].mxu0
        %v930 = vadd.f32 %v545, %v929
        %931 = vmatprep.mubr.f32.mxu0 0.0
        %932 = vmatmul.mubr.f32.gmra.mrb[0].mxu0 %v607
        %v933 = vpop.f32.mrb[0].mxu0
        %v934 = vadd.f32 %v541, %v933
        %v935 = vpop.f32.mrb[0].mxu0
        %v936 = vadd.f32 %v545, %v935
        %937 = vmatprep.mubr.f32.mxu0 0.0
        %938 = vmatmul.mubr.f32.gmra.mrb[0].mxu0 %v610
        %v939 = vpop.f32.mrb[0].mxu0
        %v940 = vadd.f32 %v541, %v939
        %v941 = vpop.f32.mrb[0].mxu0
        %v942 = vadd.f32 %v545, %v941
        %943 = vmatprep.mubr.f32.mxu0 0.0
        %944 = vmatmul.mubr.f32.gmra.mrb[0].mxu0 %v613
        %v945 = vpop.f32.mrb[0].mxu0
        %v946 = vadd.f32 %v541, %v945
        %v947 = vpop.f32.mrb[0].mxu0
        %v948 = vadd.f32 %v545, %v947
        %949 = vdwg.mxu0
        %950 = vmatprep.subr.mxu0 %v626
        %951 = vmatpush1.msra.mxu0 %v624
        %952 = vmatprep.subr.mxu0 0.0
        %953 = vmatpush1.msra.mxu0 0.0
        %954 = vmatprep.subr.mxu0 0.0
        %955 = vmatpush1.msra.mxu0 0.0
        %956 = vmatprep.subr.mxu0 0.0
        %957 = vmatpush1.msra.mxu0 0.0
        %958 = vmatprep.subr.mxu0 0.0
        %959 = vmatpush1.msra.mxu0 0.0
        %960 = vmatprep.subr.mxu0 0.0
        %961 = vmatpush1.msra.mxu0 0.0
        %962 = vmatprep.subr.mxu0 0.0
        %963 = vmatpush1.msra.mxu0 0.0
        %964 = vmatprep.subr.mxu0 0.0
        %965 = vmatpush1.msra.mxu0 0.0
        %966 = vmatprep.subr.mxu0 0.0
        %967 = vmatpush1.msra.mxu0 0.0
        %968 = vmatprep.subr.mxu0 0.0
        %969 = vmatpush1.msra.mxu0 0.0
        %970 = vmatprep.subr.mxu0 0.0
        %971 = vmatpush1.msra.mxu0 0.0
        %972 = vmatprep.subr.mxu0 0.0
        %973 = vmatpush1.msra.mxu0 0.0
        %974 = vmatprep.subr.mxu0 0.0
        %975 = vmatpush1.msra.mxu0 0.0
        %976 = vmatprep.subr.mxu0 0.0
        %977 = vmatpush1.msra.mxu0 0.0
        %978 = vmatprep.subr.mxu0 0.0
        %979 = vmatpush1.msra.mxu0 0.0
        %980 = vmatprep.subr.mxu0 0.0
        %981 = vmatpush1.msra.mxu0 0.0
        %982 = vmatprep.subr.mxu0 0.0
        %983 = vmatpush1.msra.mxu0 0.0
        %984 = vmatprep.subr.mxu0 0.0
        %985 = vmatpush1.msra.mxu0 0.0
        %986 = vmatprep.subr.mxu0 0.0
        %987 = vmatpush1.msra.mxu0 0.0
        %988 = vmatprep.subr.mxu0 0.0
        %989 = vmatpush1.msra.mxu0 0.0
        %990 = vmatprep.subr.mxu0 0.0
        %991 = vmatpush1.msra.mxu0 0.0
        %992 = vmatprep.subr.mxu0 0.0
        %993 = vmatpush1.msra.mxu0 0.0
        %994 = vmatprep.subr.mxu0 0.0
        %995 = vmatpush1.msra.mxu0 0.0
        %996 = vmatprep.subr.mxu0 0.0
        %997 = vmatpush1.msra.mxu0 0.0
        %998 = vmatprep.subr.mxu0 0.0
        %999 = vmatpush1.msra.mxu0 0.0
        %1000 = vmatprep.subr.mxu0 0.0
        %1001 = vmatpush1.msra.mxu0 0.0
        %1002 = vmatprep.subr.mxu0 0.0
        %1003 = vmatpush1.msra.mxu0 0.0
        %1004 = vmatprep.subr.mxu0 0.0
        %1005 = vmatpush1.msra.mxu0 0.0
        %1006 = vmatprep.subr.mxu0 0.0
        %1007 = vmatpush1.msra.mxu0 0.0
        %1008 = vmatprep.subr.mxu0 0.0
        %1009 = vmatpush1.msra.mxu0 0.0
        %1010 = vmatprep.subr.mxu0 0.0
        %1011 = vmatpush1.msra.mxu0 0.0
        %1012 = vmatprep.subr.mxu0 0.0
        %1013 = vmatpush1.msra.mxu0 0.0
        %1014 = vmatprep.mubr.f32.mxu0 0.0
        %1015 = vmatmul.mubr.f32.gmra.mrb[0].mxu0 %v568
        %v1016 = vpop.f32.mrb[0].mxu0
        %v1017 = vadd.f32 %v549, %v1016
        %v1018 = vpop.f32.mrb[0].mxu0
        %v1019 = vadd.f32 %v553, %v1018
        %1020 = vmatprep.mubr.f32.mxu0 0.0
        %1021 = vmatmul.mubr.f32.gmra.mrb[0].mxu0 %v571
        %v1022 = vpop.f32.mrb[0].mxu0
        %v1023 = vadd.f32 %v549, %v1022
        %v1024 = vpop.f32.mrb[0].mxu0
        %v1025 = vadd.f32 %v553, %v1024
        %1026 = vmatprep.mubr.f32.mxu0 0.0
        %1027 = vmatmul.mubr.f32.gmra.mrb[0].mxu0 %v574
        %v1028 = vpop.f32.mrb[0].mxu0
        %v1029 = vadd.f32 %v549, %v1028
        %v1030 = vpop.f32.mrb[0].mxu0
        %v1031 = vadd.f32 %v553, %v1030
        %1032 = vmatprep.mubr.f32.mxu0 0.0
        %1033 = vmatmul.mubr.f32.gmra.mrb[0].mxu0 %v577
        %v1034 = vpop.f32.mrb[0].mxu0
        %v1035 = vadd.f32 %v549, %v1034
        %v1036 = vpop.f32.mrb[0].mxu0
        %v1037 = vadd.f32 %v553, %v1036
        %1038 = vmatprep.mubr.f32.mxu0 0.0
        %1039 = vmatmul.mubr.f32.gmra.mrb[0].mxu0 %v580
        %v1040 = vpop.f32.mrb[0].mxu0
        %v1041 = vadd.f32 %v549, %v1040
        %v1042 = vpop.f32.mrb[0].mxu0
        %v1043 = vadd.f32 %v553, %v1042
        %1044 = vmatprep.mubr.f32.mxu0 0.0
        %1045 = vmatmul.mubr.f32.gmra.mrb[0].mxu0 %v583
        %v1046 = vpop.f32.mrb[0].mxu0
        %v1047 = vadd.f32 %v549, %v1046
        %v1048 = vpop.f32.mrb[0].mxu0
        %v1049 = vadd.f32 %v553, %v1048
        %1050 = vmatprep.mubr.f32.mxu0 0.0
        %1051 = vmatmul.mubr.f32.gmra.mrb[0].mxu0 %v586
        %v1052 = vpop.f32.mrb[0].mxu0
        %v1053 = vadd.f32 %v549, %v1052
        %v1054 = vpop.f32.mrb[0].mxu0
        %v1055 = vadd.f32 %v553, %v1054
        %1056 = vmatprep.mubr.f32.mxu0 0.0
        %1057 = vmatmul.mubr.f32.gmra.mrb[0].mxu0 %v589
        %v1058 = vpop.f32.mrb[0].mxu0
        %v1059 = vadd.f32 %v549, %v1058
        %v1060 = vpop.f32.mrb[0].mxu0
        %v1061 = vadd.f32 %v553, %v1060
        %1062 = vmatprep.mubr.f32.mxu0 0.0
        %1063 = vmatmul.mubr.f32.gmra.mrb[0].mxu0 %v592
        %v1064 = vpop.f32.mrb[0].mxu0
        %v1065 = vadd.f32 %v549, %v1064
        %v1066 = vpop.f32.mrb[0].mxu0
        %v1067 = vadd.f32 %v553, %v1066
        %1068 = vmatprep.mubr.f32.mxu0 0.0
        %1069 = vmatmul.mubr.f32.gmra.mrb[0].mxu0 %v595
        %v1070 = vpop.f32.mrb[0].mxu0
        %v1071 = vadd.f32 %v549, %v1070
        %v1072 = vpop.f32.mrb[0].mxu0
        %v1073 = vadd.f32 %v553, %v1072
        %1074 = vmatprep.mubr.f32.mxu0 0.0
        %1075 = vmatmul.mubr.f32.gmra.mrb[0].mxu0 %v598
        %v1076 = vpop.f32.mrb[0].mxu0
        %v1077 = vadd.f32 %v549, %v1076
        %v1078 = vpop.f32.mrb[0].mxu0
        %v1079 = vadd.f32 %v553, %v1078
        %1080 = vmatprep.mubr.f32.mxu0 0.0
        %1081 = vmatmul.mubr.f32.gmra.mrb[0].mxu0 %v601
        %v1082 = vpop.f32.mrb[0].mxu0
        %v1083 = vadd.f32 %v549, %v1082
        %v1084 = vpop.f32.mrb[0].mxu0
        %v1085 = vadd.f32 %v553, %v1084
        %1086 = vmatprep.mubr.f32.mxu0 0.0
        %1087 = vmatmul.mubr.f32.gmra.mrb[0].mxu0 %v604
        %v1088 = vpop.f32.mrb[0].mxu0
        %v1089 = vadd.f32 %v549, %v1088
        %v1090 = vpop.f32.mrb[0].mxu0
        %v1091 = vadd.f32 %v553, %v1090
        %1092 = vmatprep.mubr.f32.mxu0 0.0
        %1093 = vmatmul.mubr.f32.gmra.mrb[0].mxu0 %v607
        %v1094 = vpop.f32.mrb[0].mxu0
        %v1095 = vadd.f32 %v549, %v1094
        %v1096 = vpop.f32.mrb[0].mxu0
        %v1097 = vadd.f32 %v553, %v1096
        %1098 = vmatprep.mubr.f32.mxu0 0.0
        %1099 = vmatmul.mubr.f32.gmra.mrb[0].mxu0 %v610
        %v1100 = vpop.f32.mrb[0].mxu0
        %v1101 = vadd.f32 %v549, %v1100
        %v1102 = vpop.f32.mrb[0].mxu0
        %v1103 = vadd.f32 %v553, %v1102
        %1104 = vmatprep.mubr.f32.mxu0 0.0
        %1105 = vmatmul.mubr.f32.gmra.mrb[0].mxu0 %v613
        %v1106 = vpop.f32.mrb[0].mxu0
        %v1107 = vadd.f32 %v549, %v1106
        %v1108 = vpop.f32.mrb[0].mxu0
        %v1109 = vadd.f32 %v553, %v1108
        %1110 = vdwg.mxu0
        %1111 = vst [vmem:[#allocation2] sm:$0xff] %v695
        %1112 = vst [vmem:[#allocation2 + $0x8] sm:$0xff] %v697
        %1113 = vst [vmem:[#allocation2 + $0x10] sm:$0xff] %v856
        %1114 = vst [vmem:[#allocation2 + $0x18] sm:$0xff] %v858
        %1115 = vst [vmem:[#allocation2 + $0x20] sm:$0xff] %v1017
        %1116 = vst [vmem:[#allocation2 + $0x28] sm:$0xff] %v1019
        %1117 = vst [vmem:[#allocation2 + $0x30] sm:$0xff] %v701
        %1118 = vst [vmem:[#allocation2 + $0x38] sm:$0xff] %v703
        %1119 = vst [vmem:[#allocation2 + $0x40] sm:$0xff] %v862
        %1120 = vst [vmem:[#allocation2 + $0x48] sm:$0xff] %v864
        %1121 = vst [vmem:[#allocation2 + $0x50] sm:$0xff] %v1023
        %1122 = vst [vmem:[#allocation2 + $0x58] sm:$0xff] %v1025
        %1123 = vst [vmem:[#allocation2 + $0x60] sm:$0xff] %v707
        %1124 = vst [vmem:[#allocation2 + $0x68] sm:$0xff] %v709
        %1125 = vst [vmem:[#allocation2 + $0x70] sm:$0xff] %v868
        %1126 = vst [vmem:[#allocation2 + $0x78] sm:$0xff] %v870
        %1127 = vst [vmem:[#allocation2 + $0x80] sm:$0xff] %v1029
        %1128 = vst [vmem:[#allocation2 + $0x88] sm:$0xff] %v1031
        %1129 = vst [vmem:[#allocation2 + $0x90] sm:$0xff] %v713
        %1130 = vst [vmem:[#allocation2 + $0x98] sm:$0xff] %v715
        %1131 = vst [vmem:[#allocation2 + $0xa0] sm:$0xff] %v874
        %1132 = vst [vmem:[#allocation2 + $0xa8] sm:$0xff] %v876
        %1133 = vst [vmem:[#allocation2 + $0xb0] sm:$0xff] %v1035
        %1134 = vst [vmem:[#allocation2 + $0xb8] sm:$0xff] %v1037
        %1135 = vst [vmem:[#allocation2 + $0xc0] sm:$0xff] %v719
        %1136 = vst [vmem:[#allocation2 + $0xc8] sm:$0xff] %v721
        %1137 = vst [vmem:[#allocation2 + $0xd0] sm:$0xff] %v880
        %1138 = vst [vmem:[#allocation2 + $0xd8] sm:$0xff] %v882
        %1139 = vst [vmem:[#allocation2 + $0xe0] sm:$0xff] %v1041
        %1140 = vst [vmem:[#allocation2 + $0xe8] sm:$0xff] %v1043
        %1141 = vst [vmem:[#allocation2 + $0xf0] sm:$0xff] %v725
        %1142 = vst [vmem:[#allocation2 + $0xf8] sm:$0xff] %v727
        %1143 = vst [vmem:[#allocation2 + $0x100] sm:$0xff] %v886
        %1144 = vst [vmem:[#allocation2 + $0x108] sm:$0xff] %v888
        %1145 = vst [vmem:[#allocation2 + $0x110] sm:$0xff] %v1047
        %1146 = vst [vmem:[#allocation2 + $0x118] sm:$0xff] %v1049
        %1147 = vst [vmem:[#allocation2 + $0x120] sm:$0xff] %v731
        %1148 = vst [vmem:[#allocation2 + $0x128] sm:$0xff] %v733
        %1149 = vst [vmem:[#allocation2 + $0x130] sm:$0xff] %v892
        %1150 = vst [vmem:[#allocation2 + $0x138] sm:$0xff] %v894
        %1151 = vst [vmem:[#allocation2 + $0x140] sm:$0xff] %v1053
        %1152 = vst [vmem:[#allocation2 + $0x148] sm:$0xff] %v1055
        %1153 = vst [vmem:[#allocation2 + $0x150] sm:$0xff] %v737
        %1154 = vst [vmem:[#allocation2 + $0x158] sm:$0xff] %v739
        %1155 = vst [vmem:[#allocation2 + $0x160] sm:$0xff] %v898
        %1156 = vst [vmem:[#allocation2 + $0x168] sm:$0xff] %v900
        %1157 = vst [vmem:[#allocation2 + $0x170] sm:$0xff] %v1059
        %1158 = vst [vmem:[#allocation2 + $0x178] sm:$0xff] %v1061
        %1159 = vst [vmem:[#allocation2 + $0x180] sm:$0xff] %v743
        %1160 = vst [vmem:[#allocation2 + $0x188] sm:$0xff] %v745
        %1161 = vst [vmem:[#allocation2 + $0x190] sm:$0xff] %v904
        %1162 = vst [vmem:[#allocation2 + $0x198] sm:$0xff] %v906
        %1163 = vst [vmem:[#allocation2 + $0x1a0] sm:$0xff] %v1065
        %1164 = vst [vmem:[#allocation2 + $0x1a8] sm:$0xff] %v1067
        %1165 = vst [vmem:[#allocation2 + $0x1b0] sm:$0xff] %v749
        %1166 = vst [vmem:[#allocation2 + $0x1b8] sm:$0xff] %v751
        %1167 = vst [vmem:[#allocation2 + $0x1c0] sm:$0xff] %v910
        %1168 = vst [vmem:[#allocation2 + $0x1c8] sm:$0xff] %v912
        %1169 = vst [vmem:[#allocation2 + $0x1d0] sm:$0xff] %v1071
        %1170 = vst [vmem:[#allocation2 + $0x1d8] sm:$0xff] %v1073
        %1171 = vst [vmem:[#allocation2 + $0x1e0] sm:$0xff] %v755
        %1172 = vst [vmem:[#allocation2 + $0x1e8] sm:$0xff] %v757
        %1173 = vst [vmem:[#allocation2 + $0x1f0] sm:$0xff] %v916
        %1174 = vst [vmem:[#allocation2 + $0x1f8] sm:$0xff] %v918
        %1175 = vst [vmem:[#allocation2 + $0x200] sm:$0xff] %v1077
        %1176 = vst [vmem:[#allocation2 + $0x208] sm:$0xff] %v1079
        %1177 = vst [vmem:[#allocation2 + $0x210] sm:$0xff] %v761
        %1178 = vst [vmem:[#allocation2 + $0x218] sm:$0xff] %v763
        %1179 = vst [vmem:[#allocation2 + $0x220] sm:$0xff] %v922
        %1180 = vst [vmem:[#allocation2 + $0x228] sm:$0xff] %v924
        %1181 = vst [vmem:[#allocation2 + $0x230] sm:$0xff] %v1083
        %1182 = vst [vmem:[#allocation2 + $0x238] sm:$0xff] %v1085
        %1183 = vst [vmem:[#allocation2 + $0x240] sm:$0xff] %v767
        %1184 = vst [vmem:[#allocation2 + $0x248] sm:$0xff] %v769
        %1185 = vst [vmem:[#allocation2 + $0x250] sm:$0xff] %v928
        %1186 = vst [vmem:[#allocation2 + $0x258] sm:$0xff] %v930
        %1187 = vst [vmem:[#allocation2 + $0x260] sm:$0xff] %v1089
        %1188 = vst [vmem:[#allocation2 + $0x268] sm:$0xff] %v1091
        %1189 = vst [vmem:[#allocation2 + $0x270] sm:$0xff] %v773
        %1190 = vst [vmem:[#allocation2 + $0x278] sm:$0xff] %v775
        %1191 = vst [vmem:[#allocation2 + $0x280] sm:$0xff] %v934
        %1192 = vst [vmem:[#allocation2 + $0x288] sm:$0xff] %v936
        %1193 = vst [vmem:[#allocation2 + $0x290] sm:$0xff] %v1095
        %1194 = vst [vmem:[#allocation2 + $0x298] sm:$0xff] %v1097
        %1195 = vst [vmem:[#allocation2 + $0x2a0] sm:$0xff] %v779
        %1196 = vst [vmem:[#allocation2 + $0x2a8] sm:$0xff] %v781
        %1197 = vst [vmem:[#allocation2 + $0x2b0] sm:$0xff] %v940
        %1198 = vst [vmem:[#allocation2 + $0x2b8] sm:$0xff] %v942
        %1199 = vst [vmem:[#allocation2 + $0x2c0] sm:$0xff] %v1101
        %1200 = vst [vmem:[#allocation2 + $0x2c8] sm:$0xff] %v1103
        %1201 = vst [vmem:[#allocation2 + $0x2d0] sm:$0xff] %v785
        %1202 = vst [vmem:[#allocation2 + $0x2d8] sm:$0xff] %v787
        %1203 = vst [vmem:[#allocation2 + $0x2e0] sm:$0xff] %v946
        %1204 = vst [vmem:[#allocation2 + $0x2e8] sm:$0xff] %v948
        %1205 = vst [vmem:[#allocation2 + $0x2f0] sm:$0xff] %v1107
        %1206 = vst [vmem:[#allocation2 + $0x2f8] sm:$0xff] %v1109
        %v1207 = vld [vmem:[#allocation6] sm:$0xff]
        %v1208 = vld [vmem:[#allocation6 + $0x8] sm:$0xff]
        %v1209 = vld [vmem:[#allocation6 + $0x10] sm:$0xff]
        %v1210 = vld [vmem:[#allocation6 + $0x18] sm:$0xff]
        %v1211 = vld [vmem:[#allocation6 + $0x20] sm:$0xff]
        %v1212 = vld [vmem:[#allocation6 + $0x28] sm:$0xff]
        %v1213 = vld [vmem:[#allocation6 + $0x30] sm:$0xff]
        %v1214 = vld [vmem:[#allocation6 + $0x38] sm:$0xff]
        %v1215 = vld [vmem:[#allocation6 + $0x40] sm:$0xff]
        %v1216 = vld [vmem:[#allocation6 + $0x48] sm:$0xff]
        %v1217 = vld [vmem:[#allocation6 + $0x50] sm:$0xff]
        %v1218 = vld [vmem:[#allocation6 + $0x58] sm:$0xff]
        %v1219 = vld [vmem:[#allocation6 + $0x60] sm:$0xff]
        %v1220 = vld [vmem:[#allocation6 + $0x68] sm:$0xff]
        %v1221 = vld [vmem:[#allocation6 + $0x70] sm:$0xff]
        %v1222 = vld [vmem:[#allocation6 + $0x78] sm:$0xff]
        %v1223 = vld [vmem:[#allocation6 + $0x80] sm:$0xff]
        %v1224 = vld [vmem:[#allocation6 + $0x88] sm:$0xff]
        %v1225 = vld [vmem:[#allocation6 + $0x90] sm:$0xff]
        %v1226 = vld [vmem:[#allocation6 + $0x98] sm:$0xff]
        %v1227 = vld [vmem:[#allocation6 + $0xa0] sm:$0xff]
        %v1228 = vld [vmem:[#allocation6 + $0xa8] sm:$0xff]
        %v1229 = vld [vmem:[#allocation6 + $0xb0] sm:$0xff]
        %v1230 = vld [vmem:[#allocation6 + $0xb8] sm:$0xff]
        %v1231 = vld [vmem:[#allocation6 + $0xc0] sm:$0xff]
        %v1232 = vld [vmem:[#allocation6 + $0xc8] sm:$0xff]
        %v1233 = vld [vmem:[#allocation6 + $0xd0] sm:$0xff]
        %v1234 = vld [vmem:[#allocation6 + $0xd8] sm:$0xff]
        %v1235 = vld [vmem:[#allocation6 + $0xe0] sm:$0xff]
        %v1236 = vld [vmem:[#allocation6 + $0xe8] sm:$0xff]
        %v1237 = vld [vmem:[#allocation6 + $0xf0] sm:$0xff]
        %v1238 = vld [vmem:[#allocation6 + $0xf8] sm:$0xff]
        %v1239 = vld [vmem:[#allocation6 + $0x100] sm:$0xff]
        %v1240 = vld [vmem:[#allocation6 + $0x108] sm:$0xff]
        %v1241 = vld [vmem:[#allocation6 + $0x110] sm:$0xff]
        %v1242 = vld [vmem:[#allocation6 + $0x118] sm:$0xff]
        %v1243 = vld [vmem:[#allocation6 + $0x120] sm:$0xff]
        %v1244 = vld [vmem:[#allocation6 + $0x128] sm:$0xff]
        %v1245 = vld [vmem:[#allocation6 + $0x130] sm:$0xff]
        %v1246 = vld [vmem:[#allocation6 + $0x138] sm:$0xff]
        %v1247 = vld [vmem:[#allocation6 + $0x140] sm:$0xff]
        %v1248 = vld [vmem:[#allocation6 + $0x148] sm:$0xff]
        %v1249 = vld [vmem:[#allocation6 + $0x150] sm:$0xff]
        %v1250 = vld [vmem:[#allocation6 + $0x158] sm:$0xff]
        %v1251 = vld [vmem:[#allocation6 + $0x160] sm:$0xff]
        %v1252 = vld [vmem:[#allocation6 + $0x168] sm:$0xff]
        %v1253 = vld [vmem:[#allocation6 + $0x170] sm:$0xff]
        %v1254 = vld [vmem:[#allocation6 + $0x178] sm:$0xff]
        %s1255 = scalar_lea.vmem [#allocation6], 384
        %v1256 = vld [vmem:[%s1255] sm:$0xff]
        %v1257 = vld [vmem:[%s1255 + $0x8] sm:$0xff]
        %v1258 = vld [vmem:[%s1255 + $0x10] sm:$0xff]
        %v1259 = vld [vmem:[%s1255 + $0x18] sm:$0xff]
        %v1260 = vld [vmem:[%s1255 + $0x20] sm:$0xff]
        %v1261 = vld [vmem:[%s1255 + $0x28] sm:$0xff]
        %v1262 = vld [vmem:[%s1255 + $0x30] sm:$0xff]
        %v1263 = vld [vmem:[%s1255 + $0x38] sm:$0xff]
        %v1264 = vld [vmem:[%s1255 + $0x40] sm:$0xff]
        %v1265 = vld [vmem:[%s1255 + $0x48] sm:$0xff]
        %v1266 = vld [vmem:[%s1255 + $0x50] sm:$0xff]
        %v1267 = vld [vmem:[%s1255 + $0x58] sm:$0xff]
        %v1268 = vld [vmem:[%s1255 + $0x60] sm:$0xff]
        %v1269 = vld [vmem:[%s1255 + $0x68] sm:$0xff]
        %v1270 = vld [vmem:[%s1255 + $0x70] sm:$0xff]
        %v1271 = vld [vmem:[%s1255 + $0x78] sm:$0xff]
        %v1272 = vld [vmem:[%s1255 + $0x80] sm:$0xff]
        %v1273 = vld [vmem:[%s1255 + $0x88] sm:$0xff]
        %v1274 = vld [vmem:[%s1255 + $0x90] sm:$0xff]
        %v1275 = vld [vmem:[%s1255 + $0x98] sm:$0xff]
        %v1276 = vld [vmem:[%s1255 + $0xa0] sm:$0xff]
        %v1277 = vld [vmem:[%s1255 + $0xa8] sm:$0xff]
        %v1278 = vld [vmem:[%s1255 + $0xb0] sm:$0xff]
        %v1279 = vld [vmem:[%s1255 + $0xb8] sm:$0xff]
        %v1280 = vld [vmem:[%s1255 + $0xc0] sm:$0xff]
        %v1281 = vld [vmem:[%s1255 + $0xc8] sm:$0xff]
        %v1282 = vld [vmem:[%s1255 + $0xd0] sm:$0xff]
        %v1283 = vld [vmem:[%s1255 + $0xd8] sm:$0xff]
        %v1284 = vld [vmem:[%s1255 + $0xe0] sm:$0xff]
        %v1285 = vld [vmem:[%s1255 + $0xe8] sm:$0xff]
        %v1286 = vld [vmem:[%s1255 + $0xf0] sm:$0xff]
        %v1287 = vld [vmem:[%s1255 + $0xf8] sm:$0xff]
        %v1288 = vld [vmem:[%s1255 + $0x100] sm:$0xff]
        %v1289 = vld [vmem:[%s1255 + $0x108] sm:$0xff]
        %v1290 = vld [vmem:[%s1255 + $0x110] sm:$0xff]
        %v1291 = vld [vmem:[%s1255 + $0x118] sm:$0xff]
        %v1292 = vld [vmem:[%s1255 + $0x120] sm:$0xff]
        %v1293 = vld [vmem:[%s1255 + $0x128] sm:$0xff]
        %v1294 = vld [vmem:[%s1255 + $0x130] sm:$0xff]
        %v1295 = vld [vmem:[%s1255 + $0x138] sm:$0xff]
        %v1296 = vld [vmem:[%s1255 + $0x140] sm:$0xff]
        %v1297 = vld [vmem:[%s1255 + $0x148] sm:$0xff]
        %v1298 = vld [vmem:[%s1255 + $0x150] sm:$0xff]
        %v1299 = vld [vmem:[%s1255 + $0x158] sm:$0xff]
        %v1300 = vld [vmem:[%s1255 + $0x160] sm:$0xff]
        %v1301 = vld [vmem:[%s1255 + $0x168] sm:$0xff]
        %v1302 = vld [vmem:[%s1255 + $0x170] sm:$0xff]
        %v1303 = vld [vmem:[%s1255 + $0x178] sm:$0xff]
        %v1304 = vld [vmem:[%s4] sm:$0x1]
        %s1305 = scalar_lea.vmem %s4, 1
        %v1306 = vld [vmem:[%s1305] sm:$0x1]
        loop: start=0, step=1, limit=16
        $region111: #{tpu_custom_call.1} parent=97 // loop_pre_header
          _
        $region112: #{tpu_custom_call.1} parent=97 // loop_header
          %s1308 = sphi 0, %s1312
          %p1309 = scmp.ge.s32.totalorder %s1308, 16
          %v1313 = vphi 0.0, %v1639
          %v1314 = vphi 0.0, %v1663
        $region113: #{tpu_custom_call.1} parent=97 // loop_header_branch
          %1311 = sbr.rel (%p1309) target = $region117
        $region114: #{tpu_custom_call.1} parent=97 // loop_body
          %s1315 = smul.u32 %s1308, 8
          %s1316 = ssub.s32 15, %s1308
          %s1317 = smul.u32 %s1316, 8
          %s1318 = sshra.s32 %s1315, 3
          %s1319 = sand.u32 %s1315, 7
          %s1320 = smul.u32 %s1318, 6
          %s1321 = smul.addr %s1320, 8
          %s1322 = scalar_lea.vmem [#allocation2], %s1321
          %v1323 = vld [vmem:[%s1322] sm:$0xff]
          %v1324 = vld [vmem:[%s1322 + $0x8] sm:$0xff]
          %v1325 = vld [vmem:[%s1322 + $0x10] sm:$0xff]
          %s1326 = sshra.s32 %s1317, 3
          %s1327 = sand.u32 %s1317, 7
          %s1328 = smul.u32 %s1326, 6
          %s1329 = smul.addr %s1328, 8
          %s1330 = scalar_lea.vmem [#allocation2], %s1329
          %v1331 = vld [vmem:[%s1330 + $0x18] sm:$0xff]
          %v1332 = vld [vmem:[%s1330 + $0x20] sm:$0xff]
          %v1333 = vld [vmem:[%s1330 + $0x28] sm:$0xff]
          %1334 = vmatprep.subr.mxu0 %v1208
          %1335 = vmatpush1.msra.mxu0 %v1207
          %1336 = vmatprep.subr.mxu0 %v1211
          %1337 = vmatpush1.msra.mxu0 %v1210
          %1338 = vmatprep.subr.mxu0 %v1214
          %1339 = vmatpush1.msra.mxu0 %v1213
          %1340 = vmatprep.subr.mxu0 %v1217
          %1341 = vmatpush1.msra.mxu0 %v1216
          %1342 = vmatprep.subr.mxu0 %v1220
          %1343 = vmatpush1.msra.mxu0 %v1219
          %1344 = vmatprep.subr.mxu0 %v1223
          %1345 = vmatpush1.msra.mxu0 %v1222
          %1346 = vmatprep.subr.mxu0 %v1226
          %1347 = vmatpush1.msra.mxu0 %v1225
          %1348 = vmatprep.subr.mxu0 %v1229
          %1349 = vmatpush1.msra.mxu0 %v1228
          %1350 = vmatprep.subr.mxu0 %v1232
          %1351 = vmatpush1.msra.mxu0 %v1231
          %1352 = vmatprep.subr.mxu0 %v1235
          %1353 = vmatpush1.msra.mxu0 %v1234
          %1354 = vmatprep.subr.mxu0 %v1238
          %1355 = vmatpush1.msra.mxu0 %v1237
          %1356 = vmatprep.subr.mxu0 %v1241
          %1357 = vmatpush1.msra.mxu0 %v1240
          %1358 = vmatprep.subr.mxu0 %v1244
          %1359 = vmatpush1.msra.mxu0 %v1243
          %1360 = vmatprep.subr.mxu0 %v1247
          %1361 = vmatpush1.msra.mxu0 %v1246
          %1362 = vmatprep.subr.mxu0 %v1250
          %1363 = vmatpush1.msra.mxu0 %v1249
          %1364 = vmatprep.subr.mxu0 %v1253
          %1365 = vmatpush1.msra.mxu0 %v1252
          %1366 = vmatprep.subr.mxu0 0.0
          %1367 = vmatpush1.msra.mxu0 0.0
          %1368 = vmatprep.subr.mxu0 0.0
          %1369 = vmatpush1.msra.mxu0 0.0
          %1370 = vmatprep.subr.mxu0 0.0
          %1371 = vmatpush1.msra.mxu0 0.0
          %1372 = vmatprep.subr.mxu0 0.0
          %1373 = vmatpush1.msra.mxu0 0.0
          %1374 = vmatprep.subr.mxu0 0.0
          %1375 = vmatpush1.msra.mxu0 0.0
          %1376 = vmatprep.subr.mxu0 0.0
          %1377 = vmatpush1.msra.mxu0 0.0
          %1378 = vmatprep.subr.mxu0 0.0
          %1379 = vmatpush1.msra.mxu0 0.0
          %1380 = vmatprep.subr.mxu0 0.0
          %1381 = vmatpush1.msra.mxu0 0.0
          %1382 = vmatprep.subr.mxu0 0.0
          %1383 = vmatpush1.msra.mxu0 0.0
          %1384 = vmatprep.subr.mxu0 0.0
          %1385 = vmatpush1.msra.mxu0 0.0
          %1386 = vmatprep.subr.mxu0 0.0
          %1387 = vmatpush1.msra.mxu0 0.0
          %1388 = vmatprep.subr.mxu0 0.0
          %1389 = vmatpush1.msra.mxu0 0.0
          %1390 = vmatprep.subr.mxu0 0.0
          %1391 = vmatpush1.msra.mxu0 0.0
          %1392 = vmatprep.subr.mxu0 0.0
          %1393 = vmatpush1.msra.mxu0 0.0
          %1394 = vmatprep.subr.mxu0 0.0
          %1395 = vmatpush1.msra.mxu0 0.0
          %1396 = vmatprep.subr.mxu0 0.0
          %1397 = vmatpush1.msra.mxu0 0.0
          %1398 = vmatprep.mubr.f32.mxu0 0.0
          %1399 = vmatmul.mubr.f32.gmra.mrb[0].mxu0 %v1313
          %v1400 = vpop.f32.mrb[0].mxu0
          %v1401 = vadd.f32 0.0, %v1400
          %v1402 = vpop.f32.mrb[0].mxu0
          %v1403 = vadd.f32 0.0, %v1402
          %1404 = vdwg.mxu0
          %1405 = vmatprep.subr.mxu0 0.0
          %1406 = vmatpush1.msra.mxu0 %v1209
          %1407 = vmatprep.subr.mxu0 0.0
          %1408 = vmatpush1.msra.mxu0 %v1212
          %1409 = vmatprep.subr.mxu0 0.0
          %1410 = vmatpush1.msra.mxu0 %v1215
          %1411 = vmatprep.subr.mxu0 0.0
          %1412 = vmatpush1.msra.mxu0 %v1218
          %1413 = vmatprep.subr.mxu0 0.0
          %1414 = vmatpush1.msra.mxu0 %v1221
          %1415 = vmatprep.subr.mxu0 0.0
          %1416 = vmatpush1.msra.mxu0 %v1224
          %1417 = vmatprep.subr.mxu0 0.0
          %1418 = vmatpush1.msra.mxu0 %v1227
          %1419 = vmatprep.subr.mxu0 0.0
          %1420 = vmatpush1.msra.mxu0 %v1230
          %1421 = vmatprep.subr.mxu0 0.0
          %1422 = vmatpush1.msra.mxu0 %v1233
          %1423 = vmatprep.subr.mxu0 0.0
          %1424 = vmatpush1.msra.mxu0 %v1236
          %1425 = vmatprep.subr.mxu0 0.0
          %1426 = vmatpush1.msra.mxu0 %v1239
          %1427 = vmatprep.subr.mxu0 0.0
          %1428 = vmatpush1.msra.mxu0 %v1242
          %1429 = vmatprep.subr.mxu0 0.0
          %1430 = vmatpush1.msra.mxu0 %v1245
          %1431 = vmatprep.subr.mxu0 0.0
          %1432 = vmatpush1.msra.mxu0 %v1248
          %1433 = vmatprep.subr.mxu0 0.0
          %1434 = vmatpush1.msra.mxu0 %v1251
          %1435 = vmatprep.subr.mxu0 0.0
          %1436 = vmatpush1.msra.mxu0 %v1254
          %1437 = vmatprep.subr.mxu0 0.0
          %1438 = vmatpush1.msra.mxu0 0.0
          %1439 = vmatprep.subr.mxu0 0.0
          %1440 = vmatpush1.msra.mxu0 0.0
          %1441 = vmatprep.subr.mxu0 0.0
          %1442 = vmatpush1.msra.mxu0 0.0
          %1443 = vmatprep.subr.mxu0 0.0
          %1444 = vmatpush1.msra.mxu0 0.0
          %1445 = vmatprep.subr.mxu0 0.0
          %1446 = vmatpush1.msra.mxu0 0.0
          %1447 = vmatprep.subr.mxu0 0.0
          %1448 = vmatpush1.msra.mxu0 0.0
          %1449 = vmatprep.subr.mxu0 0.0
          %1450 = vmatpush1.msra.mxu0 0.0
          %1451 = vmatprep.subr.mxu0 0.0
          %1452 = vmatpush1.msra.mxu0 0.0
          %1453 = vmatprep.subr.mxu0 0.0
          %1454 = vmatpush1.msra.mxu0 0.0
          %1455 = vmatprep.subr.mxu0 0.0
          %1456 = vmatpush1.msra.mxu0 0.0
          %1457 = vmatprep.subr.mxu0 0.0
          %1458 = vmatpush1.msra.mxu0 0.0
          %1459 = vmatprep.subr.mxu0 0.0
          %1460 = vmatpush1.msra.mxu0 0.0
          %1461 = vmatprep.subr.mxu0 0.0
          %1462 = vmatpush1.msra.mxu0 0.0
          %1463 = vmatprep.subr.mxu0 0.0
          %1464 = vmatpush1.msra.mxu0 0.0
          %1465 = vmatprep.subr.mxu0 0.0
          %1466 = vmatpush1.msra.mxu0 0.0
          %1467 = vmatprep.subr.mxu0 0.0
          %1468 = vmatpush1.msra.mxu0 0.0
          %1469 = vmatprep.mubr.f32.mxu0 0.0
          %1470 = vmatmul.mubr.f32.gmra.mrb[0].mxu0 %v1313
          %v1471 = vpop.f32.mrb[0].mxu0
          %v1472 = vadd.f32 0.0, %v1471
          %v1473 = vpop.f32.mrb[0].mxu0
          %1474 = vdwg.mxu0
          %1475 = vmatprep.subr.mxu0 %v1257
          %1476 = vmatpush1.msra.mxu0 %v1256
          %1477 = vmatprep.subr.mxu0 %v1260
          %1478 = vmatpush1.msra.mxu0 %v1259
          %1479 = vmatprep.subr.mxu0 %v1263
          %1480 = vmatpush1.msra.mxu0 %v1262
          %1481 = vmatprep.subr.mxu0 %v1266
          %1482 = vmatpush1.msra.mxu0 %v1265
          %1483 = vmatprep.subr.mxu0 %v1269
          %1484 = vmatpush1.msra.mxu0 %v1268
          %1485 = vmatprep.subr.mxu0 %v1272
          %1486 = vmatpush1.msra.mxu0 %v1271
          %1487 = vmatprep.subr.mxu0 %v1275
          %1488 = vmatpush1.msra.mxu0 %v1274
          %1489 = vmatprep.subr.mxu0 %v1278
          %1490 = vmatpush1.msra.mxu0 %v1277
          %1491 = vmatprep.subr.mxu0 %v1281
          %1492 = vmatpush1.msra.mxu0 %v1280
          %1493 = vmatprep.subr.mxu0 %v1284
          %1494 = vmatpush1.msra.mxu0 %v1283
          %1495 = vmatprep.subr.mxu0 %v1287
          %1496 = vmatpush1.msra.mxu0 %v1286
          %1497 = vmatprep.subr.mxu0 %v1290
          %1498 = vmatpush1.msra.mxu0 %v1289
          %1499 = vmatprep.subr.mxu0 %v1293
          %1500 = vmatpush1.msra.mxu0 %v1292
          %1501 = vmatprep.subr.mxu0 %v1296
          %1502 = vmatpush1.msra.mxu0 %v1295
          %1503 = vmatprep.subr.mxu0 %v1299
          %1504 = vmatpush1.msra.mxu0 %v1298
          %1505 = vmatprep.subr.mxu0 %v1302
          %1506 = vmatpush1.msra.mxu0 %v1301
          %1507 = vmatprep.subr.mxu0 0.0
          %1508 = vmatpush1.msra.mxu0 0.0
          %1509 = vmatprep.subr.mxu0 0.0
          %1510 = vmatpush1.msra.mxu0 0.0
          %1511 = vmatprep.subr.mxu0 0.0
          %1512 = vmatpush1.msra.mxu0 0.0
          %1513 = vmatprep.subr.mxu0 0.0
          %1514 = vmatpush1.msra.mxu0 0.0
          %1515 = vmatprep.subr.mxu0 0.0
          %1516 = vmatpush1.msra.mxu0 0.0
          %1517 = vmatprep.subr.mxu0 0.0
          %1518 = vmatpush1.msra.mxu0 0.0
          %1519 = vmatprep.subr.mxu0 0.0
          %1520 = vmatpush1.msra.mxu0 0.0
          %1521 = vmatprep.subr.mxu0 0.0
          %1522 = vmatpush1.msra.mxu0 0.0
          %1523 = vmatprep.subr.mxu0 0.0
          %1524 = vmatpush1.msra.mxu0 0.0
          %1525 = vmatprep.subr.mxu0 0.0
          %1526 = vmatpush1.msra.mxu0 0.0
          %1527 = vmatprep.subr.mxu0 0.0
          %1528 = vmatpush1.msra.mxu0 0.0
          %1529 = vmatprep.subr.mxu0 0.0
          %1530 = vmatpush1.msra.mxu0 0.0
          %1531 = vmatprep.subr.mxu0 0.0
          %1532 = vmatpush1.msra.mxu0 0.0
          %1533 = vmatprep.subr.mxu0 0.0
          %1534 = vmatpush1.msra.mxu0 0.0
          %1535 = vmatprep.subr.mxu0 0.0
          %1536 = vmatpush1.msra.mxu0 0.0
          %1537 = vmatprep.subr.mxu0 0.0
          %1538 = vmatpush1.msra.mxu0 0.0
          %1539 = vmatprep.mubr.f32.mxu0 0.0
          %1540 = vmatmul.mubr.f32.gmra.mrb[0].mxu0 %v1314
          %v1541 = vpop.f32.mrb[0].mxu0
          %v1542 = vadd.f32 0.0, %v1541
          %v1543 = vpop.f32.mrb[0].mxu0
          %v1544 = vadd.f32 0.0, %v1543
          %1545 = vdwg.mxu0
          %1546 = vmatprep.subr.mxu0 0.0
          %1547 = vmatpush1.msra.mxu0 %v1258
          %1548 = vmatprep.subr.mxu0 0.0
          %1549 = vmatpush1.msra.mxu0 %v1261
          %1550 = vmatprep.subr.mxu0 0.0
          %1551 = vmatpush1.msra.mxu0 %v1264
          %1552 = vmatprep.subr.mxu0 0.0
          %1553 = vmatpush1.msra.mxu0 %v1267
          %1554 = vmatprep.subr.mxu0 0.0
          %1555 = vmatpush1.msra.mxu0 %v1270
          %1556 = vmatprep.subr.mxu0 0.0
          %1557 = vmatpush1.msra.mxu0 %v1273
          %1558 = vmatprep.subr.mxu0 0.0
          %1559 = vmatpush1.msra.mxu0 %v1276
          %1560 = vmatprep.subr.mxu0 0.0
          %1561 = vmatpush1.msra.mxu0 %v1279
          %1562 = vmatprep.subr.mxu0 0.0
          %1563 = vmatpush1.msra.mxu0 %v1282
          %1564 = vmatprep.subr.mxu0 0.0
          %1565 = vmatpush1.msra.mxu0 %v1285
          %1566 = vmatprep.subr.mxu0 0.0
          %1567 = vmatpush1.msra.mxu0 %v1288
          %1568 = vmatprep.subr.mxu0 0.0
          %1569 = vmatpush1.msra.mxu0 %v1291
          %1570 = vmatprep.subr.mxu0 0.0
          %1571 = vmatpush1.msra.mxu0 %v1294
          %1572 = vmatprep.subr.mxu0 0.0
          %1573 = vmatpush1.msra.mxu0 %v1297
          %1574 = vmatprep.subr.mxu0 0.0
          %1575 = vmatpush1.msra.mxu0 %v1300
          %1576 = vmatprep.subr.mxu0 0.0
          %1577 = vmatpush1.msra.mxu0 %v1303
          %1578 = vmatprep.subr.mxu0 0.0
          %1579 = vmatpush1.msra.mxu0 0.0
          %1580 = vmatprep.subr.mxu0 0.0
          %1581 = vmatpush1.msra.mxu0 0.0
          %1582 = vmatprep.subr.mxu0 0.0
          %1583 = vmatpush1.msra.mxu0 0.0
          %1584 = vmatprep.subr.mxu0 0.0
          %1585 = vmatpush1.msra.mxu0 0.0
          %1586 = vmatprep.subr.mxu0 0.0
          %1587 = vmatpush1.msra.mxu0 0.0
          %1588 = vmatprep.subr.mxu0 0.0
          %1589 = vmatpush1.msra.mxu0 0.0
          %1590 = vmatprep.subr.mxu0 0.0
          %1591 = vmatpush1.msra.mxu0 0.0
          %1592 = vmatprep.subr.mxu0 0.0
          %1593 = vmatpush1.msra.mxu0 0.0
          %1594 = vmatprep.subr.mxu0 0.0
          %1595 = vmatpush1.msra.mxu0 0.0
          %1596 = vmatprep.subr.mxu0 0.0
          %1597 = vmatpush1.msra.mxu0 0.0
          %1598 = vmatprep.subr.mxu0 0.0
          %1599 = vmatpush1.msra.mxu0 0.0
          %1600 = vmatprep.subr.mxu0 0.0
          %1601 = vmatpush1.msra.mxu0 0.0
          %1602 = vmatprep.subr.mxu0 0.0
          %1603 = vmatpush1.msra.mxu0 0.0
          %1604 = vmatprep.subr.mxu0 0.0
          %1605 = vmatpush1.msra.mxu0 0.0
          %1606 = vmatprep.subr.mxu0 0.0
          %1607 = vmatpush1.msra.mxu0 0.0
          %1608 = vmatprep.subr.mxu0 0.0
          %1609 = vmatpush1.msra.mxu0 0.0
          %1610 = vmatprep.mubr.f32.mxu0 0.0
          %1611 = vmatmul.mubr.f32.gmra.mrb[0].mxu0 %v1314
          %v1612 = vpop.f32.mrb[0].mxu0
          %v1613 = vadd.f32 0.0, %v1612
          %v1614 = vpop.f32.mrb[0].mxu0
          %1615 = vdwg.mxu0
          %v1616 = vadd.f32 %v1323, %v1401
          %v1617 = vadd.f32 %v1324, %v1403
          %v1618 = vmul.f32 %v1616, 0.5
          %v1619 = vmul.f32 %v1617, 0.5
          %v1620 = vtanh.pop %v1618
          %v1621 = vtanh.pop %v1619
          %v1622 = vadd.f32 %v1620, 1.0
          %v1623 = vadd.f32 %v1621, 1.0
          %v1624 = vmul.f32 %v1622, 0.5
          %v1625 = vmul.f32 %v1623, 0.5
          %v1627 = vlaneseq
          %v1628 = vshrl.u32 %v1627, 7
          %v1629 = vsub.s32 0, %v1628
          %v1630 = vrot.slane %v1304, %v1629
          %v1632 = vadd.f32 %v1472, %v1630
          %v1633 = vmul.f32 %v1624, %v1632
          %v1634 = vadd.f32 %v1325, %v1633
          %v1635 = vtanh.pop %v1634
          %v1636 = vsub.f32 1.0, %v1625
          %v1637 = vmul.f32 %v1636, %v1635
          %v1638 = vmul.f32 %v1625, %v1313
          %v1639 = vadd.f32 %v1637, %v1638
          %v1640 = vadd.f32 %v1331, %v1542
          %v1641 = vadd.f32 %v1332, %v1544
          %v1642 = vmul.f32 %v1640, 0.5
          %v1643 = vmul.f32 %v1641, 0.5
          %v1644 = vtanh.pop %v1642
          %v1645 = vtanh.pop %v1643
          %v1646 = vadd.f32 %v1644, 1.0
          %v1647 = vadd.f32 %v1645, 1.0
          %v1648 = vmul.f32 %v1646, 0.5
          %v1649 = vmul.f32 %v1647, 0.5
          %v1651 = vlaneseq
          %v1652 = vshrl.u32 %v1651, 7
          %v1653 = vsub.s32 0, %v1652
          %v1654 = vrot.slane %v1306, %v1653
          %v1656 = vadd.f32 %v1613, %v1654
          %v1657 = vmul.f32 %v1648, %v1656
          %v1658 = vadd.f32 %v1333, %v1657
          %v1659 = vtanh.pop %v1658
          %v1660 = vsub.f32 1.0, %v1649
          %v1661 = vmul.f32 %v1660, %v1659
          %v1662 = vmul.f32 %v1649, %v1314
          %v1663 = vadd.f32 %v1661, %v1662
          %s1664 = smul.u32 %s1318, 2
          %s1665 = smul.addr %s1664, 8
          %s1666 = scalar_lea.vmem [#allocation3], %s1665
          %1667 = vst [vmem:[%s1666] sm:$0xff] %v1639
          %s1668 = smul.u32 %s1326, 2
          %s1669 = smul.addr %s1668, 8
          %s1670 = scalar_lea.vmem [#allocation3], %s1669
          %1671 = vst [vmem:[%s1670 + $0x8] sm:$0xff] %v1663
        $region115: #{tpu_custom_call.1} parent=97 // loop_footer
          %s1312 = sadd.s32 1, %s1308
        $region116: #{tpu_custom_call.1} parent=97 // loop_footer_branch
          %1307 = sbr.rel target = $region112
        $region117: #{tpu_custom_call.1} parent=97 // loop_exit
          _
        %v1672 = vld [vmem:[#allocation3] sm:$0xff]
        %v1673 = vld [vmem:[#allocation3 + $0x8] sm:$0xff]
        %v1674 = vld [vmem:[#allocation3 + $0x10] sm:$0xff]
        %v1675 = vld [vmem:[#allocation3 + $0x18] sm:$0xff]
        %v1676 = vld [vmem:[#allocation3 + $0x20] sm:$0xff]
        %v1677 = vld [vmem:[#allocation3 + $0x28] sm:$0xff]
        %v1678 = vld [vmem:[#allocation3 + $0x30] sm:$0xff]
        %v1679 = vld [vmem:[#allocation3 + $0x38] sm:$0xff]
        %v1680 = vld [vmem:[#allocation3 + $0x40] sm:$0xff]
        %v1681 = vld [vmem:[#allocation3 + $0x48] sm:$0xff]
        %v1682 = vld [vmem:[#allocation3 + $0x50] sm:$0xff]
        %v1683 = vld [vmem:[#allocation3 + $0x58] sm:$0xff]
        %v1684 = vld [vmem:[#allocation3 + $0x60] sm:$0xff]
        %v1685 = vld [vmem:[#allocation3 + $0x68] sm:$0xff]
        %v1686 = vld [vmem:[#allocation3 + $0x70] sm:$0xff]
        %v1687 = vld [vmem:[#allocation3 + $0x78] sm:$0xff]
        %v1688 = vld [vmem:[#allocation3 + $0x80] sm:$0xff]
        %v1689 = vld [vmem:[#allocation3 + $0x88] sm:$0xff]
        %v1690 = vld [vmem:[#allocation3 + $0x90] sm:$0xff]
        %v1691 = vld [vmem:[#allocation3 + $0x98] sm:$0xff]
        %v1692 = vld [vmem:[#allocation3 + $0xa0] sm:$0xff]
        %v1693 = vld [vmem:[#allocation3 + $0xa8] sm:$0xff]
        %v1694 = vld [vmem:[#allocation3 + $0xb0] sm:$0xff]
        %v1695 = vld [vmem:[#allocation3 + $0xb8] sm:$0xff]
        %v1696 = vld [vmem:[#allocation3 + $0xc0] sm:$0xff]
        %v1697 = vld [vmem:[#allocation3 + $0xc8] sm:$0xff]
        %v1698 = vld [vmem:[#allocation3 + $0xd0] sm:$0xff]
        %v1699 = vld [vmem:[#allocation3 + $0xd8] sm:$0xff]
        %v1700 = vld [vmem:[#allocation3 + $0xe0] sm:$0xff]
        %v1701 = vld [vmem:[#allocation3 + $0xe8] sm:$0xff]
        %v1702 = vld [vmem:[#allocation3 + $0xf0] sm:$0xff]
        %v1703 = vld [vmem:[#allocation3 + $0xf8] sm:$0xff]
        %v1704 = vld [vmem:[#allocation8] sm:$0xff]
        %v1705 = vld [vmem:[#allocation8 + $0x8] sm:$0xff]
        %v1706 = vld [vmem:[#allocation8 + $0x10] sm:$0xff]
        %v1707 = vld [vmem:[#allocation8 + $0x18] sm:$0xff]
        %v1708 = vld [vmem:[#allocation8 + $0x20] sm:$0xff]
        %v1709 = vld [vmem:[#allocation8 + $0x28] sm:$0xff]
        %v1710 = vld [vmem:[#allocation8 + $0x30] sm:$0xff]
        %v1711 = vld [vmem:[#allocation8 + $0x38] sm:$0xff]
        %v1712 = vld [vmem:[#allocation8 + $0x40] sm:$0xff]
        %v1713 = vld [vmem:[#allocation8 + $0x48] sm:$0xff]
        %v1714 = vld [vmem:[#allocation8 + $0x50] sm:$0xff]
        %v1715 = vld [vmem:[#allocation8 + $0x58] sm:$0xff]
        %v1716 = vld [vmem:[#allocation8 + $0x60] sm:$0xff]
        %v1717 = vld [vmem:[#allocation8 + $0x68] sm:$0xff]
        %v1718 = vld [vmem:[#allocation8 + $0x70] sm:$0xff]
        %v1719 = vld [vmem:[#allocation8 + $0x78] sm:$0xff]
        %v1720 = vld [vmem:[#allocation8 + $0x80] sm:$0xff]
        %v1721 = vld [vmem:[#allocation8 + $0x88] sm:$0xff]
        %v1722 = vld [vmem:[#allocation8 + $0x90] sm:$0xff]
        %v1723 = vld [vmem:[#allocation8 + $0x98] sm:$0xff]
        %v1724 = vld [vmem:[#allocation8 + $0xa0] sm:$0xff]
        %v1725 = vld [vmem:[#allocation8 + $0xa8] sm:$0xff]
        %v1726 = vld [vmem:[#allocation8 + $0xb0] sm:$0xff]
        %v1727 = vld [vmem:[#allocation8 + $0xb8] sm:$0xff]
        %v1728 = vld [vmem:[#allocation8 + $0xc0] sm:$0xff]
        %v1729 = vld [vmem:[#allocation8 + $0xc8] sm:$0xff]
        %v1730 = vld [vmem:[#allocation8 + $0xd0] sm:$0xff]
        %v1731 = vld [vmem:[#allocation8 + $0xd8] sm:$0xff]
        %v1732 = vld [vmem:[#allocation8 + $0xe0] sm:$0xff]
        %v1733 = vld [vmem:[#allocation8 + $0xe8] sm:$0xff]
        %v1734 = vld [vmem:[#allocation8 + $0xf0] sm:$0xff]
        %v1735 = vld [vmem:[#allocation8 + $0xf8] sm:$0xff]
        %v1736 = vld [vmem:[#allocation8 + $0x100] sm:$0xff]
        %v1737 = vld [vmem:[#allocation8 + $0x108] sm:$0xff]
        %v1738 = vld [vmem:[#allocation8 + $0x110] sm:$0xff]
        %v1739 = vld [vmem:[#allocation8 + $0x118] sm:$0xff]
        %v1740 = vld [vmem:[#allocation8 + $0x120] sm:$0xff]
        %v1741 = vld [vmem:[#allocation8 + $0x128] sm:$0xff]
        %v1742 = vld [vmem:[#allocation8 + $0x130] sm:$0xff]
        %v1743 = vld [vmem:[#allocation8 + $0x138] sm:$0xff]
        %v1744 = vld [vmem:[#allocation8 + $0x140] sm:$0xff]
        %v1745 = vld [vmem:[#allocation8 + $0x148] sm:$0xff]
        %v1746 = vld [vmem:[#allocation8 + $0x150] sm:$0xff]
        %v1747 = vld [vmem:[#allocation8 + $0x158] sm:$0xff]
        %v1748 = vld [vmem:[#allocation8 + $0x160] sm:$0xff]
        %v1749 = vld [vmem:[#allocation8 + $0x168] sm:$0xff]
        %v1750 = vld [vmem:[#allocation8 + $0x170] sm:$0xff]
        %v1751 = vld [vmem:[#allocation8 + $0x178] sm:$0xff]
        %v1752 = vld [vmem:[#allocation8 + $0x180] sm:$0xff]
        %v1753 = vld [vmem:[#allocation8 + $0x188] sm:$0xff]
        %v1754 = vld [vmem:[#allocation8 + $0x190] sm:$0xff]
        %v1755 = vld [vmem:[#allocation8 + $0x198] sm:$0xff]
        %v1756 = vld [vmem:[#allocation8 + $0x1a0] sm:$0xff]
        %v1757 = vld [vmem:[#allocation8 + $0x1a8] sm:$0xff]
        %v1758 = vld [vmem:[#allocation8 + $0x1b0] sm:$0xff]
        %v1759 = vld [vmem:[#allocation8 + $0x1b8] sm:$0xff]
        %v1760 = vld [vmem:[#allocation8 + $0x1c0] sm:$0xff]
        %v1761 = vld [vmem:[#allocation8 + $0x1c8] sm:$0xff]
        %v1762 = vld [vmem:[#allocation8 + $0x1d0] sm:$0xff]
        %v1763 = vld [vmem:[#allocation8 + $0x1d8] sm:$0xff]
        %v1764 = vld [vmem:[#allocation8 + $0x1e0] sm:$0xff]
        %v1765 = vld [vmem:[#allocation8 + $0x1e8] sm:$0xff]
        %v1766 = vld [vmem:[#allocation8 + $0x1f0] sm:$0xff]
        %v1767 = vld [vmem:[#allocation8 + $0x1f8] sm:$0xff]
        %v1768 = vld [vmem:[#allocation8 + $0x200] sm:$0xff]
        %v1769 = vld [vmem:[#allocation8 + $0x208] sm:$0xff]
        %v1770 = vld [vmem:[#allocation8 + $0x210] sm:$0xff]
        %v1771 = vld [vmem:[#allocation8 + $0x218] sm:$0xff]
        %v1772 = vld [vmem:[#allocation8 + $0x220] sm:$0xff]
        %v1773 = vld [vmem:[#allocation8 + $0x228] sm:$0xff]
        %v1774 = vld [vmem:[#allocation8 + $0x230] sm:$0xff]
        %v1775 = vld [vmem:[#allocation8 + $0x238] sm:$0xff]
        %v1776 = vld [vmem:[#allocation8 + $0x240] sm:$0xff]
        %v1777 = vld [vmem:[#allocation8 + $0x248] sm:$0xff]
        %v1778 = vld [vmem:[#allocation8 + $0x250] sm:$0xff]
        %v1779 = vld [vmem:[#allocation8 + $0x258] sm:$0xff]
        %v1780 = vld [vmem:[#allocation8 + $0x260] sm:$0xff]
        %v1781 = vld [vmem:[#allocation8 + $0x268] sm:$0xff]
        %v1782 = vld [vmem:[#allocation8 + $0x270] sm:$0xff]
        %v1783 = vld [vmem:[#allocation8 + $0x278] sm:$0xff]
        %v1784 = vld [vmem:[#allocation8 + $0x280] sm:$0xff]
        %v1785 = vld [vmem:[#allocation8 + $0x288] sm:$0xff]
        %v1786 = vld [vmem:[#allocation8 + $0x290] sm:$0xff]
        %v1787 = vld [vmem:[#allocation8 + $0x298] sm:$0xff]
        %v1788 = vld [vmem:[#allocation8 + $0x2a0] sm:$0xff]
        %v1789 = vld [vmem:[#allocation8 + $0x2a8] sm:$0xff]
        %v1790 = vld [vmem:[#allocation8 + $0x2b0] sm:$0xff]
        %v1791 = vld [vmem:[#allocation8 + $0x2b8] sm:$0xff]
        %v1792 = vld [vmem:[#allocation8 + $0x2c0] sm:$0xff]
        %v1793 = vld [vmem:[#allocation8 + $0x2c8] sm:$0xff]
        %v1794 = vld [vmem:[#allocation8 + $0x2d0] sm:$0xff]
        %v1795 = vld [vmem:[#allocation8 + $0x2d8] sm:$0xff]
        %v1796 = vld [vmem:[#allocation8 + $0x2e0] sm:$0xff]
        %v1797 = vld [vmem:[#allocation8 + $0x2e8] sm:$0xff]
        %v1798 = vld [vmem:[#allocation8 + $0x2f0] sm:$0xff]
        %v1799 = vld [vmem:[#allocation8 + $0x2f8] sm:$0xff]
        %v1800 = vld [vmem:[%s6] sm:$0x7]
        %v1802 = vlaneseq
        %v1803 = vshrl.u32 %v1802, 7
        %v1804 = vsub.s32 0, %v1803
        %v1805 = vrot.slane %v1800, %v1804
        %v1806 = vlaneseq
        %v1807 = vshrl.u32 %v1806, 7
        %v1808 = vsub.s32 1, %v1807
        %v1809 = vrot.slane %v1800, %v1808
        %v1810 = vlaneseq
        %v1811 = vshrl.u32 %v1810, 7
        %v1812 = vsub.s32 2, %v1811
        %v1813 = vrot.slane %v1800, %v1812
        %1817 = vmatprep.subr.mxu0 %v1705
        %1818 = vmatpush1.msra.mxu0 %v1704
        %1819 = vmatprep.subr.mxu0 %v1708
        %1820 = vmatpush1.msra.mxu0 %v1707
        %1821 = vmatprep.subr.mxu0 %v1711
        %1822 = vmatpush1.msra.mxu0 %v1710
        %1823 = vmatprep.subr.mxu0 %v1714
        %1824 = vmatpush1.msra.mxu0 %v1713
        %1825 = vmatprep.subr.mxu0 %v1717
        %1826 = vmatpush1.msra.mxu0 %v1716
        %1827 = vmatprep.subr.mxu0 %v1720
        %1828 = vmatpush1.msra.mxu0 %v1719
        %1829 = vmatprep.subr.mxu0 %v1723
        %1830 = vmatpush1.msra.mxu0 %v1722
        %1831 = vmatprep.subr.mxu0 %v1726
        %1832 = vmatpush1.msra.mxu0 %v1725
        %1833 = vmatprep.subr.mxu0 %v1729
        %1834 = vmatpush1.msra.mxu0 %v1728
        %1835 = vmatprep.subr.mxu0 %v1732
        %1836 = vmatpush1.msra.mxu0 %v1731
        %1837 = vmatprep.subr.mxu0 %v1735
        %1838 = vmatpush1.msra.mxu0 %v1734
        %1839 = vmatprep.subr.mxu0 %v1738
        %1840 = vmatpush1.msra.mxu0 %v1737
        %1841 = vmatprep.subr.mxu0 %v1741
        %1842 = vmatpush1.msra.mxu0 %v1740
        %1843 = vmatprep.subr.mxu0 %v1744
        %1844 = vmatpush1.msra.mxu0 %v1743
        %1845 = vmatprep.subr.mxu0 %v1747
        %1846 = vmatpush1.msra.mxu0 %v1746
        %1847 = vmatprep.subr.mxu0 %v1750
        %1848 = vmatpush1.msra.mxu0 %v1749
        %1849 = vmatprep.subr.mxu0 %v1753
        %1850 = vmatpush1.msra.mxu0 %v1752
        %1851 = vmatprep.subr.mxu0 %v1756
        %1852 = vmatpush1.msra.mxu0 %v1755
        %1853 = vmatprep.subr.mxu0 %v1759
        %1854 = vmatpush1.msra.mxu0 %v1758
        %1855 = vmatprep.subr.mxu0 %v1762
        %1856 = vmatpush1.msra.mxu0 %v1761
        %1857 = vmatprep.subr.mxu0 %v1765
        %1858 = vmatpush1.msra.mxu0 %v1764
        %1859 = vmatprep.subr.mxu0 %v1768
        %1860 = vmatpush1.msra.mxu0 %v1767
        %1861 = vmatprep.subr.mxu0 %v1771
        %1862 = vmatpush1.msra.mxu0 %v1770
        %1863 = vmatprep.subr.mxu0 %v1774
        %1864 = vmatpush1.msra.mxu0 %v1773
        %1865 = vmatprep.subr.mxu0 %v1777
        %1866 = vmatpush1.msra.mxu0 %v1776
        %1867 = vmatprep.subr.mxu0 %v1780
        %1868 = vmatpush1.msra.mxu0 %v1779
        %1869 = vmatprep.subr.mxu0 %v1783
        %1870 = vmatpush1.msra.mxu0 %v1782
        %1871 = vmatprep.subr.mxu0 %v1786
        %1872 = vmatpush1.msra.mxu0 %v1785
        %1873 = vmatprep.subr.mxu0 %v1789
        %1874 = vmatpush1.msra.mxu0 %v1788
        %1875 = vmatprep.subr.mxu0 %v1792
        %1876 = vmatpush1.msra.mxu0 %v1791
        %1877 = vmatprep.subr.mxu0 %v1795
        %1878 = vmatpush1.msra.mxu0 %v1794
        %1879 = vmatprep.subr.mxu0 %v1798
        %1880 = vmatpush1.msra.mxu0 %v1797
        %1881 = vmatprep.mubr.f32.mxu0 %v1673
        %1882 = vmatmul.mubr.f32.gmra.mrb[0].mxu0 %v1672
        %v1883 = vpop.f32.mrb[0].mxu0
        %v1884 = vadd.f32 %v1805, %v1883
        %v1885 = vpop.f32.mrb[0].mxu0
        %v1886 = vadd.f32 %v1809, %v1885
        %1887 = vmatprep.mubr.f32.mxu0 %v1675
        %1888 = vmatmul.mubr.f32.gmra.mrb[0].mxu0 %v1674
        %v1889 = vpop.f32.mrb[0].mxu0
        %v1890 = vadd.f32 %v1805, %v1889
        %v1891 = vpop.f32.mrb[0].mxu0
        %v1892 = vadd.f32 %v1809, %v1891
        %1893 = vmatprep.mubr.f32.mxu0 %v1677
        %1894 = vmatmul.mubr.f32.gmra.mrb[0].mxu0 %v1676
        %v1895 = vpop.f32.mrb[0].mxu0
        %v1896 = vadd.f32 %v1805, %v1895
        %v1897 = vpop.f32.mrb[0].mxu0
        %v1898 = vadd.f32 %v1809, %v1897
        %1899 = vmatprep.mubr.f32.mxu0 %v1679
        %1900 = vmatmul.mubr.f32.gmra.mrb[0].mxu0 %v1678
        %v1901 = vpop.f32.mrb[0].mxu0
        %v1902 = vadd.f32 %v1805, %v1901
        %v1903 = vpop.f32.mrb[0].mxu0
        %v1904 = vadd.f32 %v1809, %v1903
        %1905 = vmatprep.mubr.f32.mxu0 %v1681
        %1906 = vmatmul.mubr.f32.gmra.mrb[0].mxu0 %v1680
        %v1907 = vpop.f32.mrb[0].mxu0
        %v1908 = vadd.f32 %v1805, %v1907
        %v1909 = vpop.f32.mrb[0].mxu0
        %v1910 = vadd.f32 %v1809, %v1909
        %1911 = vmatprep.mubr.f32.mxu0 %v1683
        %1912 = vmatmul.mubr.f32.gmra.mrb[0].mxu0 %v1682
        %v1913 = vpop.f32.mrb[0].mxu0
        %v1914 = vadd.f32 %v1805, %v1913
        %v1915 = vpop.f32.mrb[0].mxu0
        %v1916 = vadd.f32 %v1809, %v1915
        %1917 = vmatprep.mubr.f32.mxu0 %v1685
        %1918 = vmatmul.mubr.f32.gmra.mrb[0].mxu0 %v1684
        %v1919 = vpop.f32.mrb[0].mxu0
        %v1920 = vadd.f32 %v1805, %v1919
        %v1921 = vpop.f32.mrb[0].mxu0
        %v1922 = vadd.f32 %v1809, %v1921
        %1923 = vmatprep.mubr.f32.mxu0 %v1687
        %1924 = vmatmul.mubr.f32.gmra.mrb[0].mxu0 %v1686
        %v1925 = vpop.f32.mrb[0].mxu0
        %v1926 = vadd.f32 %v1805, %v1925
        %v1927 = vpop.f32.mrb[0].mxu0
        %v1928 = vadd.f32 %v1809, %v1927
        %1929 = vmatprep.mubr.f32.mxu0 %v1689
        %1930 = vmatmul.mubr.f32.gmra.mrb[0].mxu0 %v1688
        %v1931 = vpop.f32.mrb[0].mxu0
        %v1932 = vadd.f32 %v1805, %v1931
        %v1933 = vpop.f32.mrb[0].mxu0
        %v1934 = vadd.f32 %v1809, %v1933
        %1935 = vmatprep.mubr.f32.mxu0 %v1691
        %1936 = vmatmul.mubr.f32.gmra.mrb[0].mxu0 %v1690
        %v1937 = vpop.f32.mrb[0].mxu0
        %v1938 = vadd.f32 %v1805, %v1937
        %v1939 = vpop.f32.mrb[0].mxu0
        %v1940 = vadd.f32 %v1809, %v1939
        %1941 = vmatprep.mubr.f32.mxu0 %v1693
        %1942 = vmatmul.mubr.f32.gmra.mrb[0].mxu0 %v1692
        %v1943 = vpop.f32.mrb[0].mxu0
        %v1944 = vadd.f32 %v1805, %v1943
        %v1945 = vpop.f32.mrb[0].mxu0
        %v1946 = vadd.f32 %v1809, %v1945
        %1947 = vmatprep.mubr.f32.mxu0 %v1695
        %1948 = vmatmul.mubr.f32.gmra.mrb[0].mxu0 %v1694
        %v1949 = vpop.f32.mrb[0].mxu0
        %v1950 = vadd.f32 %v1805, %v1949
        %v1951 = vpop.f32.mrb[0].mxu0
        %v1952 = vadd.f32 %v1809, %v1951
        %1953 = vmatprep.mubr.f32.mxu0 %v1697
        %1954 = vmatmul.mubr.f32.gmra.mrb[0].mxu0 %v1696
        %v1955 = vpop.f32.mrb[0].mxu0
        %v1956 = vadd.f32 %v1805, %v1955
        %v1957 = vpop.f32.mrb[0].mxu0
        %v1958 = vadd.f32 %v1809, %v1957
        %1959 = vmatprep.mubr.f32.mxu0 %v1699
        %1960 = vmatmul.mubr.f32.gmra.mrb[0].mxu0 %v1698
        %v1961 = vpop.f32.mrb[0].mxu0
        %v1962 = vadd.f32 %v1805, %v1961
        %v1963 = vpop.f32.mrb[0].mxu0
        %v1964 = vadd.f32 %v1809, %v1963
        %1965 = vmatprep.mubr.f32.mxu0 %v1701
        %1966 = vmatmul.mubr.f32.gmra.mrb[0].mxu0 %v1700
        %v1967 = vpop.f32.mrb[0].mxu0
        %v1968 = vadd.f32 %v1805, %v1967
        %v1969 = vpop.f32.mrb[0].mxu0
        %v1970 = vadd.f32 %v1809, %v1969
        %1971 = vmatprep.mubr.f32.mxu0 %v1703
        %1972 = vmatmul.mubr.f32.gmra.mrb[0].mxu0 %v1702
        %v1973 = vpop.f32.mrb[0].mxu0
        %v1974 = vadd.f32 %v1805, %v1973
        %v1975 = vpop.f32.mrb[0].mxu0
        %v1976 = vadd.f32 %v1809, %v1975
        %1977 = vdwg.mxu0
        %1978 = vmatprep.subr.mxu0 0.0
        %1979 = vmatpush1.msra.mxu0 %v1706
        %1980 = vmatprep.subr.mxu0 0.0
        %1981 = vmatpush1.msra.mxu0 %v1709
        %1982 = vmatprep.subr.mxu0 0.0
        %1983 = vmatpush1.msra.mxu0 %v1712
        %1984 = vmatprep.subr.mxu0 0.0
        %1985 = vmatpush1.msra.mxu0 %v1715
        %1986 = vmatprep.subr.mxu0 0.0
        %1987 = vmatpush1.msra.mxu0 %v1718
        %1988 = vmatprep.subr.mxu0 0.0
        %1989 = vmatpush1.msra.mxu0 %v1721
        %1990 = vmatprep.subr.mxu0 0.0
        %1991 = vmatpush1.msra.mxu0 %v1724
        %1992 = vmatprep.subr.mxu0 0.0
        %1993 = vmatpush1.msra.mxu0 %v1727
        %1994 = vmatprep.subr.mxu0 0.0
        %1995 = vmatpush1.msra.mxu0 %v1730
        %1996 = vmatprep.subr.mxu0 0.0
        %1997 = vmatpush1.msra.mxu0 %v1733
        %1998 = vmatprep.subr.mxu0 0.0
        %1999 = vmatpush1.msra.mxu0 %v1736
        %2000 = vmatprep.subr.mxu0 0.0
        %2001 = vmatpush1.msra.mxu0 %v1739
        %2002 = vmatprep.subr.mxu0 0.0
        %2003 = vmatpush1.msra.mxu0 %v1742
        %2004 = vmatprep.subr.mxu0 0.0
        %2005 = vmatpush1.msra.mxu0 %v1745
        %2006 = vmatprep.subr.mxu0 0.0
        %2007 = vmatpush1.msra.mxu0 %v1748
        %2008 = vmatprep.subr.mxu0 0.0
        %2009 = vmatpush1.msra.mxu0 %v1751
        %2010 = vmatprep.subr.mxu0 0.0
        %2011 = vmatpush1.msra.mxu0 %v1754
        %2012 = vmatprep.subr.mxu0 0.0
        %2013 = vmatpush1.msra.mxu0 %v1757
        %2014 = vmatprep.subr.mxu0 0.0
        %2015 = vmatpush1.msra.mxu0 %v1760
        %2016 = vmatprep.subr.mxu0 0.0
        %2017 = vmatpush1.msra.mxu0 %v1763
        %2018 = vmatprep.subr.mxu0 0.0
        %2019 = vmatpush1.msra.mxu0 %v1766
        %2020 = vmatprep.subr.mxu0 0.0
        %2021 = vmatpush1.msra.mxu0 %v1769
        %2022 = vmatprep.subr.mxu0 0.0
        %2023 = vmatpush1.msra.mxu0 %v1772
        %2024 = vmatprep.subr.mxu0 0.0
        %2025 = vmatpush1.msra.mxu0 %v1775
        %2026 = vmatprep.subr.mxu0 0.0
        %2027 = vmatpush1.msra.mxu0 %v1778
        %2028 = vmatprep.subr.mxu0 0.0
        %2029 = vmatpush1.msra.mxu0 %v1781
        %2030 = vmatprep.subr.mxu0 0.0
        %2031 = vmatpush1.msra.mxu0 %v1784
        %2032 = vmatprep.subr.mxu0 0.0
        %2033 = vmatpush1.msra.mxu0 %v1787
        %2034 = vmatprep.subr.mxu0 0.0
        %2035 = vmatpush1.msra.mxu0 %v1790
        %2036 = vmatprep.subr.mxu0 0.0
        %2037 = vmatpush1.msra.mxu0 %v1793
        %2038 = vmatprep.subr.mxu0 0.0
        %2039 = vmatpush1.msra.mxu0 %v1796
        %2040 = vmatprep.subr.mxu0 0.0
        %2041 = vmatpush1.msra.mxu0 %v1799
        %2042 = vmatprep.mubr.f32.mxu0 %v1673
        %2043 = vmatmul.mubr.f32.gmra.mrb[0].mxu0 %v1672
        %v2044 = vpop.f32.mrb[0].mxu0
        %v2045 = vadd.f32 %v1813, %v2044
        %v2046 = vpop.f32.mrb[0].mxu0
        %2047 = vmatprep.mubr.f32.mxu0 %v1675
        %2048 = vmatmul.mubr.f32.gmra.mrb[0].mxu0 %v1674
        %v2049 = vpop.f32.mrb[0].mxu0
        %v2050 = vadd.f32 %v1813, %v2049
        %v2051 = vpop.f32.mrb[0].mxu0
        %2052 = vmatprep.mubr.f32.mxu0 %v1677
        %2053 = vmatmul.mubr.f32.gmra.mrb[0].mxu0 %v1676
        %v2054 = vpop.f32.mrb[0].mxu0
        %v2055 = vadd.f32 %v1813, %v2054
        %v2056 = vpop.f32.mrb[0].mxu0
        %2057 = vmatprep.mubr.f32.mxu0 %v1679
        %2058 = vmatmul.mubr.f32.gmra.mrb[0].mxu0 %v1678
        %v2059 = vpop.f32.mrb[0].mxu0
        %v2060 = vadd.f32 %v1813, %v2059
        %v2061 = vpop.f32.mrb[0].mxu0
        %2062 = vmatprep.mubr.f32.mxu0 %v1681
        %2063 = vmatmul.mubr.f32.gmra.mrb[0].mxu0 %v1680
        %v2064 = vpop.f32.mrb[0].mxu0
        %v2065 = vadd.f32 %v1813, %v2064
        %v2066 = vpop.f32.mrb[0].mxu0
        %2067 = vmatprep.mubr.f32.mxu0 %v1683
        %2068 = vmatmul.mubr.f32.gmra.mrb[0].mxu0 %v1682
        %v2069 = vpop.f32.mrb[0].mxu0
        %v2070 = vadd.f32 %v1813, %v2069
        %v2071 = vpop.f32.mrb[0].mxu0
        %2072 = vmatprep.mubr.f32.mxu0 %v1685
        %2073 = vmatmul.mubr.f32.gmra.mrb[0].mxu0 %v1684
        %v2074 = vpop.f32.mrb[0].mxu0
        %v2075 = vadd.f32 %v1813, %v2074
        %v2076 = vpop.f32.mrb[0].mxu0
        %2077 = vmatprep.mubr.f32.mxu0 %v1687
        %2078 = vmatmul.mubr.f32.gmra.mrb[0].mxu0 %v1686
        %v2079 = vpop.f32.mrb[0].mxu0
        %v2080 = vadd.f32 %v1813, %v2079
        %v2081 = vpop.f32.mrb[0].mxu0
        %2082 = vmatprep.mubr.f32.mxu0 %v1689
        %2083 = vmatmul.mubr.f32.gmra.mrb[0].mxu0 %v1688
        %v2084 = vpop.f32.mrb[0].mxu0
        %v2085 = vadd.f32 %v1813, %v2084
        %v2086 = vpop.f32.mrb[0].mxu0
        %2087 = vmatprep.mubr.f32.mxu0 %v1691
        %2088 = vmatmul.mubr.f32.gmra.mrb[0].mxu0 %v1690
        %v2089 = vpop.f32.mrb[0].mxu0
        %v2090 = vadd.f32 %v1813, %v2089
        %v2091 = vpop.f32.mrb[0].mxu0
        %2092 = vmatprep.mubr.f32.mxu0 %v1693
        %2093 = vmatmul.mubr.f32.gmra.mrb[0].mxu0 %v1692
        %v2094 = vpop.f32.mrb[0].mxu0
        %v2095 = vadd.f32 %v1813, %v2094
        %v2096 = vpop.f32.mrb[0].mxu0
        %2097 = vmatprep.mubr.f32.mxu0 %v1695
        %2098 = vmatmul.mubr.f32.gmra.mrb[0].mxu0 %v1694
        %v2099 = vpop.f32.mrb[0].mxu0
        %v2100 = vadd.f32 %v1813, %v2099
        %v2101 = vpop.f32.mrb[0].mxu0
        %2102 = vmatprep.mubr.f32.mxu0 %v1697
        %2103 = vmatmul.mubr.f32.gmra.mrb[0].mxu0 %v1696
        %v2104 = vpop.f32.mrb[0].mxu0
        %v2105 = vadd.f32 %v1813, %v2104
        %v2106 = vpop.f32.mrb[0].mxu0
        %2107 = vmatprep.mubr.f32.mxu0 %v1699
        %2108 = vmatmul.mubr.f32.gmra.mrb[0].mxu0 %v1698
        %v2109 = vpop.f32.mrb[0].mxu0
        %v2110 = vadd.f32 %v1813, %v2109
        %v2111 = vpop.f32.mrb[0].mxu0
        %2112 = vmatprep.mubr.f32.mxu0 %v1701
        %2113 = vmatmul.mubr.f32.gmra.mrb[0].mxu0 %v1700
        %v2114 = vpop.f32.mrb[0].mxu0
        %v2115 = vadd.f32 %v1813, %v2114
        %v2116 = vpop.f32.mrb[0].mxu0
        %2117 = vmatprep.mubr.f32.mxu0 %v1703
        %2118 = vmatmul.mubr.f32.gmra.mrb[0].mxu0 %v1702
        %v2119 = vpop.f32.mrb[0].mxu0
        %v2120 = vadd.f32 %v1813, %v2119
        %v2121 = vpop.f32.mrb[0].mxu0
        %2122 = vdwg.mxu0
        %2123 = vst [vmem:[#allocation4] sm:$0xff] %v1884
        %2124 = vst [vmem:[#allocation4 + $0x8] sm:$0xff] %v1886
        %2125 = vst [vmem:[#allocation4 + $0x10] sm:$0xff] %v2045
        %2126 = vst [vmem:[#allocation4 + $0x18] sm:$0xff] %v1890
        %2127 = vst [vmem:[#allocation4 + $0x20] sm:$0xff] %v1892
        %2128 = vst [vmem:[#allocation4 + $0x28] sm:$0xff] %v2050
        %2129 = vst [vmem:[#allocation4 + $0x30] sm:$0xff] %v1896
        %2130 = vst [vmem:[#allocation4 + $0x38] sm:$0xff] %v1898
        %2131 = vst [vmem:[#allocation4 + $0x40] sm:$0xff] %v2055
        %2132 = vst [vmem:[#allocation4 + $0x48] sm:$0xff] %v1902
        %2133 = vst [vmem:[#allocation4 + $0x50] sm:$0xff] %v1904
        %2134 = vst [vmem:[#allocation4 + $0x58] sm:$0xff] %v2060
        %2135 = vst [vmem:[#allocation4 + $0x60] sm:$0xff] %v1908
        %2136 = vst [vmem:[#allocation4 + $0x68] sm:$0xff] %v1910
        %2137 = vst [vmem:[#allocation4 + $0x70] sm:$0xff] %v2065
        %2138 = vst [vmem:[#allocation4 + $0x78] sm:$0xff] %v1914
        %2139 = vst [vmem:[#allocation4 + $0x80] sm:$0xff] %v1916
        %2140 = vst [vmem:[#allocation4 + $0x88] sm:$0xff] %v2070
        %2141 = vst [vmem:[#allocation4 + $0x90] sm:$0xff] %v1920
        %2142 = vst [vmem:[#allocation4 + $0x98] sm:$0xff] %v1922
        %2143 = vst [vmem:[#allocation4 + $0xa0] sm:$0xff] %v2075
        %2144 = vst [vmem:[#allocation4 + $0xa8] sm:$0xff] %v1926
        %2145 = vst [vmem:[#allocation4 + $0xb0] sm:$0xff] %v1928
        %2146 = vst [vmem:[#allocation4 + $0xb8] sm:$0xff] %v2080
        %2147 = vst [vmem:[#allocation4 + $0xc0] sm:$0xff] %v1932
        %2148 = vst [vmem:[#allocation4 + $0xc8] sm:$0xff] %v1934
        %2149 = vst [vmem:[#allocation4 + $0xd0] sm:$0xff] %v2085
        %2150 = vst [vmem:[#allocation4 + $0xd8] sm:$0xff] %v1938
        %2151 = vst [vmem:[#allocation4 + $0xe0] sm:$0xff] %v1940
        %2152 = vst [vmem:[#allocation4 + $0xe8] sm:$0xff] %v2090
        %2153 = vst [vmem:[#allocation4 + $0xf0] sm:$0xff] %v1944
        %2154 = vst [vmem:[#allocation4 + $0xf8] sm:$0xff] %v1946
        %2155 = vst [vmem:[#allocation4 + $0x100] sm:$0xff] %v2095
        %2156 = vst [vmem:[#allocation4 + $0x108] sm:$0xff] %v1950
        %2157 = vst [vmem:[#allocation4 + $0x110] sm:$0xff] %v1952
        %2158 = vst [vmem:[#allocation4 + $0x118] sm:$0xff] %v2100
        %2159 = vst [vmem:[#allocation4 + $0x120] sm:$0xff] %v1956
        %2160 = vst [vmem:[#allocation4 + $0x128] sm:$0xff] %v1958
        %2161 = vst [vmem:[#allocation4 + $0x130] sm:$0xff] %v2105
        %2162 = vst [vmem:[#allocation4 + $0x138] sm:$0xff] %v1962
        %2163 = vst [vmem:[#allocation4 + $0x140] sm:$0xff] %v1964
        %2164 = vst [vmem:[#allocation4 + $0x148] sm:$0xff] %v2110
        %2165 = vst [vmem:[#allocation4 + $0x150] sm:$0xff] %v1968
        %2166 = vst [vmem:[#allocation4 + $0x158] sm:$0xff] %v1970
        %2167 = vst [vmem:[#allocation4 + $0x160] sm:$0xff] %v2115
        %2168 = vst [vmem:[#allocation4 + $0x168] sm:$0xff] %v1974
        %2169 = vst [vmem:[#allocation4 + $0x170] sm:$0xff] %v1976
        %2170 = vst [vmem:[#allocation4 + $0x178] sm:$0xff] %v2120
        %v2171 = vld [vmem:[%s7] sm:$0xff]
        %v2172 = vld [vmem:[%s7 + $0x8] sm:$0xff]
        %v2173 = vld [vmem:[%s7 + $0x10] sm:$0xff]
        %v2174 = vld [vmem:[%s7 + $0x18] sm:$0xff]
        %v2175 = vld [vmem:[%s7 + $0x20] sm:$0xff]
        %v2176 = vld [vmem:[%s7 + $0x28] sm:$0xff]
        %v2177 = vld [vmem:[%s7 + $0x30] sm:$0xff]
        %v2178 = vld [vmem:[%s7 + $0x38] sm:$0xff]
        %v2179 = vld [vmem:[%s7 + $0x40] sm:$0xff]
        %v2180 = vld [vmem:[%s7 + $0x48] sm:$0xff]
        %v2181 = vld [vmem:[%s7 + $0x50] sm:$0xff]
        %v2182 = vld [vmem:[%s7 + $0x58] sm:$0xff]
        %v2183 = vld [vmem:[%s7 + $0x60] sm:$0xff]
        %v2184 = vld [vmem:[%s7 + $0x68] sm:$0xff]
        %v2185 = vld [vmem:[%s7 + $0x70] sm:$0xff]
        %v2186 = vld [vmem:[%s7 + $0x78] sm:$0xff]
        %v2187 = vld [vmem:[%s7 + $0x80] sm:$0xff]
        %v2188 = vld [vmem:[%s7 + $0x88] sm:$0xff]
        %v2189 = vld [vmem:[%s7 + $0x90] sm:$0xff]
        %v2190 = vld [vmem:[%s7 + $0x98] sm:$0xff]
        %v2191 = vld [vmem:[%s7 + $0xa0] sm:$0xff]
        %v2192 = vld [vmem:[%s7 + $0xa8] sm:$0xff]
        %v2193 = vld [vmem:[%s7 + $0xb0] sm:$0xff]
        %v2194 = vld [vmem:[%s7 + $0xb8] sm:$0xff]
        %v2195 = vld [vmem:[%s7 + $0xc0] sm:$0xff]
        %v2196 = vld [vmem:[%s7 + $0xc8] sm:$0xff]
        %v2197 = vld [vmem:[%s7 + $0xd0] sm:$0xff]
        %v2198 = vld [vmem:[%s7 + $0xd8] sm:$0xff]
        %v2199 = vld [vmem:[%s7 + $0xe0] sm:$0xff]
        %v2200 = vld [vmem:[%s7 + $0xe8] sm:$0xff]
        %v2201 = vld [vmem:[%s7 + $0xf0] sm:$0xff]
        %v2202 = vld [vmem:[%s7 + $0xf8] sm:$0xff]
        %v2203 = vld [vmem:[%s7 + $0x100] sm:$0xff]
        %v2204 = vld [vmem:[%s7 + $0x108] sm:$0xff]
        %v2205 = vld [vmem:[%s7 + $0x110] sm:$0xff]
        %v2206 = vld [vmem:[%s7 + $0x118] sm:$0xff]
        %v2207 = vld [vmem:[%s7 + $0x120] sm:$0xff]
        %v2208 = vld [vmem:[%s7 + $0x128] sm:$0xff]
        %v2209 = vld [vmem:[%s7 + $0x130] sm:$0xff]
        %v2210 = vld [vmem:[%s7 + $0x138] sm:$0xff]
        %v2211 = vld [vmem:[%s7 + $0x140] sm:$0xff]
        %v2212 = vld [vmem:[%s7 + $0x148] sm:$0xff]
        %v2213 = vld [vmem:[%s7 + $0x150] sm:$0xff]
        %v2214 = vld [vmem:[%s7 + $0x158] sm:$0xff]
        %v2215 = vld [vmem:[%s7 + $0x160] sm:$0xff]
        %v2216 = vld [vmem:[%s7 + $0x168] sm:$0xff]
        %v2217 = vld [vmem:[%s7 + $0x170] sm:$0xff]
        %v2218 = vld [vmem:[%s7 + $0x178] sm:$0xff]
        %v2219 = vld [vmem:[%s8] sm:$0x1]
        loop: start=0, step=1, limit=16
        $region118: #{tpu_custom_call.1} parent=97 // loop_pre_header
          _
        $region119: #{tpu_custom_call.1} parent=97 // loop_header
          %s2221 = sphi 0, %s2225
          %p2222 = scmp.ge.s32.totalorder %s2221, 16
          %v2226 = vphi 0.0, %v2400
        $region120: #{tpu_custom_call.1} parent=97 // loop_header_branch
          %2224 = sbr.rel (%p2222) target = $region124
        $region121: #{tpu_custom_call.1} parent=97 // loop_body
          %s2227 = smul.u32 %s2221, 8
          %s2228 = sshra.s32 %s2227, 3
          %s2229 = sand.u32 %s2227, 7
          %s2230 = smul.u32 %s2228, 3
          %s2231 = smul.addr %s2230, 8
          %s2232 = scalar_lea.vmem [#allocation4], %s2231
          %v2233 = vld [vmem:[%s2232] sm:$0xff]
          %v2234 = vld [vmem:[%s2232 + $0x8] sm:$0xff]
          %v2235 = vld [vmem:[%s2232 + $0x10] sm:$0xff]
          %2236 = vmatprep.subr.mxu0 %v2172
          %2237 = vmatpush1.msra.mxu0 %v2171
          %2238 = vmatprep.subr.mxu0 %v2175
          %2239 = vmatpush1.msra.mxu0 %v2174
          %2240 = vmatprep.subr.mxu0 %v2178
          %2241 = vmatpush1.msra.mxu0 %v2177
          %2242 = vmatprep.subr.mxu0 %v2181
          %2243 = vmatpush1.msra.mxu0 %v2180
          %2244 = vmatprep.subr.mxu0 %v2184
          %2245 = vmatpush1.msra.mxu0 %v2183
          %2246 = vmatprep.subr.mxu0 %v2187
          %2247 = vmatpush1.msra.mxu0 %v2186
          %2248 = vmatprep.subr.mxu0 %v2190
          %2249 = vmatpush1.msra.mxu0 %v2189
          %2250 = vmatprep.subr.mxu0 %v2193
          %2251 = vmatpush1.msra.mxu0 %v2192
          %2252 = vmatprep.subr.mxu0 %v2196
          %2253 = vmatpush1.msra.mxu0 %v2195
          %2254 = vmatprep.subr.mxu0 %v2199
          %2255 = vmatpush1.msra.mxu0 %v2198
          %2256 = vmatprep.subr.mxu0 %v2202
          %2257 = vmatpush1.msra.mxu0 %v2201
          %2258 = vmatprep.subr.mxu0 %v2205
          %2259 = vmatpush1.msra.mxu0 %v2204
          %2260 = vmatprep.subr.mxu0 %v2208
          %2261 = vmatpush1.msra.mxu0 %v2207
          %2262 = vmatprep.subr.mxu0 %v2211
          %2263 = vmatpush1.msra.mxu0 %v2210
          %2264 = vmatprep.subr.mxu0 %v2214
          %2265 = vmatpush1.msra.mxu0 %v2213
          %2266 = vmatprep.subr.mxu0 %v2217
          %2267 = vmatpush1.msra.mxu0 %v2216
          %2268 = vmatprep.subr.mxu0 0.0
          %2269 = vmatpush1.msra.mxu0 0.0
          %2270 = vmatprep.subr.mxu0 0.0
          %2271 = vmatpush1.msra.mxu0 0.0
          %2272 = vmatprep.subr.mxu0 0.0
          %2273 = vmatpush1.msra.mxu0 0.0
          %2274 = vmatprep.subr.mxu0 0.0
          %2275 = vmatpush1.msra.mxu0 0.0
          %2276 = vmatprep.subr.mxu0 0.0
          %2277 = vmatpush1.msra.mxu0 0.0
          %2278 = vmatprep.subr.mxu0 0.0
          %2279 = vmatpush1.msra.mxu0 0.0
          %2280 = vmatprep.subr.mxu0 0.0
          %2281 = vmatpush1.msra.mxu0 0.0
          %2282 = vmatprep.subr.mxu0 0.0
          %2283 = vmatpush1.msra.mxu0 0.0
          %2284 = vmatprep.subr.mxu0 0.0
          %2285 = vmatpush1.msra.mxu0 0.0
          %2286 = vmatprep.subr.mxu0 0.0
          %2287 = vmatpush1.msra.mxu0 0.0
          %2288 = vmatprep.subr.mxu0 0.0
          %2289 = vmatpush1.msra.mxu0 0.0
          %2290 = vmatprep.subr.mxu0 0.0
          %2291 = vmatpush1.msra.mxu0 0.0
          %2292 = vmatprep.subr.mxu0 0.0
          %2293 = vmatpush1.msra.mxu0 0.0
          %2294 = vmatprep.subr.mxu0 0.0
          %2295 = vmatpush1.msra.mxu0 0.0
          %2296 = vmatprep.subr.mxu0 0.0
          %2297 = vmatpush1.msra.mxu0 0.0
          %2298 = vmatprep.subr.mxu0 0.0
          %2299 = vmatpush1.msra.mxu0 0.0
          %2300 = vmatprep.mubr.f32.mxu0 0.0
          %2301 = vmatmul.mubr.f32.gmra.mrb[0].mxu0 %v2226
          %v2302 = vpop.f32.mrb[0].mxu0
          %v2303 = vadd.f32 0.0, %v2302
          %v2304 = vpop.f32.mrb[0].mxu0
          %v2305 = vadd.f32 0.0, %v2304
          %2306 = vdwg.mxu0
          %2307 = vmatprep.subr.mxu0 0.0
          %2308 = vmatpush1.msra.mxu0 %v2173
          %2309 = vmatprep.subr.mxu0 0.0
          %2310 = vmatpush1.msra.mxu0 %v2176
          %2311 = vmatprep.subr.mxu0 0.0
          %2312 = vmatpush1.msra.mxu0 %v2179
          %2313 = vmatprep.subr.mxu0 0.0
          %2314 = vmatpush1.msra.mxu0 %v2182
          %2315 = vmatprep.subr.mxu0 0.0
          %2316 = vmatpush1.msra.mxu0 %v2185
          %2317 = vmatprep.subr.mxu0 0.0
          %2318 = vmatpush1.msra.mxu0 %v2188
          %2319 = vmatprep.subr.mxu0 0.0
          %2320 = vmatpush1.msra.mxu0 %v2191
          %2321 = vmatprep.subr.mxu0 0.0
          %2322 = vmatpush1.msra.mxu0 %v2194
          %2323 = vmatprep.subr.mxu0 0.0
          %2324 = vmatpush1.msra.mxu0 %v2197
          %2325 = vmatprep.subr.mxu0 0.0
          %2326 = vmatpush1.msra.mxu0 %v2200
          %2327 = vmatprep.subr.mxu0 0.0
          %2328 = vmatpush1.msra.mxu0 %v2203
          %2329 = vmatprep.subr.mxu0 0.0
          %2330 = vmatpush1.msra.mxu0 %v2206
          %2331 = vmatprep.subr.mxu0 0.0
          %2332 = vmatpush1.msra.mxu0 %v2209
          %2333 = vmatprep.subr.mxu0 0.0
          %2334 = vmatpush1.msra.mxu0 %v2212
          %2335 = vmatprep.subr.mxu0 0.0
          %2336 = vmatpush1.msra.mxu0 %v2215
          %2337 = vmatprep.subr.mxu0 0.0
          %2338 = vmatpush1.msra.mxu0 %v2218
          %2339 = vmatprep.subr.mxu0 0.0
          %2340 = vmatpush1.msra.mxu0 0.0
          %2341 = vmatprep.subr.mxu0 0.0
          %2342 = vmatpush1.msra.mxu0 0.0
          %2343 = vmatprep.subr.mxu0 0.0
          %2344 = vmatpush1.msra.mxu0 0.0
          %2345 = vmatprep.subr.mxu0 0.0
          %2346 = vmatpush1.msra.mxu0 0.0
          %2347 = vmatprep.subr.mxu0 0.0
          %2348 = vmatpush1.msra.mxu0 0.0
          %2349 = vmatprep.subr.mxu0 0.0
          %2350 = vmatpush1.msra.mxu0 0.0
          %2351 = vmatprep.subr.mxu0 0.0
          %2352 = vmatpush1.msra.mxu0 0.0
          %2353 = vmatprep.subr.mxu0 0.0
          %2354 = vmatpush1.msra.mxu0 0.0
          %2355 = vmatprep.subr.mxu0 0.0
          %2356 = vmatpush1.msra.mxu0 0.0
          %2357 = vmatprep.subr.mxu0 0.0
          %2358 = vmatpush1.msra.mxu0 0.0
          %2359 = vmatprep.subr.mxu0 0.0
          %2360 = vmatpush1.msra.mxu0 0.0
          %2361 = vmatprep.subr.mxu0 0.0
          %2362 = vmatpush1.msra.mxu0 0.0
          %2363 = vmatprep.subr.mxu0 0.0
          %2364 = vmatpush1.msra.mxu0 0.0
          %2365 = vmatprep.subr.mxu0 0.0
          %2366 = vmatpush1.msra.mxu0 0.0
          %2367 = vmatprep.subr.mxu0 0.0
          %2368 = vmatpush1.msra.mxu0 0.0
          %2369 = vmatprep.subr.mxu0 0.0
          %2370 = vmatpush1.msra.mxu0 0.0
          %2371 = vmatprep.mubr.f32.mxu0 0.0
          %2372 = vmatmul.mubr.f32.gmra.mrb[0].mxu0 %v2226
          %v2373 = vpop.f32.mrb[0].mxu0
          %v2374 = vadd.f32 0.0, %v2373
          %v2375 = vpop.f32.mrb[0].mxu0
          %2376 = vdwg.mxu0
          %v2377 = vadd.f32 %v2233, %v2303
          %v2378 = vadd.f32 %v2234, %v2305
          %v2379 = vmul.f32 %v2377, 0.5
          %v2380 = vmul.f32 %v2378, 0.5
          %v2381 = vtanh.pop %v2379
          %v2382 = vtanh.pop %v2380
          %v2383 = vadd.f32 %v2381, 1.0
          %v2384 = vadd.f32 %v2382, 1.0
          %v2385 = vmul.f32 %v2383, 0.5
          %v2386 = vmul.f32 %v2384, 0.5
          %v2388 = vlaneseq
          %v2389 = vshrl.u32 %v2388, 7
          %v2390 = vsub.s32 0, %v2389
          %v2391 = vrot.slane %v2219, %v2390
          %v2393 = vadd.f32 %v2374, %v2391
          %v2394 = vmul.f32 %v2385, %v2393
          %v2395 = vadd.f32 %v2235, %v2394
          %v2396 = vtanh.pop %v2395
          %v2397 = vsub.f32 1.0, %v2386
          %v2398 = vmul.f32 %v2397, %v2396
          %v2399 = vmul.f32 %v2386, %v2226
          %v2400 = vadd.f32 %v2398, %v2399
        $region122: #{tpu_custom_call.1} parent=97 // loop_footer
          %s2225 = sadd.s32 1, %s2221
        $region123: #{tpu_custom_call.1} parent=97 // loop_footer_branch
          %2220 = sbr.rel target = $region119
        $region124: #{tpu_custom_call.1} parent=97 // loop_exit
          _
        %s2401 = smul.u32 15, 2
        %s2402 = smul.addr %s2401, 8
        %s2403 = scalar_lea.vmem [#allocation3], %s2402
        %v2404 = vld [vmem:[%s2403] sm:$0xff]
        %v2405 = vld [vmem:[%s2403 + $0x8] sm:$0xff]
        %s2406 = scalar_lea.vmem [#allocation8], 768
        %v2407 = vld [vmem:[%s2406] sm:$0xff]
        %v2408 = vld [vmem:[%s2406 + $0x8] sm:$0xff]
        %v2409 = vld [vmem:[%s2406 + $0x10] sm:$0xff]
        %v2410 = vld [vmem:[%s2406 + $0x18] sm:$0xff]
        %v2411 = vld [vmem:[%s2406 + $0x20] sm:$0xff]
        %v2412 = vld [vmem:[%s2406 + $0x28] sm:$0xff]
        %v2413 = vld [vmem:[%s2406 + $0x30] sm:$0xff]
        %v2414 = vld [vmem:[%s2406 + $0x38] sm:$0xff]
        %v2415 = vld [vmem:[%s2406 + $0x40] sm:$0xff]
        %v2416 = vld [vmem:[%s2406 + $0x48] sm:$0xff]
        %v2417 = vld [vmem:[%s2406 + $0x50] sm:$0xff]
        %v2418 = vld [vmem:[%s2406 + $0x58] sm:$0xff]
        %v2419 = vld [vmem:[%s2406 + $0x60] sm:$0xff]
        %v2420 = vld [vmem:[%s2406 + $0x68] sm:$0xff]
        %v2421 = vld [vmem:[%s2406 + $0x70] sm:$0xff]
        %v2422 = vld [vmem:[%s2406 + $0x78] sm:$0xff]
        %v2423 = vld [vmem:[%s2406 + $0x80] sm:$0xff]
        %v2424 = vld [vmem:[%s2406 + $0x88] sm:$0xff]
        %v2425 = vld [vmem:[%s2406 + $0x90] sm:$0xff]
        %v2426 = vld [vmem:[%s2406 + $0x98] sm:$0xff]
        %v2427 = vld [vmem:[%s2406 + $0xa0] sm:$0xff]
        %v2428 = vld [vmem:[%s2406 + $0xa8] sm:$0xff]
        %v2429 = vld [vmem:[%s2406 + $0xb0] sm:$0xff]
        %v2430 = vld [vmem:[%s2406 + $0xb8] sm:$0xff]
        %v2431 = vld [vmem:[%s2406 + $0xc0] sm:$0xff]
        %v2432 = vld [vmem:[%s2406 + $0xc8] sm:$0xff]
        %v2433 = vld [vmem:[%s2406 + $0xd0] sm:$0xff]
        %v2434 = vld [vmem:[%s2406 + $0xd8] sm:$0xff]
        %v2435 = vld [vmem:[%s2406 + $0xe0] sm:$0xff]
        %v2436 = vld [vmem:[%s2406 + $0xe8] sm:$0xff]
        %v2437 = vld [vmem:[%s2406 + $0xf0] sm:$0xff]
        %v2438 = vld [vmem:[%s2406 + $0xf8] sm:$0xff]
        %v2439 = vld [vmem:[%s2406 + $0x100] sm:$0xff]
        %v2440 = vld [vmem:[%s2406 + $0x108] sm:$0xff]
        %v2441 = vld [vmem:[%s2406 + $0x110] sm:$0xff]
        %v2442 = vld [vmem:[%s2406 + $0x118] sm:$0xff]
        %v2443 = vld [vmem:[%s2406 + $0x120] sm:$0xff]
        %v2444 = vld [vmem:[%s2406 + $0x128] sm:$0xff]
        %v2445 = vld [vmem:[%s2406 + $0x130] sm:$0xff]
        %v2446 = vld [vmem:[%s2406 + $0x138] sm:$0xff]
        %v2447 = vld [vmem:[%s2406 + $0x140] sm:$0xff]
        %v2448 = vld [vmem:[%s2406 + $0x148] sm:$0xff]
        %v2449 = vld [vmem:[%s2406 + $0x150] sm:$0xff]
        %v2450 = vld [vmem:[%s2406 + $0x158] sm:$0xff]
        %v2451 = vld [vmem:[%s2406 + $0x160] sm:$0xff]
        %v2452 = vld [vmem:[%s2406 + $0x168] sm:$0xff]
        %v2453 = vld [vmem:[%s2406 + $0x170] sm:$0xff]
        %v2454 = vld [vmem:[%s2406 + $0x178] sm:$0xff]
        %v2455 = vld [vmem:[%s2406 + $0x180] sm:$0xff]
        %v2456 = vld [vmem:[%s2406 + $0x188] sm:$0xff]
        %v2457 = vld [vmem:[%s2406 + $0x190] sm:$0xff]
        %v2458 = vld [vmem:[%s2406 + $0x198] sm:$0xff]
        %v2459 = vld [vmem:[%s2406 + $0x1a0] sm:$0xff]
        %v2460 = vld [vmem:[%s2406 + $0x1a8] sm:$0xff]
        %v2461 = vld [vmem:[%s2406 + $0x1b0] sm:$0xff]
        %v2462 = vld [vmem:[%s2406 + $0x1b8] sm:$0xff]
        %v2463 = vld [vmem:[%s2406 + $0x1c0] sm:$0xff]
        %v2464 = vld [vmem:[%s2406 + $0x1c8] sm:$0xff]
        %v2465 = vld [vmem:[%s2406 + $0x1d0] sm:$0xff]
        %v2466 = vld [vmem:[%s2406 + $0x1d8] sm:$0xff]
        %v2467 = vld [vmem:[%s2406 + $0x1e0] sm:$0xff]
        %v2468 = vld [vmem:[%s2406 + $0x1e8] sm:$0xff]
        %v2469 = vld [vmem:[%s2406 + $0x1f0] sm:$0xff]
        %v2470 = vld [vmem:[%s2406 + $0x1f8] sm:$0xff]
        %v2471 = vld [vmem:[%s2406 + $0x200] sm:$0xff]
        %v2472 = vld [vmem:[%s2406 + $0x208] sm:$0xff]
        %v2473 = vld [vmem:[%s2406 + $0x210] sm:$0xff]
        %v2474 = vld [vmem:[%s2406 + $0x218] sm:$0xff]
        %v2475 = vld [vmem:[%s2406 + $0x220] sm:$0xff]
        %v2476 = vld [vmem:[%s2406 + $0x228] sm:$0xff]
        %v2477 = vld [vmem:[%s2406 + $0x230] sm:$0xff]
        %v2478 = vld [vmem:[%s2406 + $0x238] sm:$0xff]
        %v2479 = vld [vmem:[%s2406 + $0x240] sm:$0xff]
        %v2480 = vld [vmem:[%s2406 + $0x248] sm:$0xff]
        %v2481 = vld [vmem:[%s2406 + $0x250] sm:$0xff]
        %v2482 = vld [vmem:[%s2406 + $0x258] sm:$0xff]
        %v2483 = vld [vmem:[%s2406 + $0x260] sm:$0xff]
        %v2484 = vld [vmem:[%s2406 + $0x268] sm:$0xff]
        %v2485 = vld [vmem:[%s2406 + $0x270] sm:$0xff]
        %v2486 = vld [vmem:[%s2406 + $0x278] sm:$0xff]
        %v2487 = vld [vmem:[%s2406 + $0x280] sm:$0xff]
        %v2488 = vld [vmem:[%s2406 + $0x288] sm:$0xff]
        %v2489 = vld [vmem:[%s2406 + $0x290] sm:$0xff]
        %v2490 = vld [vmem:[%s2406 + $0x298] sm:$0xff]
        %v2491 = vld [vmem:[%s2406 + $0x2a0] sm:$0xff]
        %v2492 = vld [vmem:[%s2406 + $0x2a8] sm:$0xff]
        %v2493 = vld [vmem:[%s2406 + $0x2b0] sm:$0xff]
        %v2494 = vld [vmem:[%s2406 + $0x2b8] sm:$0xff]
        %v2495 = vld [vmem:[%s2406 + $0x2c0] sm:$0xff]
        %v2496 = vld [vmem:[%s2406 + $0x2c8] sm:$0xff]
        %v2497 = vld [vmem:[%s2406 + $0x2d0] sm:$0xff]
        %v2498 = vld [vmem:[%s2406 + $0x2d8] sm:$0xff]
        %v2499 = vld [vmem:[%s2406 + $0x2e0] sm:$0xff]
        %v2500 = vld [vmem:[%s2406 + $0x2e8] sm:$0xff]
        %v2501 = vld [vmem:[%s2406 + $0x2f0] sm:$0xff]
        %v2502 = vld [vmem:[%s2406 + $0x2f8] sm:$0xff]
        %s2503 = scalar_lea.vmem %s6, 3
        %v2504 = vld [vmem:[%s2503] sm:$0x7]
        %v2506 = vlaneseq
        %v2507 = vshrl.u32 %v2506, 7
        %v2508 = vsub.s32 0, %v2507
        %v2509 = vrot.slane %v2504, %v2508
        %v2510 = vlaneseq
        %v2511 = vshrl.u32 %v2510, 7
        %v2512 = vsub.s32 1, %v2511
        %v2513 = vrot.slane %v2504, %v2512
        %v2514 = vlaneseq
        %v2515 = vshrl.u32 %v2514, 7
        %v2516 = vsub.s32 2, %v2515
        %v2517 = vrot.slane %v2504, %v2516
        %2521 = vmatprep.subr.mxu0 %v2408
        %2522 = vmatpush1.msra.mxu0 %v2407
        %2523 = vmatprep.subr.mxu0 %v2411
        %2524 = vmatpush1.msra.mxu0 %v2410
        %2525 = vmatprep.subr.mxu0 %v2414
        %2526 = vmatpush1.msra.mxu0 %v2413
        %2527 = vmatprep.subr.mxu0 %v2417
        %2528 = vmatpush1.msra.mxu0 %v2416
        %2529 = vmatprep.subr.mxu0 %v2420
        %2530 = vmatpush1.msra.mxu0 %v2419
        %2531 = vmatprep.subr.mxu0 %v2423
        %2532 = vmatpush1.msra.mxu0 %v2422
        %2533 = vmatprep.subr.mxu0 %v2426
        %2534 = vmatpush1.msra.mxu0 %v2425
        %2535 = vmatprep.subr.mxu0 %v2429
        %2536 = vmatpush1.msra.mxu0 %v2428
        %2537 = vmatprep.subr.mxu0 %v2432
        %2538 = vmatpush1.msra.mxu0 %v2431
        %2539 = vmatprep.subr.mxu0 %v2435
        %2540 = vmatpush1.msra.mxu0 %v2434
        %2541 = vmatprep.subr.mxu0 %v2438
        %2542 = vmatpush1.msra.mxu0 %v2437
        %2543 = vmatprep.subr.mxu0 %v2441
        %2544 = vmatpush1.msra.mxu0 %v2440
        %2545 = vmatprep.subr.mxu0 %v2444
        %2546 = vmatpush1.msra.mxu0 %v2443
        %2547 = vmatprep.subr.mxu0 %v2447
        %2548 = vmatpush1.msra.mxu0 %v2446
        %2549 = vmatprep.subr.mxu0 %v2450
        %2550 = vmatpush1.msra.mxu0 %v2449
        %2551 = vmatprep.subr.mxu0 %v2453
        %2552 = vmatpush1.msra.mxu0 %v2452
        %2553 = vmatprep.subr.mxu0 %v2456
        %2554 = vmatpush1.msra.mxu0 %v2455
        %2555 = vmatprep.subr.mxu0 %v2459
        %2556 = vmatpush1.msra.mxu0 %v2458
        %2557 = vmatprep.subr.mxu0 %v2462
        %2558 = vmatpush1.msra.mxu0 %v2461
        %2559 = vmatprep.subr.mxu0 %v2465
        %2560 = vmatpush1.msra.mxu0 %v2464
        %2561 = vmatprep.subr.mxu0 %v2468
        %2562 = vmatpush1.msra.mxu0 %v2467
        %2563 = vmatprep.subr.mxu0 %v2471
        %2564 = vmatpush1.msra.mxu0 %v2470
        %2565 = vmatprep.subr.mxu0 %v2474
        %2566 = vmatpush1.msra.mxu0 %v2473
        %2567 = vmatprep.subr.mxu0 %v2477
        %2568 = vmatpush1.msra.mxu0 %v2476
        %2569 = vmatprep.subr.mxu0 %v2480
        %2570 = vmatpush1.msra.mxu0 %v2479
        %2571 = vmatprep.subr.mxu0 %v2483
        %2572 = vmatpush1.msra.mxu0 %v2482
        %2573 = vmatprep.subr.mxu0 %v2486
        %2574 = vmatpush1.msra.mxu0 %v2485
        %2575 = vmatprep.subr.mxu0 %v2489
        %2576 = vmatpush1.msra.mxu0 %v2488
        %2577 = vmatprep.subr.mxu0 %v2492
        %2578 = vmatpush1.msra.mxu0 %v2491
        %2579 = vmatprep.subr.mxu0 %v2495
        %2580 = vmatpush1.msra.mxu0 %v2494
        %2581 = vmatprep.subr.mxu0 %v2498
        %2582 = vmatpush1.msra.mxu0 %v2497
        %2583 = vmatprep.subr.mxu0 %v2501
        %2584 = vmatpush1.msra.mxu0 %v2500
        %2585 = vmatprep.mubr.f32.mxu0 %v2405
        %2586 = vmatmul.mubr.f32.gmra.mrb[0].mxu0 %v2404
        %v2587 = vpop.f32.mrb[0].mxu0
        %v2588 = vadd.f32 %v2509, %v2587
        %v2589 = vpop.f32.mrb[0].mxu0
        %v2590 = vadd.f32 %v2513, %v2589
        %2591 = vdwg.mxu0
        %2592 = vmatprep.subr.mxu0 0.0
        %2593 = vmatpush1.msra.mxu0 %v2409
        %2594 = vmatprep.subr.mxu0 0.0
        %2595 = vmatpush1.msra.mxu0 %v2412
        %2596 = vmatprep.subr.mxu0 0.0
        %2597 = vmatpush1.msra.mxu0 %v2415
        %2598 = vmatprep.subr.mxu0 0.0
        %2599 = vmatpush1.msra.mxu0 %v2418
        %2600 = vmatprep.subr.mxu0 0.0
        %2601 = vmatpush1.msra.mxu0 %v2421
        %2602 = vmatprep.subr.mxu0 0.0
        %2603 = vmatpush1.msra.mxu0 %v2424
        %2604 = vmatprep.subr.mxu0 0.0
        %2605 = vmatpush1.msra.mxu0 %v2427
        %2606 = vmatprep.subr.mxu0 0.0
        %2607 = vmatpush1.msra.mxu0 %v2430
        %2608 = vmatprep.subr.mxu0 0.0
        %2609 = vmatpush1.msra.mxu0 %v2433
        %2610 = vmatprep.subr.mxu0 0.0
        %2611 = vmatpush1.msra.mxu0 %v2436
        %2612 = vmatprep.subr.mxu0 0.0
        %2613 = vmatpush1.msra.mxu0 %v2439
        %2614 = vmatprep.subr.mxu0 0.0
        %2615 = vmatpush1.msra.mxu0 %v2442
        %2616 = vmatprep.subr.mxu0 0.0
        %2617 = vmatpush1.msra.mxu0 %v2445
        %2618 = vmatprep.subr.mxu0 0.0
        %2619 = vmatpush1.msra.mxu0 %v2448
        %2620 = vmatprep.subr.mxu0 0.0
        %2621 = vmatpush1.msra.mxu0 %v2451
        %2622 = vmatprep.subr.mxu0 0.0
        %2623 = vmatpush1.msra.mxu0 %v2454
        %2624 = vmatprep.subr.mxu0 0.0
        %2625 = vmatpush1.msra.mxu0 %v2457
        %2626 = vmatprep.subr.mxu0 0.0
        %2627 = vmatpush1.msra.mxu0 %v2460
        %2628 = vmatprep.subr.mxu0 0.0
        %2629 = vmatpush1.msra.mxu0 %v2463
        %2630 = vmatprep.subr.mxu0 0.0
        %2631 = vmatpush1.msra.mxu0 %v2466
        %2632 = vmatprep.subr.mxu0 0.0
        %2633 = vmatpush1.msra.mxu0 %v2469
        %2634 = vmatprep.subr.mxu0 0.0
        %2635 = vmatpush1.msra.mxu0 %v2472
        %2636 = vmatprep.subr.mxu0 0.0
        %2637 = vmatpush1.msra.mxu0 %v2475
        %2638 = vmatprep.subr.mxu0 0.0
        %2639 = vmatpush1.msra.mxu0 %v2478
        %2640 = vmatprep.subr.mxu0 0.0
        %2641 = vmatpush1.msra.mxu0 %v2481
        %2642 = vmatprep.subr.mxu0 0.0
        %2643 = vmatpush1.msra.mxu0 %v2484
        %2644 = vmatprep.subr.mxu0 0.0
        %2645 = vmatpush1.msra.mxu0 %v2487
        %2646 = vmatprep.subr.mxu0 0.0
        %2647 = vmatpush1.msra.mxu0 %v2490
        %2648 = vmatprep.subr.mxu0 0.0
        %2649 = vmatpush1.msra.mxu0 %v2493
        %2650 = vmatprep.subr.mxu0 0.0
        %2651 = vmatpush1.msra.mxu0 %v2496
        %2652 = vmatprep.subr.mxu0 0.0
        %2653 = vmatpush1.msra.mxu0 %v2499
        %2654 = vmatprep.subr.mxu0 0.0
        %2655 = vmatpush1.msra.mxu0 %v2502
        %2656 = vmatprep.mubr.f32.mxu0 %v2405
        %2657 = vmatmul.mubr.f32.gmra.mrb[0].mxu0 %v2404
        %v2658 = vpop.f32.mrb[0].mxu0
        %v2659 = vadd.f32 %v2517, %v2658
        %v2660 = vpop.f32.mrb[0].mxu0
        %2661 = vdwg.mxu0
        %v2662 = vmul.f32 %v2588, 0.5
        %v2663 = vmul.f32 %v2590, 0.5
        %v2664 = vtanh.pop %v2662
        %v2665 = vtanh.pop %v2663
        %v2666 = vadd.f32 %v2664, 1.0
        %v2667 = vadd.f32 %v2665, 1.0
        %v2668 = vmul.f32 %v2666, 0.5
        %v2669 = vmul.f32 %v2667, 0.5
        %s2670 = scalar_lea.vmem %s8, 1
        %v2671 = vld [vmem:[%s2670] sm:$0x1]
        %v2673 = vlaneseq
        %v2674 = vshrl.u32 %v2673, 7
        %v2675 = vsub.s32 0, %v2674
        %v2676 = vrot.slane %v2671, %v2675
        %v2678 = vmul.f32 %v2668, %v2676
        %v2679 = vadd.f32 %v2659, %v2678
        %v2680 = vtanh.pop %v2679
        %v2681 = vsub.f32 1.0, %v2669
        %v2682 = vmul.f32 %v2681, %v2680
        %v2683 = vld [vmem:[%s9] sm:$0xff]
        %v2684 = vld [vmem:[%s9 + $0x8] sm:$0xff]
        %v2685 = vld [vmem:[%s9 + $0x10] sm:$0xff]
        %v2686 = vld [vmem:[%s9 + $0x18] sm:$0xff]
        %v2687 = vld [vmem:[%s9 + $0x20] sm:$0xff]
        %v2688 = vld [vmem:[%s9 + $0x28] sm:$0xff]
        %v2689 = vld [vmem:[%s9 + $0x30] sm:$0xff]
        %v2690 = vld [vmem:[%s9 + $0x38] sm:$0xff]
        %v2691 = vld [vmem:[%s9 + $0x40] sm:$0xff]
        %v2692 = vld [vmem:[%s9 + $0x48] sm:$0xff]
        %v2693 = vld [vmem:[%s9 + $0x50] sm:$0xff]
        %v2694 = vld [vmem:[%s9 + $0x58] sm:$0xff]
        %v2695 = vld [vmem:[%s9 + $0x60] sm:$0xff]
        %v2696 = vld [vmem:[%s9 + $0x68] sm:$0xff]
        %v2697 = vld [vmem:[%s9 + $0x70] sm:$0xff]
        %v2698 = vld [vmem:[%s9 + $0x78] sm:$0xff]
        %v2699 = vld [vmem:[%s9 + $0x80] sm:$0xff]
        %v2700 = vld [vmem:[%s9 + $0x88] sm:$0xff]
        %v2701 = vld [vmem:[%s9 + $0x90] sm:$0xff]
        %v2702 = vld [vmem:[%s9 + $0x98] sm:$0xff]
        %v2703 = vld [vmem:[%s9 + $0xa0] sm:$0xff]
        %v2704 = vld [vmem:[%s9 + $0xa8] sm:$0xff]
        %v2705 = vld [vmem:[%s9 + $0xb0] sm:$0xff]
        %v2706 = vld [vmem:[%s9 + $0xb8] sm:$0xff]
        %v2707 = vld [vmem:[%s9 + $0xc0] sm:$0xff]
        %v2708 = vld [vmem:[%s9 + $0xc8] sm:$0xff]
        %v2709 = vld [vmem:[%s9 + $0xd0] sm:$0xff]
        %v2710 = vld [vmem:[%s9 + $0xd8] sm:$0xff]
        %v2711 = vld [vmem:[%s9 + $0xe0] sm:$0xff]
        %v2712 = vld [vmem:[%s9 + $0xe8] sm:$0xff]
        %v2713 = vld [vmem:[%s9 + $0xf0] sm:$0xff]
        %v2714 = vld [vmem:[%s9 + $0xf8] sm:$0xff]
        %2715 = vmatprep.subr.mxu0 0.0
        %2716 = vmatpush1.msra.mxu0 %v2699
        %2717 = vmatprep.subr.mxu0 0.0
        %2718 = vmatpush1.msra.mxu0 %v2700
        %2719 = vmatprep.subr.mxu0 0.0
        %2720 = vmatpush1.msra.mxu0 %v2701
        %2721 = vmatprep.subr.mxu0 0.0
        %2722 = vmatpush1.msra.mxu0 %v2702
        %2723 = vmatprep.subr.mxu0 0.0
        %2724 = vmatpush1.msra.mxu0 %v2703
        %2725 = vmatprep.subr.mxu0 0.0
        %2726 = vmatpush1.msra.mxu0 %v2704
        %2727 = vmatprep.subr.mxu0 0.0
        %2728 = vmatpush1.msra.mxu0 %v2705
        %2729 = vmatprep.subr.mxu0 0.0
        %2730 = vmatpush1.msra.mxu0 %v2706
        %2731 = vmatprep.subr.mxu0 0.0
        %2732 = vmatpush1.msra.mxu0 %v2707
        %2733 = vmatprep.subr.mxu0 0.0
        %2734 = vmatpush1.msra.mxu0 %v2708
        %2735 = vmatprep.subr.mxu0 0.0
        %2736 = vmatpush1.msra.mxu0 %v2709
        %2737 = vmatprep.subr.mxu0 0.0
        %2738 = vmatpush1.msra.mxu0 %v2710
        %2739 = vmatprep.subr.mxu0 0.0
        %2740 = vmatpush1.msra.mxu0 %v2711
        %2741 = vmatprep.subr.mxu0 0.0
        %2742 = vmatpush1.msra.mxu0 %v2712
        %2743 = vmatprep.subr.mxu0 0.0
        %2744 = vmatpush1.msra.mxu0 %v2713
        %2745 = vmatprep.subr.mxu0 0.0
        %2746 = vmatpush1.msra.mxu0 %v2714
        %2747 = vmatprep.subr.mxu0 0.0
        %2748 = vmatpush1.msra.mxu0 0.0
        %2749 = vmatprep.subr.mxu0 0.0
        %2750 = vmatpush1.msra.mxu0 0.0
        %2751 = vmatprep.subr.mxu0 0.0
        %2752 = vmatpush1.msra.mxu0 0.0
        %2753 = vmatprep.subr.mxu0 0.0
        %2754 = vmatpush1.msra.mxu0 0.0
        %2755 = vmatprep.subr.mxu0 0.0
        %2756 = vmatpush1.msra.mxu0 0.0
        %2757 = vmatprep.subr.mxu0 0.0
        %2758 = vmatpush1.msra.mxu0 0.0
        %2759 = vmatprep.subr.mxu0 0.0
        %2760 = vmatpush1.msra.mxu0 0.0
        %2761 = vmatprep.subr.mxu0 0.0
        %2762 = vmatpush1.msra.mxu0 0.0
        %2763 = vmatprep.subr.mxu0 0.0
        %2764 = vmatpush1.msra.mxu0 0.0
        %2765 = vmatprep.subr.mxu0 0.0
        %2766 = vmatpush1.msra.mxu0 0.0
        %2767 = vmatprep.subr.mxu0 0.0
        %2768 = vmatpush1.msra.mxu0 0.0
        %2769 = vmatprep.subr.mxu0 0.0
        %2770 = vmatpush1.msra.mxu0 0.0
        %2771 = vmatprep.subr.mxu0 0.0
        %2772 = vmatpush1.msra.mxu0 0.0
        %2773 = vmatprep.subr.mxu0 0.0
        %2774 = vmatpush1.msra.mxu0 0.0
        %2775 = vmatprep.subr.mxu0 0.0
        %2776 = vmatpush1.msra.mxu0 0.0
        %2777 = vmatprep.subr.mxu0 0.0
        %2778 = vmatpush1.msra.mxu0 0.0
        %2779 = vmatprep.mubr.f32.mxu0 0.0
        %2780 = vmatmul.mubr.f32.gmra.mrb[0].mxu0 %v2682
        %v2781 = vpop.f32.mrb[0].mxu0
        %v2782 = vadd.f32 0.0, %v2781
        %v2783 = vpop.f32.mrb[0].mxu0
        %2784 = vdwg.mxu0
        %2785 = vmatprep.subr.mxu0 0.0
        %2786 = vmatpush1.msra.mxu0 %v2683
        %2787 = vmatprep.subr.mxu0 0.0
        %2788 = vmatpush1.msra.mxu0 %v2684
        %2789 = vmatprep.subr.mxu0 0.0
        %2790 = vmatpush1.msra.mxu0 %v2685
        %2791 = vmatprep.subr.mxu0 0.0
        %2792 = vmatpush1.msra.mxu0 %v2686
        %2793 = vmatprep.subr.mxu0 0.0
        %2794 = vmatpush1.msra.mxu0 %v2687
        %2795 = vmatprep.subr.mxu0 0.0
        %2796 = vmatpush1.msra.mxu0 %v2688
        %2797 = vmatprep.subr.mxu0 0.0
        %2798 = vmatpush1.msra.mxu0 %v2689
        %2799 = vmatprep.subr.mxu0 0.0
        %2800 = vmatpush1.msra.mxu0 %v2690
        %2801 = vmatprep.subr.mxu0 0.0
        %2802 = vmatpush1.msra.mxu0 %v2691
        %2803 = vmatprep.subr.mxu0 0.0
        %2804 = vmatpush1.msra.mxu0 %v2692
        %2805 = vmatprep.subr.mxu0 0.0
        %2806 = vmatpush1.msra.mxu0 %v2693
        %2807 = vmatprep.subr.mxu0 0.0
        %2808 = vmatpush1.msra.mxu0 %v2694
        %2809 = vmatprep.subr.mxu0 0.0
        %2810 = vmatpush1.msra.mxu0 %v2695
        %2811 = vmatprep.subr.mxu0 0.0
        %2812 = vmatpush1.msra.mxu0 %v2696
        %2813 = vmatprep.subr.mxu0 0.0
        %2814 = vmatpush1.msra.mxu0 %v2697
        %2815 = vmatprep.subr.mxu0 0.0
        %2816 = vmatpush1.msra.mxu0 %v2698
        %2817 = vmatprep.subr.mxu0 0.0
        %2818 = vmatpush1.msra.mxu0 0.0
        %2819 = vmatprep.subr.mxu0 0.0
        %2820 = vmatpush1.msra.mxu0 0.0
        %2821 = vmatprep.subr.mxu0 0.0
        %2822 = vmatpush1.msra.mxu0 0.0
        %2823 = vmatprep.subr.mxu0 0.0
        %2824 = vmatpush1.msra.mxu0 0.0
        %2825 = vmatprep.subr.mxu0 0.0
        %2826 = vmatpush1.msra.mxu0 0.0
        %2827 = vmatprep.subr.mxu0 0.0
        %2828 = vmatpush1.msra.mxu0 0.0
        %2829 = vmatprep.subr.mxu0 0.0
        %2830 = vmatpush1.msra.mxu0 0.0
        %2831 = vmatprep.subr.mxu0 0.0
        %2832 = vmatpush1.msra.mxu0 0.0
        %2833 = vmatprep.subr.mxu0 0.0
        %2834 = vmatpush1.msra.mxu0 0.0
        %2835 = vmatprep.subr.mxu0 0.0
        %2836 = vmatpush1.msra.mxu0 0.0
        %2837 = vmatprep.subr.mxu0 0.0
        %2838 = vmatpush1.msra.mxu0 0.0
        %2839 = vmatprep.subr.mxu0 0.0
        %2840 = vmatpush1.msra.mxu0 0.0
        %2841 = vmatprep.subr.mxu0 0.0
        %2842 = vmatpush1.msra.mxu0 0.0
        %2843 = vmatprep.subr.mxu0 0.0
        %2844 = vmatpush1.msra.mxu0 0.0
        %2845 = vmatprep.subr.mxu0 0.0
        %2846 = vmatpush1.msra.mxu0 0.0
        %2847 = vmatprep.subr.mxu0 0.0
        %2848 = vmatpush1.msra.mxu0 0.0
        %2849 = vmatprep.mubr.f32.mxu0 0.0
        %2850 = vmatmul.mubr.f32.gmra.mrb[0].mxu0 %v2226
        %v2851 = vpop.f32.mrb[0].mxu0
        %v2852 = vadd.f32 %v2782, %v2851
        %v2853 = vpop.f32.mrb[0].mxu0
        %2854 = vdwg.mxu0
        %v2855 = vld [vmem:[%s10] sm:$0x1]
        %v2857 = vlaneseq
        %v2858 = vshrl.u32 %v2857, 7
        %v2859 = vsub.s32 0, %v2858
        %v2860 = vrot.slane %v2855, %v2859
        %v2862 = vadd.f32 %v2852, %v2860
        %vm2863 = vcmask 39936
        %2864 = vst.msk [vmem:[%s508] sm:$0xff] %vm2863, %v2862
        %p2865 = scmp.lt.s32.totalorder %s24, 1
        %s2866 = scalar_select %p2865, %s24, 1
        %s2867 = smul.addr %s2866, 8
        %s2868 = scalar_lea.vmem %s11, %s2867
        // Predicated region
        $region125: #{tpu_custom_call.1} parent=97 // pred_check
          %p2869 = pneg %p278
        $region126: #{tpu_custom_call.1} parent=97 // pred_check_branch
          %2871 = sbr.rel (%p2869) target = $region128
        $region127: #{tpu_custom_call.1} parent=97 // pred_region
          _
        $region128: #{tpu_custom_call.1} parent=97 // pred_fallthru
          _
      $region98: #{tpu_custom_call.1} parent=5 // pred_fallthru
        _
      %p2872 = scmp.le.s32.totalorder 2, %s19
      // Predicated region
      $region129: #{tpu_custom_call.1} parent=5 // pred_check
        %p2873 = pneg %p2872
      $region130: #{tpu_custom_call.1} parent=5 // pred_check_branch
        %2875 = sbr.rel (%p2873) target = $region132
      $region131: #{tpu_custom_call.1} parent=5 // pred_region
        %s2876 = ssub.s32 %s19, 2
        // Predicated region
        $region133: #{tpu_custom_call.1} parent=131 // pred_check
          %p2877 = pneg %p284
        $region134: #{tpu_custom_call.1} parent=131 // pred_check_branch
          %2879 = sbr.rel (%p2877) target = $region136
        $region135: #{tpu_custom_call.1} parent=131 // pred_region
          %p2880 = scmp.lt.s32.totalorder %s25, 1
          %s2881 = scalar_select %p2880, %s25, 1
          %s2882 = smul.addr %s2881, 8
          %s2883 = scalar_lea.vmem %s11, %s2882
        $region136: #{tpu_custom_call.1} parent=131 // pred_fallthru
          _
      $region132: #{tpu_custom_call.1} parent=5 // pred_fallthru
        _
    $region6: #{tpu_custom_call.1} parent=1 // loop_footer
      %s23 = sadd.s32 1, %s19
    $region7: #{tpu_custom_call.1} parent=1 // loop_footer_branch
      %18 = sbr.rel target = $region3
    $region8: #{tpu_custom_call.1} parent=1 // loop_exit
      _
    %2884 = vsyncpa [#allocation7], 1
    %s2885 = scalar_lea.sflag [#allocation7], 1
    %2886 = vsyncpa %s2885, 1
    %2887 = vsyncpa [#allocation9], 1

</llo_original>
